<compile_context>
chip_gen: v7x
topology: tpu7x:2x2x1
jax: 0.10.0
libtpu: 0.0.40
codegen_flags: <defaults>
</compile_context>

<pallas_src>
import functools

import jax
import jax.numpy as jnp
import numpy as np
from jax.experimental import pallas as pl
from jax.experimental.pallas import tpu as pltpu

_EPS = 1e-5
_LANE = 128


def _residual_block_kernel(x_ref, m_ref, w1_ref, w1h_ref, g1_ref, b1_ref,
                           w2_ref, w2h_ref, g2_ref, b2_ref, o_ref,
                           hpad_ref, phi_ref, plo_ref, *, H, W):
    C, NHW = o_ref.shape                      # channels x (N*H*W)
    halo = (x_ref.shape[1] - NHW) // 2        # lane-aligned halo (>= W+1)
    inv_cnt = 1.0 / float(NHW)                # BN count per channel = N*H*W

    dot = functools.partial(jnp.dot, preferred_element_type=jnp.float32)

    def conv3x3(src_ref, w_hilo_ref, w_hi_ref):
        # im2col: the tap for (kh, kw) is a shifted slice of the flat,
        # halo-padded source.  Out-of-image taps are zeroed by a 0/1 multiply
        # from the host-precomputed mask bank (the center tap is always
        # in-bounds and skips masking).  Each tap is split into bf16 hi/lo in
        # registers and stored straight into the two bf16 patch buffers.
        for kh in range(3):
            for kw in range(3):
                t = kh * 3 + kw
                d = (kh - 1) * W + (kw - 1)
                tap = src_ref[:, halo + d:halo + d + NHW]
                if t != 4:                       # center tap needs no mask
                    row = t if t < 4 else t - 1
                    tap = tap * m_ref[row:row + 1, :]
                hi = tap.astype(jnp.bfloat16)
                lo = (tap - hi.astype(jnp.float32)).astype(jnp.bfloat16)
                phi_ref[t * C:(t + 1) * C, :] = hi
                plo_ref[t * C:(t + 1) * C, :] = lo
        # Two MXU passes per conv (was four):
        #   [w_hi; w_lo] @ p_hi -> hi*hi and lo*hi terms in one contraction
        #   w_hi @ p_lo         -> the hi*lo cross term
        # (w_lo @ p_lo ~ 2^-18 relative and is dropped.)
        hh_lh = dot(w_hilo_ref[...], phi_ref[...])      # (2C, NHW) f32
        hl = dot(w_hi_ref[...], plo_ref[...])           # (C,  NHW) f32
        return hh_lh[:C, :] + hh_lh[C:, :] + hl

    def batchnorm(h, g_ref, b_ref):
        # Training-mode BatchNorm2d, shifted two-pass variance (robust to
        # |mean| >> std), rsqrt on the EUP.
        mean = jnp.sum(h, axis=1, keepdims=True) * inv_cnt
        c = h - mean
        var = jnp.sum(c * c, axis=1, keepdims=True) * inv_cnt
        scale = jax.lax.rsqrt(var + _EPS) * g_ref[...]
        return c * scale + b_ref[...]

    # conv1 -> BN1 -> ReLU
    h = conv3x3(x_ref, w1_ref, w1h_ref)
    h = jnp.maximum(batchnorm(h, g1_ref, b1_ref), 0.0)

    # Stage the intermediate activation with zero-filled, lane-aligned halos
    # (the tap mask is a 0/1 *multiply*, so halo contents must be finite
    # zeros, not uninitialized VMEM garbage).
    zeros_halo = jnp.zeros((C, halo), jnp.float32)
    hpad_ref[:, :halo] = zeros_halo
    hpad_ref[:, halo + NHW:] = zeros_halo
    hpad_ref[:, halo:halo + NHW] = h

    # conv2 -> BN2 -> residual add (lane-dense output store)
    h = conv3x3(hpad_ref, w2_ref, w2h_ref)
    h = batchnorm(h, g2_ref, b2_ref)
    o_ref[...] = x_ref[:, halo:halo + NHW] + h


def residual_block(x_nchw, w1, g1, b1, w2, g2, b2):
    """PyTorch-equivalent forward.  x_nchw: (N,C,H,W) f32, conv weights OIHW."""
    N, C, H, W = x_nchw.shape
    NHW = N * H * W
    halo = pl.cdiv(W + 1, _LANE) * _LANE
    # Shifted-slice loads reach at most (W+1) lanes past either end of the
    # flat image axis; OOB VMEM reads are unchecked, so assert the invariant.
    assert halo >= W + 1
    padded = NHW + 2 * halo

    # Layout glue (wrapper only): channels on sublanes, flat N*H*W on lanes,
    # zero halo on both ends of the flat axis.
    x_flat = jnp.transpose(x_nchw, (1, 0, 2, 3)).reshape(C, NHW)
    x_pad = jnp.pad(x_flat, ((0, 0), (halo, halo)))

    # Host-precomputed 0/1 validity bank for the 8 non-center taps
    # (implements the 3x3 zero padding and stops taps leaking across image /
    # row boundaries).  One (1, NHW) row per tap, broadcast over channels.
    cols = np.arange(NHW, dtype=np.int64)
    i_idx = (cols // W) % H
    j_idx = cols % W
    rows = []
    for kh in range(3):
        for kw in range(3):
            if kh == 1 and kw == 1:
                continue
            ii = i_idx + (kh - 1)
            jj = j_idx + (kw - 1)
            rows.append((ii >= 0) & (ii < H) & (jj >= 0) & (jj < W))
    mask_bank = jnp.asarray(np.stack(rows).astype(np.float32))      # (8, NHW)

    def wsplit(w):
        # (C_out, C_in, 3, 3) -> (C_out, 9*C_in), column (kh*3+kw)*C + ci,
        # pre-split into bf16 hi/lo and stacked as [w_hi; w_lo].
        wm = jnp.transpose(w, (0, 2, 3, 1)).reshape(C, 9 * C)
        hi = wm.astype(jnp.bfloat16)
        lo = (wm - hi.astype(jnp.float32)).astype(jnp.bfloat16)
        return jnp.concatenate([hi, lo], axis=0), hi     # (2C,9C), (C,9C)

    w1_hilo, w1_hi = wsplit(w1)
    w2_hilo, w2_hi = wsplit(w2)

    vmem = pl.BlockSpec(memory_space=pltpu.MemorySpace.VMEM)
    kernel = functools.partial(_residual_block_kernel, H=H, W=W)
    # TODO(synk): at realistic sizes (large C/H/W/N) grow a real grid — tile
    # the flat N*H*W axis in >=512-lane chunks with a (W+1)-lane halo via
    # index_map, two-pass BN partials on an 'arbitrary' reduction axis,
    # dimension_semantics=('parallel',) for v7x's two TensorCores, and tile
    # sizes budgeted against v7x's 64 MiB VMEM.
    out_flat = pl.pallas_call(
        kernel,
        out_shape=jax.ShapeDtypeStruct((C, NHW), jnp.float32),
        in_specs=[vmem] * 10,
        out_specs=vmem,
        scratch_shapes=[
            pltpu.VMEM((C, padded), jnp.float32),      # halo-padded intermediate
            pltpu.VMEM((9 * C, NHW), jnp.bfloat16),    # im2col patch, hi part
            pltpu.VMEM((9 * C, NHW), jnp.bfloat16),    # im2col patch, lo part
        ],
    )(x_pad, mask_bank, w1_hilo, w1_hi, g1.reshape(C, 1), b1.reshape(C, 1),
      w2_hilo, w2_hi, g2.reshape(C, 1), b2.reshape(C, 1))

    out = out_flat.reshape(C, N, H, W)
    return jnp.transpose(out, (1, 0, 2, 3)).astype(x_nchw.dtype)


def _reference(x, w1, g1, b1, w2, g2, b2):
    """Pure-JAX NCHW reference mirroring the PyTorch module (training BN)."""
    def conv(h, w):
        return jax.lax.conv_general_dilated(
            h, w, window_strides=(1, 1), padding=((1, 1), (1, 1)),
            dimension_numbers=('NCHW', 'OIHW', 'NCHW'),
            precision=jax.lax.Precision.HIGHEST)

    def bn(h, g, b):
        m = jnp.mean(h, axis=(0, 2, 3), keepdims=True)
        v = jnp.mean((h - m) ** 2, axis=(0, 2, 3), keepdims=True)
        return (h - m) / jnp.sqrt(v + _EPS) * g.reshape(1, -1, 1, 1) \
            + b.reshape(1, -1, 1, 1)

    h = jnp.maximum(bn(conv(x, w1), g1, b1), 0.0)
    h = bn(conv(h, w2), g2, b2)
    return x + h


if __name__ == "__main__":
    N, C, H, W = 2, 4, 16, 16
    key = jax.random.PRNGKey(0)
    kx, kw1, kw2, kg1, kb1, kg2, kb2 = jax.random.split(key, 7)

    # Deterministic synthetic parameters (shapes from ResidualBlock.__init__).
    x = jax.random.normal(kx, (N, C, H, W), jnp.float32)
    w1 = jax.random.normal(kw1, (C, C, 3, 3), jnp.float32) * 0.3
    w2 = jax.random.normal(kw2, (C, C, 3, 3), jnp.float32) * 0.3
    g1 = 1.0 + 0.1 * jax.random.normal(kg1, (C,), jnp.float32)
    b1 = 0.1 * jax.random.normal(kb1, (C,), jnp.float32)
    g2 = 1.0 + 0.1 * jax.random.normal(kg2, (C,), jnp.float32)
    b2 = 0.1 * jax.random.normal(kb2, (C,), jnp.float32)

    out = jax.block_until_ready(residual_block(x, w1, g1, b1, w2, g2, b2))
    ref = jax.block_until_ready(_reference(x, w1, g1, b1, w2, g2, b2))

    np.testing.assert_allclose(np.asarray(out), np.asarray(ref),
                               rtol=1e-4, atol=1e-4)
    print("KERNEL_OK")
</pallas_src>

<mosaic_0001>
module attributes {stable_mosaic.version = 11 : i64} {
  func.func @_residual_block_kernel(%arg0: memref<4x768xf32, #tpu.memory_space<vmem>>, %arg1: memref<8x512xf32, #tpu.memory_space<vmem>>, %arg2: memref<8x36xbf16, #tpu.memory_space<vmem>>, %arg3: memref<4x36xbf16, #tpu.memory_space<vmem>>, %arg4: memref<4x1xf32, #tpu.memory_space<vmem>>, %arg5: memref<4x1xf32, #tpu.memory_space<vmem>>, %arg6: memref<8x36xbf16, #tpu.memory_space<vmem>>, %arg7: memref<4x36xbf16, #tpu.memory_space<vmem>>, %arg8: memref<4x1xf32, #tpu.memory_space<vmem>>, %arg9: memref<4x1xf32, #tpu.memory_space<vmem>>, %arg10: memref<4x512xf32, #tpu.memory_space<vmem>>, %arg11: memref<4x768xf32, #tpu.memory_space<vmem>>, %arg12: memref<36x512xbf16, #tpu.memory_space<vmem>>, %arg13: memref<36x512xbf16, #tpu.memory_space<vmem>>) attributes {dimension_semantics = [], scalar_prefetch = 0 : i64, scratch_operands = 3 : i64, tpu.core_type = #tpu.core_type<tc>} {
    %c0 = arith.constant 0 : index
    %c111 = arith.constant 111 : index
    %0 = vector.load %arg0[%c0, %c111] : memref<4x768xf32, #tpu.memory_space<vmem>>, vector<4x512xf32>
    %c0_0 = arith.constant 0 : index
    %c0_1 = arith.constant 0 : index
    %1 = vector.load %arg1[%c0_0, %c0_1] : memref<8x512xf32, #tpu.memory_space<vmem>>, vector<1x512xf32>
    %2 = vector.broadcast %1 : vector<1x512xf32> to vector<4x512xf32>
    %3 = arith.mulf %0, %2 : vector<4x512xf32>
    %4 = arith.truncf %3 : vector<4x512xf32> to vector<4x512xbf16>
    %5 = arith.extf %4 : vector<4x512xbf16> to vector<4x512xf32>
    %6 = arith.subf %3, %5 : vector<4x512xf32>
    %7 = arith.truncf %6 : vector<4x512xf32> to vector<4x512xbf16>
    %c0_2 = arith.constant 0 : index
    %c0_3 = arith.constant 0 : index
    %8 = vector.load %arg12[%c0_2, %c0_3] : memref<36x512xbf16, #tpu.memory_space<vmem>>, vector<4x512xbf16>
    tpu.vector_store %arg12[%c0_2, %c0_3], %4 {strides = array<i32>} : memref<36x512xbf16, #tpu.memory_space<vmem>>, vector<4x512xbf16>,
    %c0_4 = arith.constant 0 : index
    %c0_5 = arith.constant 0 : index
    %9 = vector.load %arg13[%c0_4, %c0_5] : memref<36x512xbf16, #tpu.memory_space<vmem>>, vector<4x512xbf16>
    tpu.vector_store %arg13[%c0_4, %c0_5], %7 {strides = array<i32>} : memref<36x512xbf16, #tpu.memory_space<vmem>>, vector<4x512xbf16>,
    %c0_6 = arith.constant 0 : index
    %c112 = arith.constant 112 : index
    %10 = vector.load %arg0[%c0_6, %c112] : memref<4x768xf32, #tpu.memory_space<vmem>>, vector<4x512xf32>
    %c1 = arith.constant 1 : index
    %c0_7 = arith.constant 0 : index
    %11 = vector.load %arg1[%c1, %c0_7] : memref<8x512xf32, #tpu.memory_space<vmem>>, vector<1x512xf32>
    %12 = vector.broadcast %11 : vector<1x512xf32> to vector<4x512xf32>
    %13 = arith.mulf %10, %12 : vector<4x512xf32>
    %14 = arith.truncf %13 : vector<4x512xf32> to vector<4x512xbf16>
    %15 = arith.extf %14 : vector<4x512xbf16> to vector<4x512xf32>
    %16 = arith.subf %13, %15 : vector<4x512xf32>
    %17 = arith.truncf %16 : vector<4x512xf32> to vector<4x512xbf16>
    %c4 = arith.constant 4 : index
    %c0_8 = arith.constant 0 : index
    %18 = vector.load %arg12[%c4, %c0_8] : memref<36x512xbf16, #tpu.memory_space<vmem>>, vector<4x512xbf16>
    tpu.vector_store %arg12[%c4, %c0_8], %14 {strides = array<i32>} : memref<36x512xbf16, #tpu.memory_space<vmem>>, vector<4x512xbf16>,
    %c4_9 = arith.constant 4 : index
    %c0_10 = arith.constant 0 : index
    %19 = vector.load %arg13[%c4_9, %c0_10] : memref<36x512xbf16, #tpu.memory_space<vmem>>, vector<4x512xbf16>
    tpu.vector_store %arg13[%c4_9, %c0_10], %17 {strides = array<i32>} : memref<36x512xbf16, #tpu.memory_space<vmem>>, vector<4x512xbf16>,
    %c0_11 = arith.constant 0 : index
    %c113 = arith.constant 113 : index
    %20 = vector.load %arg0[%c0_11, %c113] : memref<4x768xf32, #tpu.memory_space<vmem>>, vector<4x512xf32>
    %c2 = arith.constant 2 : index
    %c0_12 = arith.constant 0 : index
    %21 = vector.load %arg1[%c2, %c0_12] : memref<8x512xf32, #tpu.memory_space<vmem>>, vector<1x512xf32>
    %22 = vector.broadcast %21 : vector<1x512xf32> to vector<4x512xf32>
    %23 = arith.mulf %20, %22 : vector<4x512xf32>
    %24 = arith.truncf %23 : vector<4x512xf32> to vector<4x512xbf16>
    %25 = arith.extf %24 : vector<4x512xbf16> to vector<4x512xf32>
    %26 = arith.subf %23, %25 : vector<4x512xf32>
    %27 = arith.truncf %26 : vector<4x512xf32> to vector<4x512xbf16>
    %c8 = arith.constant 8 : index
    %c0_13 = arith.constant 0 : index
    %28 = vector.load %arg12[%c8, %c0_13] : memref<36x512xbf16, #tpu.memory_space<vmem>>, vector<4x512xbf16>
    tpu.vector_store %arg12[%c8, %c0_13], %24 {strides = array<i32>} : memref<36x512xbf16, #tpu.memory_space<vmem>>, vector<4x512xbf16>,
    %c8_14 = arith.constant 8 : index
    %c0_15 = arith.constant 0 : index
    %29 = vector.load %arg13[%c8_14, %c0_15] : memref<36x512xbf16, #tpu.memory_space<vmem>>, vector<4x512xbf16>
    tpu.vector_store %arg13[%c8_14, %c0_15], %27 {strides = array<i32>} : memref<36x512xbf16, #tpu.memory_space<vmem>>, vector<4x512xbf16>,
    %c0_16 = arith.constant 0 : index
    %c127 = arith.constant 127 : index
    %30 = vector.load %arg0[%c0_16, %c127] : memref<4x768xf32, #tpu.memory_space<vmem>>, vector<4x512xf32>
    %c3 = arith.constant 3 : index
    %c0_17 = arith.constant 0 : index
    %31 = vector.load %arg1[%c3, %c0_17] : memref<8x512xf32, #tpu.memory_space<vmem>>, vector<1x512xf32>
    %32 = vector.broadcast %31 : vector<1x512xf32> to vector<4x512xf32>
    %33 = arith.mulf %30, %32 : vector<4x512xf32>
    %34 = arith.truncf %33 : vector<4x512xf32> to vector<4x512xbf16>
    %35 = arith.extf %34 : vector<4x512xbf16> to vector<4x512xf32>
    %36 = arith.subf %33, %35 : vector<4x512xf32>
    %37 = arith.truncf %36 : vector<4x512xf32> to vector<4x512xbf16>
    %c12 = arith.constant 12 : index
    %c0_18 = arith.constant 0 : index
    %38 = vector.load %arg12[%c12, %c0_18] : memref<36x512xbf16, #tpu.memory_space<vmem>>, vector<4x512xbf16>
    tpu.vector_store %arg12[%c12, %c0_18], %34 {strides = array<i32>} : memref<36x512xbf16, #tpu.memory_space<vmem>>, vector<4x512xbf16>,
    %c12_19 = arith.constant 12 : index
    %c0_20 = arith.constant 0 : index
    %39 = vector.load %arg13[%c12_19, %c0_20] : memref<36x512xbf16, #tpu.memory_space<vmem>>, vector<4x512xbf16>
    tpu.vector_store %arg13[%c12_19, %c0_20], %37 {strides = array<i32>} : memref<36x512xbf16, #tpu.memory_space<vmem>>, vector<4x512xbf16>,
    %c0_21 = arith.constant 0 : index
    %c128 = arith.constant 128 : index
    %40 = vector.load %arg0[%c0_21, %c128] : memref<4x768xf32, #tpu.memory_space<vmem>>, vector<4x512xf32>
    %41 = arith.truncf %40 : vector<4x512xf32> to vector<4x512xbf16>
    %42 = arith.extf %41 : vector<4x512xbf16> to vector<4x512xf32>
    %43 = arith.subf %40, %42 : vector<4x512xf32>
    %44 = arith.truncf %43 : vector<4x512xf32> to vector<4x512xbf16>
    %c16 = arith.constant 16 : index
    %c0_22 = arith.constant 0 : index
    %45 = vector.load %arg12[%c16, %c0_22] : memref<36x512xbf16, #tpu.memory_space<vmem>>, vector<4x512xbf16>
    tpu.vector_store %arg12[%c16, %c0_22], %41 {strides = array<i32>} : memref<36x512xbf16, #tpu.memory_space<vmem>>, vector<4x512xbf16>,
    %c16_23 = arith.constant 16 : index
    %c0_24 = arith.constant 0 : index
    %46 = vector.load %arg13[%c16_23, %c0_24] : memref<36x512xbf16, #tpu.memory_space<vmem>>, vector<4x512xbf16>
    tpu.vector_store %arg13[%c16_23, %c0_24], %44 {strides = array<i32>} : memref<36x512xbf16, #tpu.memory_space<vmem>>, vector<4x512xbf16>,
    %c0_25 = arith.constant 0 : index
    %c129 = arith.constant 129 : index
    %47 = vector.load %arg0[%c0_25, %c129] : memref<4x768xf32, #tpu.memory_space<vmem>>, vector<4x512xf32>
    %c4_26 = arith.constant 4 : index
    %c0_27 = arith.constant 0 : index
    %48 = vector.load %arg1[%c4_26, %c0_27] : memref<8x512xf32, #tpu.memory_space<vmem>>, vector<1x512xf32>
    %49 = vector.broadcast %48 : vector<1x512xf32> to vector<4x512xf32>
    %50 = arith.mulf %47, %49 : vector<4x512xf32>
    %51 = arith.truncf %50 : vector<4x512xf32> to vector<4x512xbf16>
    %52 = arith.extf %51 : vector<4x512xbf16> to vector<4x512xf32>
    %53 = arith.subf %50, %52 : vector<4x512xf32>
    %54 = arith.truncf %53 : vector<4x512xf32> to vector<4x512xbf16>
    %c20 = arith.constant 20 : index
    %c0_28 = arith.constant 0 : index
    %55 = vector.load %arg12[%c20, %c0_28] : memref<36x512xbf16, #tpu.memory_space<vmem>>, vector<4x512xbf16>
    tpu.vector_store %arg12[%c20, %c0_28], %51 {strides = array<i32>} : memref<36x512xbf16, #tpu.memory_space<vmem>>, vector<4x512xbf16>,
    %c20_29 = arith.constant 20 : index
    %c0_30 = arith.constant 0 : index
    %56 = vector.load %arg13[%c20_29, %c0_30] : memref<36x512xbf16, #tpu.memory_space<vmem>>, vector<4x512xbf16>
    tpu.vector_store %arg13[%c20_29, %c0_30], %54 {strides = array<i32>} : memref<36x512xbf16, #tpu.memory_space<vmem>>, vector<4x512xbf16>,
    %c0_31 = arith.constant 0 : index
    %c143 = arith.constant 143 : index
    %57 = vector.load %arg0[%c0_31, %c143] : memref<4x768xf32, #tpu.memory_space<vmem>>, vector<4x512xf32>
    %c5 = arith.constant 5 : index
    %c0_32 = arith.constant 0 : index
    %58 = vector.load %arg1[%c5, %c0_32] : memref<8x512xf32, #tpu.memory_space<vmem>>, vector<1x512xf32>
    %59 = vector.broadcast %58 : vector<1x512xf32> to vector<4x512xf32>
    %60 = arith.mulf %57, %59 : vector<4x512xf32>
    %61 = arith.truncf %60 : vector<4x512xf32> to vector<4x512xbf16>
    %62 = arith.extf %61 : vector<4x512xbf16> to vector<4x512xf32>
    %63 = arith.subf %60, %62 : vector<4x512xf32>
    %64 = arith.truncf %63 : vector<4x512xf32> to vector<4x512xbf16>
    %c24 = arith.constant 24 : index
    %c0_33 = arith.constant 0 : index
    %65 = vector.load %arg12[%c24, %c0_33] : memref<36x512xbf16, #tpu.memory_space<vmem>>, vector<4x512xbf16>
    tpu.vector_store %arg12[%c24, %c0_33], %61 {strides = array<i32>} : memref<36x512xbf16, #tpu.memory_space<vmem>>, vector<4x512xbf16>,
    %c24_34 = arith.constant 24 : index
    %c0_35 = arith.constant 0 : index
    %66 = vector.load %arg13[%c24_34, %c0_35] : memref<36x512xbf16, #tpu.memory_space<vmem>>, vector<4x512xbf16>
    tpu.vector_store %arg13[%c24_34, %c0_35], %64 {strides = array<i32>} : memref<36x512xbf16, #tpu.memory_space<vmem>>, vector<4x512xbf16>,
    %c0_36 = arith.constant 0 : index
    %c144 = arith.constant 144 : index
    %67 = vector.load %arg0[%c0_36, %c144] : memref<4x768xf32, #tpu.memory_space<vmem>>, vector<4x512xf32>
    %c6 = arith.constant 6 : index
    %c0_37 = arith.constant 0 : index
    %68 = vector.load %arg1[%c6, %c0_37] : memref<8x512xf32, #tpu.memory_space<vmem>>, vector<1x512xf32>
    %69 = vector.broadcast %68 : vector<1x512xf32> to vector<4x512xf32>
    %70 = arith.mulf %67, %69 : vector<4x512xf32>
    %71 = arith.truncf %70 : vector<4x512xf32> to vector<4x512xbf16>
    %72 = arith.extf %71 : vector<4x512xbf16> to vector<4x512xf32>
    %73 = arith.subf %70, %72 : vector<4x512xf32>
    %74 = arith.truncf %73 : vector<4x512xf32> to vector<4x512xbf16>
    %c28 = arith.constant 28 : index
    %c0_38 = arith.constant 0 : index
    %75 = vector.load %arg12[%c28, %c0_38] : memref<36x512xbf16, #tpu.memory_space<vmem>>, vector<4x512xbf16>
    tpu.vector_store %arg12[%c28, %c0_38], %71 {strides = array<i32>} : memref<36x512xbf16, #tpu.memory_space<vmem>>, vector<4x512xbf16>,
    %c28_39 = arith.constant 28 : index
    %c0_40 = arith.constant 0 : index
    %76 = vector.load %arg13[%c28_39, %c0_40] : memref<36x512xbf16, #tpu.memory_space<vmem>>, vector<4x512xbf16>
    tpu.vector_store %arg13[%c28_39, %c0_40], %74 {strides = array<i32>} : memref<36x512xbf16, #tpu.memory_space<vmem>>, vector<4x512xbf16>,
    %c0_41 = arith.constant 0 : index
    %c145 = arith.constant 145 : index
    %77 = vector.load %arg0[%c0_41, %c145] : memref<4x768xf32, #tpu.memory_space<vmem>>, vector<4x512xf32>
    %c7 = arith.constant 7 : index
    %c0_42 = arith.constant 0 : index
    %78 = vector.load %arg1[%c7, %c0_42] : memref<8x512xf32, #tpu.memory_space<vmem>>, vector<1x512xf32>
    %79 = vector.broadcast %78 : vector<1x512xf32> to vector<4x512xf32>
    %80 = arith.mulf %77, %79 : vector<4x512xf32>
    %81 = arith.truncf %80 : vector<4x512xf32> to vector<4x512xbf16>
    %82 = arith.extf %81 : vector<4x512xbf16> to vector<4x512xf32>
    %83 = arith.subf %80, %82 : vector<4x512xf32>
    %84 = arith.truncf %83 : vector<4x512xf32> to vector<4x512xbf16>
    %c32 = arith.constant 32 : index
    %c0_43 = arith.constant 0 : index
    %85 = vector.load %arg12[%c32, %c0_43] : memref<36x512xbf16, #tpu.memory_space<vmem>>, vector<4x512xbf16>
    tpu.vector_store %arg12[%c32, %c0_43], %81 {strides = array<i32>} : memref<36x512xbf16, #tpu.memory_space<vmem>>, vector<4x512xbf16>,
    %c32_44 = arith.constant 32 : index
    %c0_45 = arith.constant 0 : index
    %86 = vector.load %arg13[%c32_44, %c0_45] : memref<36x512xbf16, #tpu.memory_space<vmem>>, vector<4x512xbf16>
    tpu.vector_store %arg13[%c32_44, %c0_45], %84 {strides = array<i32>} : memref<36x512xbf16, #tpu.memory_space<vmem>>, vector<4x512xbf16>,
    %c0_46 = arith.constant 0 : index
    %c0_47 = arith.constant 0 : index
    %87 = vector.load %arg2[%c0_46, %c0_47] : memref<8x36xbf16, #tpu.memory_space<vmem>>, vector<8x36xbf16>
    %c0_48 = arith.constant 0 : index
    %c0_49 = arith.constant 0 : index
    %88 = vector.load %arg12[%c0_48, %c0_49] : memref<36x512xbf16, #tpu.memory_space<vmem>>, vector<36x512xbf16>
    %cst = arith.constant dense<0.000000e+00> : vector<8x512xf32>
    %89 = tpu.matmul %87, %88, %cst {dimension_numbers = #tpu.dot_dimension_numbers<[1], [0], [0], [1], [0, 0, 1, 1], [], []>} : vector<8x36xbf16>, vector<36x512xbf16>, vector<8x512xf32> -> vector<8x512xf32>
    %c0_50 = arith.constant 0 : index
    %c0_51 = arith.constant 0 : index
    %90 = vector.load %arg3[%c0_50, %c0_51] : memref<4x36xbf16, #tpu.memory_space<vmem>>, vector<4x36xbf16>
    %c0_52 = arith.constant 0 : index
    %c0_53 = arith.constant 0 : index
    %91 = vector.load %arg13[%c0_52, %c0_53] : memref<36x512xbf16, #tpu.memory_space<vmem>>, vector<36x512xbf16>
    %cst_54 = arith.constant dense<0.000000e+00> : vector<4x512xf32>
    %92 = tpu.matmul %90, %91, %cst_54 {dimension_numbers = #tpu.dot_dimension_numbers<[1], [0], [0], [1], [0, 0, 1, 1], [], []>} : vector<4x36xbf16>, vector<36x512xbf16>, vector<4x512xf32> -> vector<4x512xf32>
    %93 = vector.extract_strided_slice %89 {offsets = [0, 0], sizes = [4, 512], strides = [1, 1]} : vector<8x512xf32> to vector<4x512xf32>
    %94 = vector.extract_strided_slice %89 {offsets = [4, 0], sizes = [4, 512], strides = [1, 1]} : vector<8x512xf32> to vector<4x512xf32>
    %95 = arith.addf %93, %94 : vector<4x512xf32>
    %96 = arith.addf %95, %92 : vector<4x512xf32>
    %cst_55 = arith.constant dense<0.000000e+00> : vector<4xf32>
    %97 = vector.multi_reduction <add>, %96, %cst_55 [1] : vector<4x512xf32> to vector<4xf32>
    %98 = vector.shape_cast %97 : vector<4xf32> to vector<4x1xf32>
    %cst_56 = arith.constant 0.001953125 : f32
    %99 = vector.broadcast %cst_56 : f32 to vector<4x1xf32>
    %100 = arith.mulf %98, %99 : vector<4x1xf32>
    %101 = vector.broadcast %100 : vector<4x1xf32> to vector<4x512xf32>
    %102 = arith.subf %96, %101 : vector<4x512xf32>
    %103 = arith.mulf %102, %102 : vector<4x512xf32>
    %cst_57 = arith.constant dense<0.000000e+00> : vector<4xf32>
    %104 = vector.multi_reduction <add>, %103, %cst_57 [1] : vector<4x512xf32> to vector<4xf32>
    %105 = vector.shape_cast %104 : vector<4xf32> to vector<4x1xf32>
    %cst_58 = arith.constant 0.001953125 : f32
    %106 = vector.broadcast %cst_58 : f32 to vector<4x1xf32>
    %107 = arith.mulf %105, %106 : vector<4x1xf32>
    %cst_59 = arith.constant 9.99999974E-6 : f32
    %108 = vector.broadcast %cst_59 : f32 to vector<4x1xf32>
    %109 = arith.addf %107, %108 : vector<4x1xf32>
    %110 = math.rsqrt %109 : vector<4x1xf32>
    %c0_60 = arith.constant 0 : index
    %c0_61 = arith.constant 0 : index
    %111 = vector.load %arg4[%c0_60, %c0_61] : memref<4x1xf32, #tpu.memory_space<vmem>>, vector<4x1xf32>
    %112 = arith.mulf %110, %111 : vector<4x1xf32>
    %113 = vector.broadcast %112 : vector<4x1xf32> to vector<4x512xf32>
    %114 = arith.mulf %102, %113 : vector<4x512xf32>
    %c0_62 = arith.constant 0 : index
    %c0_63 = arith.constant 0 : index
    %115 = vector.load %arg5[%c0_62, %c0_63] : memref<4x1xf32, #tpu.memory_space<vmem>>, vector<4x1xf32>
    %116 = vector.broadcast %115 : vector<4x1xf32> to vector<4x512xf32>
    %117 = arith.addf %114, %116 : vector<4x512xf32>
    %cst_64 = arith.constant 0.000000e+00 : f32
    %118 = vector.broadcast %cst_64 : f32 to vector<4x512xf32>
    %119 = arith.maximumf %117, %118 : vector<4x512xf32>
    %cst_65 = arith.constant 0.000000e+00 : f32
    %120 = vector.broadcast %cst_65 : f32 to vector<4x128xf32>
    %c0_66 = arith.constant 0 : index
    %c0_67 = arith.constant 0 : index
    %121 = vector.load %arg11[%c0_66, %c0_67] : memref<4x768xf32, #tpu.memory_space<vmem>>, vector<4x128xf32>
    tpu.vector_store %arg11[%c0_66, %c0_67], %120 {strides = array<i32>} : memref<4x768xf32, #tpu.memory_space<vmem>>, vector<4x128xf32>,
    %c0_68 = arith.constant 0 : index
    %c640 = arith.constant 640 : index
    %122 = vector.load %arg11[%c0_68, %c640] : memref<4x768xf32, #tpu.memory_space<vmem>>, vector<4x128xf32>
    tpu.vector_store %arg11[%c0_68, %c640], %120 {strides = array<i32>} : memref<4x768xf32, #tpu.memory_space<vmem>>, vector<4x128xf32>,
    %c0_69 = arith.constant 0 : index
    %c128_70 = arith.constant 128 : index
    %123 = vector.load %arg11[%c0_69, %c128_70] : memref<4x768xf32, #tpu.memory_space<vmem>>, vector<4x512xf32>
    tpu.vector_store %arg11[%c0_69, %c128_70], %119 {strides = array<i32>} : memref<4x768xf32, #tpu.memory_space<vmem>>, vector<4x512xf32>,
    %c0_71 = arith.constant 0 : index
    %c111_72 = arith.constant 111 : index
    %124 = vector.load %arg11[%c0_71, %c111_72] : memref<4x768xf32, #tpu.memory_space<vmem>>, vector<4x512xf32>
    %c0_73 = arith.constant 0 : index
    %c0_74 = arith.constant 0 : index
    %125 = vector.load %arg1[%c0_73, %c0_74] : memref<8x512xf32, #tpu.memory_space<vmem>>, vector<1x512xf32>
    %126 = vector.broadcast %125 : vector<1x512xf32> to vector<4x512xf32>
    %127 = arith.mulf %124, %126 : vector<4x512xf32>
    %128 = arith.truncf %127 : vector<4x512xf32> to vector<4x512xbf16>
    %129 = arith.extf %128 : vector<4x512xbf16> to vector<4x512xf32>
    %130 = arith.subf %127, %129 : vector<4x512xf32>
    %131 = arith.truncf %130 : vector<4x512xf32> to vector<4x512xbf16>
    %c0_75 = arith.constant 0 : index
    %c0_76 = arith.constant 0 : index
    %132 = vector.load %arg12[%c0_75, %c0_76] : memref<36x512xbf16, #tpu.memory_space<vmem>>, vector<4x512xbf16>
    tpu.vector_store %arg12[%c0_75, %c0_76], %128 {strides = array<i32>} : memref<36x512xbf16, #tpu.memory_space<vmem>>, vector<4x512xbf16>,
    %c0_77 = arith.constant 0 : index
    %c0_78 = arith.constant 0 : index
    %133 = vector.load %arg13[%c0_77, %c0_78] : memref<36x512xbf16, #tpu.memory_space<vmem>>, vector<4x512xbf16>
    tpu.vector_store %arg13[%c0_77, %c0_78], %131 {strides = array<i32>} : memref<36x512xbf16, #tpu.memory_space<vmem>>, vector<4x512xbf16>,
    %c0_79 = arith.constant 0 : index
    %c112_80 = arith.constant 112 : index
    %134 = vector.load %arg11[%c0_79, %c112_80] : memref<4x768xf32, #tpu.memory_space<vmem>>, vector<4x512xf32>
    %c1_81 = arith.constant 1 : index
    %c0_82 = arith.constant 0 : index
    %135 = vector.load %arg1[%c1_81, %c0_82] : memref<8x512xf32, #tpu.memory_space<vmem>>, vector<1x512xf32>
    %136 = vector.broadcast %135 : vector<1x512xf32> to vector<4x512xf32>
    %137 = arith.mulf %134, %136 : vector<4x512xf32>
    %138 = arith.truncf %137 : vector<4x512xf32> to vector<4x512xbf16>
    %139 = arith.extf %138 : vector<4x512xbf16> to vector<4x512xf32>
    %140 = arith.subf %137, %139 : vector<4x512xf32>
    %141 = arith.truncf %140 : vector<4x512xf32> to vector<4x512xbf16>
    %c4_83 = arith.constant 4 : index
    %c0_84 = arith.constant 0 : index
    %142 = vector.load %arg12[%c4_83, %c0_84] : memref<36x512xbf16, #tpu.memory_space<vmem>>, vector<4x512xbf16>
    tpu.vector_store %arg12[%c4_83, %c0_84], %138 {strides = array<i32>} : memref<36x512xbf16, #tpu.memory_space<vmem>>, vector<4x512xbf16>,
    %c4_85 = arith.constant 4 : index
    %c0_86 = arith.constant 0 : index
    %143 = vector.load %arg13[%c4_85, %c0_86] : memref<36x512xbf16, #tpu.memory_space<vmem>>, vector<4x512xbf16>
    tpu.vector_store %arg13[%c4_85, %c0_86], %141 {strides = array<i32>} : memref<36x512xbf16, #tpu.memory_space<vmem>>, vector<4x512xbf16>,
    %c0_87 = arith.constant 0 : index
    %c113_88 = arith.constant 113 : index
    %144 = vector.load %arg11[%c0_87, %c113_88] : memref<4x768xf32, #tpu.memory_space<vmem>>, vector<4x512xf32>
    %c2_89 = arith.constant 2 : index
    %c0_90 = arith.constant 0 : index
    %145 = vector.load %arg1[%c2_89, %c0_90] : memref<8x512xf32, #tpu.memory_space<vmem>>, vector<1x512xf32>
    %146 = vector.broadcast %145 : vector<1x512xf32> to vector<4x512xf32>
    %147 = arith.mulf %144, %146 : vector<4x512xf32>
    %148 = arith.truncf %147 : vector<4x512xf32> to vector<4x512xbf16>
    %149 = arith.extf %148 : vector<4x512xbf16> to vector<4x512xf32>
    %150 = arith.subf %147, %149 : vector<4x512xf32>
    %151 = arith.truncf %150 : vector<4x512xf32> to vector<4x512xbf16>
    %c8_91 = arith.constant 8 : index
    %c0_92 = arith.constant 0 : index
    %152 = vector.load %arg12[%c8_91, %c0_92] : memref<36x512xbf16, #tpu.memory_space<vmem>>, vector<4x512xbf16>
    tpu.vector_store %arg12[%c8_91, %c0_92], %148 {strides = array<i32>} : memref<36x512xbf16, #tpu.memory_space<vmem>>, vector<4x512xbf16>,
    %c8_93 = arith.constant 8 : index
    %c0_94 = arith.constant 0 : index
    %153 = vector.load %arg13[%c8_93, %c0_94] : memref<36x512xbf16, #tpu.memory_space<vmem>>, vector<4x512xbf16>
    tpu.vector_store %arg13[%c8_93, %c0_94], %151 {strides = array<i32>} : memref<36x512xbf16, #tpu.memory_space<vmem>>, vector<4x512xbf16>,
    %c0_95 = arith.constant 0 : index
    %c127_96 = arith.constant 127 : index
    %154 = vector.load %arg11[%c0_95, %c127_96] : memref<4x768xf32, #tpu.memory_space<vmem>>, vector<4x512xf32>
    %c3_97 = arith.constant 3 : index
    %c0_98 = arith.constant 0 : index
    %155 = vector.load %arg1[%c3_97, %c0_98] : memref<8x512xf32, #tpu.memory_space<vmem>>, vector<1x512xf32>
    %156 = vector.broadcast %155 : vector<1x512xf32> to vector<4x512xf32>
    %157 = arith.mulf %154, %156 : vector<4x512xf32>
    %158 = arith.truncf %157 : vector<4x512xf32> to vector<4x512xbf16>
    %159 = arith.extf %158 : vector<4x512xbf16> to vector<4x512xf32>
    %160 = arith.subf %157, %159 : vector<4x512xf32>
    %161 = arith.truncf %160 : vector<4x512xf32> to vector<4x512xbf16>
    %c12_99 = arith.constant 12 : index
    %c0_100 = arith.constant 0 : index
    %162 = vector.load %arg12[%c12_99, %c0_100] : memref<36x512xbf16, #tpu.memory_space<vmem>>, vector<4x512xbf16>
    tpu.vector_store %arg12[%c12_99, %c0_100], %158 {strides = array<i32>} : memref<36x512xbf16, #tpu.memory_space<vmem>>, vector<4x512xbf16>,
    %c12_101 = arith.constant 12 : index
    %c0_102 = arith.constant 0 : index
    %163 = vector.load %arg13[%c12_101, %c0_102] : memref<36x512xbf16, #tpu.memory_space<vmem>>, vector<4x512xbf16>
    tpu.vector_store %arg13[%c12_101, %c0_102], %161 {strides = array<i32>} : memref<36x512xbf16, #tpu.memory_space<vmem>>, vector<4x512xbf16>,
    %c0_103 = arith.constant 0 : index
    %c128_104 = arith.constant 128 : index
    %164 = vector.load %arg11[%c0_103, %c128_104] : memref<4x768xf32, #tpu.memory_space<vmem>>, vector<4x512xf32>
    %165 = arith.truncf %164 : vector<4x512xf32> to vector<4x512xbf16>
    %166 = arith.extf %165 : vector<4x512xbf16> to vector<4x512xf32>
    %167 = arith.subf %164, %166 : vector<4x512xf32>
    %168 = arith.truncf %167 : vector<4x512xf32> to vector<4x512xbf16>
    %c16_105 = arith.constant 16 : index
    %c0_106 = arith.constant 0 : index
    %169 = vector.load %arg12[%c16_105, %c0_106] : memref<36x512xbf16, #tpu.memory_space<vmem>>, vector<4x512xbf16>
    tpu.vector_store %arg12[%c16_105, %c0_106], %165 {strides = array<i32>} : memref<36x512xbf16, #tpu.memory_space<vmem>>, vector<4x512xbf16>,
    %c16_107 = arith.constant 16 : index
    %c0_108 = arith.constant 0 : index
    %170 = vector.load %arg13[%c16_107, %c0_108] : memref<36x512xbf16, #tpu.memory_space<vmem>>, vector<4x512xbf16>
    tpu.vector_store %arg13[%c16_107, %c0_108], %168 {strides = array<i32>} : memref<36x512xbf16, #tpu.memory_space<vmem>>, vector<4x512xbf16>,
    %c0_109 = arith.constant 0 : index
    %c129_110 = arith.constant 129 : index
    %171 = vector.load %arg11[%c0_109, %c129_110] : memref<4x768xf32, #tpu.memory_space<vmem>>, vector<4x512xf32>
    %c4_111 = arith.constant 4 : index
    %c0_112 = arith.constant 0 : index
    %172 = vector.load %arg1[%c4_111, %c0_112] : memref<8x512xf32, #tpu.memory_space<vmem>>, vector<1x512xf32>
    %173 = vector.broadcast %172 : vector<1x512xf32> to vector<4x512xf32>
    %174 = arith.mulf %171, %173 : vector<4x512xf32>
    %175 = arith.truncf %174 : vector<4x512xf32> to vector<4x512xbf16>
    %176 = arith.extf %175 : vector<4x512xbf16> to vector<4x512xf32>
    %177 = arith.subf %174, %176 : vector<4x512xf32>
    %178 = arith.truncf %177 : vector<4x512xf32> to vector<4x512xbf16>
    %c20_113 = arith.constant 20 : index
    %c0_114 = arith.constant 0 : index
    %179 = vector.load %arg12[%c20_113, %c0_114] : memref<36x512xbf16, #tpu.memory_space<vmem>>, vector<4x512xbf16>
    tpu.vector_store %arg12[%c20_113, %c0_114], %175 {strides = array<i32>} : memref<36x512xbf16, #tpu.memory_space<vmem>>, vector<4x512xbf16>,
    %c20_115 = arith.constant 20 : index
    %c0_116 = arith.constant 0 : index
    %180 = vector.load %arg13[%c20_115, %c0_116] : memref<36x512xbf16, #tpu.memory_space<vmem>>, vector<4x512xbf16>
    tpu.vector_store %arg13[%c20_115, %c0_116], %178 {strides = array<i32>} : memref<36x512xbf16, #tpu.memory_space<vmem>>, vector<4x512xbf16>,
    %c0_117 = arith.constant 0 : index
    %c143_118 = arith.constant 143 : index
    %181 = vector.load %arg11[%c0_117, %c143_118] : memref<4x768xf32, #tpu.memory_space<vmem>>, vector<4x512xf32>
    %c5_119 = arith.constant 5 : index
    %c0_120 = arith.constant 0 : index
    %182 = vector.load %arg1[%c5_119, %c0_120] : memref<8x512xf32, #tpu.memory_space<vmem>>, vector<1x512xf32>
    %183 = vector.broadcast %182 : vector<1x512xf32> to vector<4x512xf32>
    %184 = arith.mulf %181, %183 : vector<4x512xf32>
    %185 = arith.truncf %184 : vector<4x512xf32> to vector<4x512xbf16>
    %186 = arith.extf %185 : vector<4x512xbf16> to vector<4x512xf32>
    %187 = arith.subf %184, %186 : vector<4x512xf32>
    %188 = arith.truncf %187 : vector<4x512xf32> to vector<4x512xbf16>
    %c24_121 = arith.constant 24 : index
    %c0_122 = arith.constant 0 : index
    %189 = vector.load %arg12[%c24_121, %c0_122] : memref<36x512xbf16, #tpu.memory_space<vmem>>, vector<4x512xbf16>
    tpu.vector_store %arg12[%c24_121, %c0_122], %185 {strides = array<i32>} : memref<36x512xbf16, #tpu.memory_space<vmem>>, vector<4x512xbf16>,
    %c24_123 = arith.constant 24 : index
    %c0_124 = arith.constant 0 : index
    %190 = vector.load %arg13[%c24_123, %c0_124] : memref<36x512xbf16, #tpu.memory_space<vmem>>, vector<4x512xbf16>
    tpu.vector_store %arg13[%c24_123, %c0_124], %188 {strides = array<i32>} : memref<36x512xbf16, #tpu.memory_space<vmem>>, vector<4x512xbf16>,
    %c0_125 = arith.constant 0 : index
    %c144_126 = arith.constant 144 : index
    %191 = vector.load %arg11[%c0_125, %c144_126] : memref<4x768xf32, #tpu.memory_space<vmem>>, vector<4x512xf32>
    %c6_127 = arith.constant 6 : index
    %c0_128 = arith.constant 0 : index
    %192 = vector.load %arg1[%c6_127, %c0_128] : memref<8x512xf32, #tpu.memory_space<vmem>>, vector<1x512xf32>
    %193 = vector.broadcast %192 : vector<1x512xf32> to vector<4x512xf32>
    %194 = arith.mulf %191, %193 : vector<4x512xf32>
    %195 = arith.truncf %194 : vector<4x512xf32> to vector<4x512xbf16>
    %196 = arith.extf %195 : vector<4x512xbf16> to vector<4x512xf32>
    %197 = arith.subf %194, %196 : vector<4x512xf32>
    %198 = arith.truncf %197 : vector<4x512xf32> to vector<4x512xbf16>
    %c28_129 = arith.constant 28 : index
    %c0_130 = arith.constant 0 : index
    %199 = vector.load %arg12[%c28_129, %c0_130] : memref<36x512xbf16, #tpu.memory_space<vmem>>, vector<4x512xbf16>
    tpu.vector_store %arg12[%c28_129, %c0_130], %195 {strides = array<i32>} : memref<36x512xbf16, #tpu.memory_space<vmem>>, vector<4x512xbf16>,
    %c28_131 = arith.constant 28 : index
    %c0_132 = arith.constant 0 : index
    %200 = vector.load %arg13[%c28_131, %c0_132] : memref<36x512xbf16, #tpu.memory_space<vmem>>, vector<4x512xbf16>
    tpu.vector_store %arg13[%c28_131, %c0_132], %198 {strides = array<i32>} : memref<36x512xbf16, #tpu.memory_space<vmem>>, vector<4x512xbf16>,
    %c0_133 = arith.constant 0 : index
    %c145_134 = arith.constant 145 : index
    %201 = vector.load %arg11[%c0_133, %c145_134] : memref<4x768xf32, #tpu.memory_space<vmem>>, vector<4x512xf32>
    %c7_135 = arith.constant 7 : index
    %c0_136 = arith.constant 0 : index
    %202 = vector.load %arg1[%c7_135, %c0_136] : memref<8x512xf32, #tpu.memory_space<vmem>>, vector<1x512xf32>
    %203 = vector.broadcast %202 : vector<1x512xf32> to vector<4x512xf32>
    %204 = arith.mulf %201, %203 : vector<4x512xf32>
    %205 = arith.truncf %204 : vector<4x512xf32> to vector<4x512xbf16>
    %206 = arith.extf %205 : vector<4x512xbf16> to vector<4x512xf32>
    %207 = arith.subf %204, %206 : vector<4x512xf32>
    %208 = arith.truncf %207 : vector<4x512xf32> to vector<4x512xbf16>
    %c32_137 = arith.constant 32 : index
    %c0_138 = arith.constant 0 : index
    %209 = vector.load %arg12[%c32_137, %c0_138] : memref<36x512xbf16, #tpu.memory_space<vmem>>, vector<4x512xbf16>
    tpu.vector_store %arg12[%c32_137, %c0_138], %205 {strides = array<i32>} : memref<36x512xbf16, #tpu.memory_space<vmem>>, vector<4x512xbf16>,
    %c32_139 = arith.constant 32 : index
    %c0_140 = arith.constant 0 : index
    %210 = vector.load %arg13[%c32_139, %c0_140] : memref<36x512xbf16, #tpu.memory_space<vmem>>, vector<4x512xbf16>
    tpu.vector_store %arg13[%c32_139, %c0_140], %208 {strides = array<i32>} : memref<36x512xbf16, #tpu.memory_space<vmem>>, vector<4x512xbf16>,
    %c0_141 = arith.constant 0 : index
    %c0_142 = arith.constant 0 : index
    %211 = vector.load %arg6[%c0_141, %c0_142] : memref<8x36xbf16, #tpu.memory_space<vmem>>, vector<8x36xbf16>
    %c0_143 = arith.constant 0 : index
    %c0_144 = arith.constant 0 : index
    %212 = vector.load %arg12[%c0_143, %c0_144] : memref<36x512xbf16, #tpu.memory_space<vmem>>, vector<36x512xbf16>
    %cst_145 = arith.constant dense<0.000000e+00> : vector<8x512xf32>
    %213 = tpu.matmul %211, %212, %cst_145 {dimension_numbers = #tpu.dot_dimension_numbers<[1], [0], [0], [1], [0, 0, 1, 1], [], []>} : vector<8x36xbf16>, vector<36x512xbf16>, vector<8x512xf32> -> vector<8x512xf32>
    %c0_146 = arith.constant 0 : index
    %c0_147 = arith.constant 0 : index
    %214 = vector.load %arg7[%c0_146, %c0_147] : memref<4x36xbf16, #tpu.memory_space<vmem>>, vector<4x36xbf16>
    %c0_148 = arith.constant 0 : index
    %c0_149 = arith.constant 0 : index
    %215 = vector.load %arg13[%c0_148, %c0_149] : memref<36x512xbf16, #tpu.memory_space<vmem>>, vector<36x512xbf16>
    %cst_150 = arith.constant dense<0.000000e+00> : vector<4x512xf32>
    %216 = tpu.matmul %214, %215, %cst_150 {dimension_numbers = #tpu.dot_dimension_numbers<[1], [0], [0], [1], [0, 0, 1, 1], [], []>} : vector<4x36xbf16>, vector<36x512xbf16>, vector<4x512xf32> -> vector<4x512xf32>
    %217 = vector.extract_strided_slice %213 {offsets = [0, 0], sizes = [4, 512], strides = [1, 1]} : vector<8x512xf32> to vector<4x512xf32>
    %218 = vector.extract_strided_slice %213 {offsets = [4, 0], sizes = [4, 512], strides = [1, 1]} : vector<8x512xf32> to vector<4x512xf32>
    %219 = arith.addf %217, %218 : vector<4x512xf32>
    %220 = arith.addf %219, %216 : vector<4x512xf32>
    %cst_151 = arith.constant dense<0.000000e+00> : vector<4xf32>
    %221 = vector.multi_reduction <add>, %220, %cst_151 [1] : vector<4x512xf32> to vector<4xf32>
    %222 = vector.shape_cast %221 : vector<4xf32> to vector<4x1xf32>
    %cst_152 = arith.constant 0.001953125 : f32
    %223 = vector.broadcast %cst_152 : f32 to vector<4x1xf32>
    %224 = arith.mulf %222, %223 : vector<4x1xf32>
    %225 = vector.broadcast %224 : vector<4x1xf32> to vector<4x512xf32>
    %226 = arith.subf %220, %225 : vector<4x512xf32>
    %227 = arith.mulf %226, %226 : vector<4x512xf32>
    %cst_153 = arith.constant dense<0.000000e+00> : vector<4xf32>
    %228 = vector.multi_reduction <add>, %227, %cst_153 [1] : vector<4x512xf32> to vector<4xf32>
    %229 = vector.shape_cast %228 : vector<4xf32> to vector<4x1xf32>
    %cst_154 = arith.constant 0.001953125 : f32
    %230 = vector.broadcast %cst_154 : f32 to vector<4x1xf32>
    %231 = arith.mulf %229, %230 : vector<4x1xf32>
    %cst_155 = arith.constant 9.99999974E-6 : f32
    %232 = vector.broadcast %cst_155 : f32 to vector<4x1xf32>
    %233 = arith.addf %231, %232 : vector<4x1xf32>
    %234 = math.rsqrt %233 : vector<4x1xf32>
    %c0_156 = arith.constant 0 : index
    %c0_157 = arith.constant 0 : index
    %235 = vector.load %arg8[%c0_156, %c0_157] : memref<4x1xf32, #tpu.memory_space<vmem>>, vector<4x1xf32>
    %236 = arith.mulf %234, %235 : vector<4x1xf32>
    %237 = vector.broadcast %236 : vector<4x1xf32> to vector<4x512xf32>
    %238 = arith.mulf %226, %237 : vector<4x512xf32>
    %c0_158 = arith.constant 0 : index
    %c0_159 = arith.constant 0 : index
    %239 = vector.load %arg9[%c0_158, %c0_159] : memref<4x1xf32, #tpu.memory_space<vmem>>, vector<4x1xf32>
    %240 = vector.broadcast %239 : vector<4x1xf32> to vector<4x512xf32>
    %241 = arith.addf %238, %240 : vector<4x512xf32>
    %c0_160 = arith.constant 0 : index
    %c128_161 = arith.constant 128 : index
    %242 = vector.load %arg0[%c0_160, %c128_161] : memref<4x768xf32, #tpu.memory_space<vmem>>, vector<4x512xf32>
    %243 = arith.addf %242, %241 : vector<4x512xf32>
    %c0_162 = arith.constant 0 : index
    %c0_163 = arith.constant 0 : index
    %244 = vector.load %arg10[%c0_162, %c0_163] : memref<4x512xf32, #tpu.memory_space<vmem>>, vector<4x512xf32>
    tpu.vector_store %arg10[%c0_162, %c0_163], %243 {strides = array<i32>} : memref<4x512xf32, #tpu.memory_space<vmem>>, vector<4x512xf32>,
    return
  }
}

</mosaic_0001>

<llo_original>
// kernel: tpu_custom_call.1
$region0: #{tpu_custom_call.1}
  #allocation0 [shape = 'u32[]', space=smem, size = 0x4, offset = 0x4, fixed_abs, tag = 'smem constant byte address 0x4 - core index']
  #allocation1 [shape = 'u32[144,128]{1,0:T(1,128)}', space=vmem, size = 0x12000, scoped, tag = 'internal scratch']
  #allocation2 [shape = 'f32[4,768]{1,0:T(4,128)}', space=vmem, size = 0x3000, scoped, tag = 'scratch operand']
  #allocation3 [shape = 'bf16[36,512]{1,0:T(8,128)(2,1)}', space=vmem, size = 0xa000, scoped, tag = 'scratch operand']
  #allocation4 [shape = 'bf16[36,512]{1,0:T(8,128)(2,1)}', space=vmem, size = 0xa000, scoped, tag = 'scratch operand']
  %s0 = inlined_call_operand.hbm [shape: f32[4,768], index: 0, kind: input, shape index: {}]
  %s1 = inlined_call_operand.hbm [shape: f32[8,512], index: 1, kind: input, shape index: {}]
  %s2 = inlined_call_operand.vmem [shape: bf16[8,36], index: 2, kind: input, shape index: {}]
  %s3 = inlined_call_operand.vmem [shape: bf16[4,36], index: 3, kind: input, shape index: {}]
  %s4 = inlined_call_operand.vmem [shape: f32[4,1], index: 4, kind: input, shape index: {}]
  %s5 = inlined_call_operand.vmem [shape: f32[4,1], index: 5, kind: input, shape index: {}]
  %s6 = inlined_call_operand.vmem [shape: bf16[8,36], index: 6, kind: input, shape index: {}]
  %s7 = inlined_call_operand.vmem [shape: bf16[4,36], index: 7, kind: input, shape index: {}]
  %s8 = inlined_call_operand.vmem [shape: f32[4,1], index: 8, kind: input, shape index: {}]
  %s9 = inlined_call_operand.vmem [shape: f32[4,1], index: 9, kind: input, shape index: {}]
  %s10 = inlined_call_operand.hbm [shape: f32[4,512], index: 10, kind: output, shape index: {}]
  %s11 = sld [smem:[#allocation0]]
  $region58: #{tpu_custom_call.1} parent=0
    _
  %s13 = ssub.s32 1, %s11
  %s14 = scalar_select 0, %s13, %s11
  $region1: #{tpu_custom_call.1} parent=0
    #allocation5 [shape = 'u8[12288]{0}', space=vmem, size = 0x3000, scoped, tag = 'input window, operand 0, single buffered']
    #allocation6 [shape = 's32[1]{0}', space=sflag, size = 0x4, scoped, tag = 'scoped memory for tpu_custom_call.1']
    #allocation7 [shape = 's32[1]{0}', space=sflag, size = 0x4, scoped, tag = 'scoped memory for tpu_custom_call.1']
    #allocation8 [shape = 'u8[16384]{0}', space=vmem, size = 0x4000, scoped, tag = 'input window, operand 1, single buffered']
    #allocation9 [shape = 's32[1]{0}', space=sflag, size = 0x4, scoped, tag = 'scoped memory for tpu_custom_call.1']
    #allocation10 [shape = 'u8[8192]{0}', space=vmem, size = 0x2000, scoped, tag = 'output window, operand 0, single buffered']
    %15 = vsyncpa [#allocation6], 0
    %16 = vsyncpa [#allocation9], 0
    %17 = vsyncpa [#allocation7], 0
    // Predicated region
    $region2: #{tpu_custom_call.1} parent=1 // pred_check
      _
    $region3: #{tpu_custom_call.1} parent=1 // pred_check_branch
      %19 = sbr.rel (0) target = $region5
    $region4: #{tpu_custom_call.1} parent=1 // pred_region
      %s21 = ssub.s32 384, 384
      %22 = vsyncadd [#allocation6], %s21
      %s24 = sshll.u32 [#allocation5], 4
      %s25 = int_to_ptr.vmem [resolvable:$true] %s24
      %27 = dma.hbm_to_vmem [thread:$0]  %s0, 384, %s25, [#allocation6]
    $region5: #{tpu_custom_call.1} parent=1 // pred_fallthru
      _
    // Predicated region
    $region6: #{tpu_custom_call.1} parent=1 // pred_check
      _
    $region7: #{tpu_custom_call.1} parent=1 // pred_check_branch
      %29 = sbr.rel (0) target = $region9
    $region8: #{tpu_custom_call.1} parent=1 // pred_region
      %s31 = ssub.s32 512, 512
      %32 = vsyncadd [#allocation9], %s31
      %s34 = sshll.u32 [#allocation8], 4
      %s35 = int_to_ptr.vmem [resolvable:$true] %s34
      %37 = dma.hbm_to_vmem [thread:$0]  %s1, 512, %s35, [#allocation9]
    $region9: #{tpu_custom_call.1} parent=1 // pred_fallthru
      _
    // Predicated region
    $region10: #{tpu_custom_call.1} parent=1 // pred_check
      _
    $region11: #{tpu_custom_call.1} parent=1 // pred_check_branch
      %39 = sbr.rel (0) target = $region13
    $region12: #{tpu_custom_call.1} parent=1 // pred_region
      _
    $region13: #{tpu_custom_call.1} parent=1 // pred_fallthru
      _
    // Predicated region
    $region14: #{tpu_custom_call.1} parent=1 // pred_check
      _
    $region15: #{tpu_custom_call.1} parent=1 // pred_check_branch
      %41 = sbr.rel (0) target = $region17
    $region16: #{tpu_custom_call.1} parent=1 // pred_region
      _
    $region17: #{tpu_custom_call.1} parent=1 // pred_fallthru
      _
    // Predicated region
    $region18: #{tpu_custom_call.1} parent=1 // pred_check
      _
    $region19: #{tpu_custom_call.1} parent=1 // pred_check_branch
      %43 = sbr.rel (0) target = $region21
    $region20: #{tpu_custom_call.1} parent=1 // pred_region
      _
    $region21: #{tpu_custom_call.1} parent=1 // pred_fallthru
      _
    // Predicated region
    $region22: #{tpu_custom_call.1} parent=1 // pred_check
      _
    $region23: #{tpu_custom_call.1} parent=1 // pred_check_branch
      %45 = sbr.rel (0) target = $region25
    $region24: #{tpu_custom_call.1} parent=1 // pred_region
      _
    $region25: #{tpu_custom_call.1} parent=1 // pred_fallthru
      _
    // Predicated region
    $region26: #{tpu_custom_call.1} parent=1 // pred_check
      _
    $region27: #{tpu_custom_call.1} parent=1 // pred_check_branch
      %47 = sbr.rel (0) target = $region29
    $region28: #{tpu_custom_call.1} parent=1 // pred_region
      _
    $region29: #{tpu_custom_call.1} parent=1 // pred_fallthru
      _
    // Predicated region
    $region30: #{tpu_custom_call.1} parent=1 // pred_check
      _
    $region31: #{tpu_custom_call.1} parent=1 // pred_check_branch
      %49 = sbr.rel (0) target = $region33
    $region32: #{tpu_custom_call.1} parent=1 // pred_region
      _
    $region33: #{tpu_custom_call.1} parent=1 // pred_fallthru
      _
    // Predicated region
    $region34: #{tpu_custom_call.1} parent=1 // pred_check
      _
    $region35: #{tpu_custom_call.1} parent=1 // pred_check_branch
      %51 = sbr.rel (0) target = $region37
    $region36: #{tpu_custom_call.1} parent=1 // pred_region
      _
    $region37: #{tpu_custom_call.1} parent=1 // pred_fallthru
      _
    // Predicated region
    $region38: #{tpu_custom_call.1} parent=1 // pred_check
      _
    $region39: #{tpu_custom_call.1} parent=1 // pred_check_branch
      %53 = sbr.rel (0) target = $region41
    $region40: #{tpu_custom_call.1} parent=1 // pred_region
      _
    $region41: #{tpu_custom_call.1} parent=1 // pred_fallthru
      _
    // Predicated region
    $region42: #{tpu_custom_call.1} parent=1 // pred_check
      _
    $region43: #{tpu_custom_call.1} parent=1 // pred_check_branch
      %55 = sbr.rel (0) target = $region45
    $region44: #{tpu_custom_call.1} parent=1 // pred_region
      %56 = dma.done [#allocation6], 384
    $region45: #{tpu_custom_call.1} parent=1 // pred_fallthru
      _
    // Predicated region
    $region46: #{tpu_custom_call.1} parent=1 // pred_check
      _
    $region47: #{tpu_custom_call.1} parent=1 // pred_check_branch
      %58 = sbr.rel (0) target = $region49
    $region48: #{tpu_custom_call.1} parent=1 // pred_region
      %59 = dma.done [#allocation9], 512
    $region49: #{tpu_custom_call.1} parent=1 // pred_fallthru
      _
    %v61 = vld [vmem:[#allocation5] sm:$0xff]
    %v62 = vld [vmem:[#allocation5 + $0x8] sm:$0xff]
    %v63 = vld [vmem:[#allocation5 + $0x10] sm:$0xf]
    %v64 = vld [vmem:[#allocation8] ss:$8 sm:$0xf]
    %v66 = vlaneseq
    %v67 = vshrl.u32 %v66, 7
    %v68 = vsub.s32 0, %v67
    %v69 = vrot.slane %v64, %v68
    %v70 = vlaneseq
    %v71 = vshrl.u32 %v70, 7
    %v72 = vsub.s32 1, %v71
    %v73 = vrot.slane %v64, %v72
    %v74 = vlaneseq
    %v75 = vshrl.u32 %v74, 7
    %v76 = vsub.s32 2, %v75
    %v77 = vrot.slane %v64, %v76
    %v78 = vlaneseq
    %v79 = vshrl.u32 %v78, 7
    %v80 = vsub.s32 3, %v79
    %v81 = vrot.slane %v64, %v80
    %v82 = vcombine.low %v69, %v73
    %v83 = vcombine.low %v77, %v81
    %84 = vrot.lane.b32.xlu0 %v82, 111
    %v85 = vpop.permute.xlu0 %84
    %86 = vrot.lane.b32.xlu0 %v83, 111
    %v87 = vpop.permute.xlu0 %86
    %v88 = vrot.slane %v85, 4
    %v89 = vrot.slane %v87, 4
    %vm90 = vcmask 908288
    %v91 = vsel %vm90, %v88, %v85
    %vm92 = vcmask 1043456
    %v93 = vsel %vm92, %v88, %v89
    %v94 = vsel %vm90, %v93, %v87
    %v98 = vmul.f32 %v61, %v91
    %v99 = vmul.f32 %v62, %v94
    %v100 = vmul.f32 %v63, %v89
    %v103 = vcombine.high %v98, %v98
    %v104 = vcombine.high %v99, %v99
    %v107 = vpack.c.bf16 %v98, %v98
    %v108 = vpack.c.bf16 %v103, %v103
    %v109 = vpack.c.bf16 %v99, %v99
    %v110 = vpack.c.bf16 %v104, %v104
    %v111 = vpack.c.bf16 %v100, %v100
    %v112 = vunpack.c.l.bf16 %v107
    %v113 = vunpack.c.l.bf16 %v108
    %v114 = vunpack.c.l.bf16 %v109
    %v115 = vunpack.c.l.bf16 %v110
    %v116 = vunpack.c.l.bf16 %v111
    %v121 = vcombine.low %v112, %v113
    %v122 = vcombine.low %v114, %v115
    %v125 = vsub.f32 %v98, %v121
    %v126 = vsub.f32 %v99, %v122
    %v127 = vsub.f32 %v100, %v116
    %v130 = vcombine.high %v125, %v125
    %v131 = vcombine.high %v126, %v126
    %v134 = vpack.c.bf16 %v125, %v125
    %v135 = vpack.c.bf16 %v130, %v130
    %v136 = vpack.c.bf16 %v126, %v126
    %v137 = vpack.c.bf16 %v131, %v131
    %v138 = vpack.c.bf16 %v127, %v127
    %v144 = vunpack.c.l.b16 %v107
    %v145 = vunpack.c.l.b16 %v108
    %v146 = vunpack.c.l.b16 %v109
    %v147 = vunpack.c.l.b16 %v110
    %v148 = vunpack.c.l.b16 %v111
    %v149 = vpack.c.b16 %v145, %v144
    %v150 = vpack.c.b16 %v147, %v146
    %v151 = vpack.c.b16 %v148, %v148
    %152 = vrot.lane.b32.xlu0 %v149, 17
    %v153 = vpop.permute.xlu0 %152
    %154 = vrot.lane.b32.xlu0 %v150, 17
    %v155 = vpop.permute.xlu0 %154
    %156 = vrot.lane.b32.xlu0 %v151, 17
    %v157 = vpop.permute.xlu0 %156
    %v158 = vrot.slane %v153, 4
    %v159 = vrot.slane %v155, 4
    %v160 = vrot.slane %v157, 4
    %vm161 = vcmask 1043456
    %v162 = vsel %vm161, %v158, %v159
    %vm163 = vcmask 138240
    %v164 = vsel %vm163, %v153, %v162
    %v165 = vsel %vm161, %v159, %v160
    %v166 = vsel %vm163, %v155, %v165
    %169 = vst [vmem:[#allocation3] sm:$0x33] %v164
    %170 = vst [vmem:[#allocation3 + $0x8] sm:$0x33] %v166
    %v176 = vunpack.c.l.b16 %v134
    %v177 = vunpack.c.l.b16 %v135
    %v178 = vunpack.c.l.b16 %v136
    %v179 = vunpack.c.l.b16 %v137
    %v180 = vunpack.c.l.b16 %v138
    %v181 = vpack.c.b16 %v177, %v176
    %v182 = vpack.c.b16 %v179, %v178
    %v183 = vpack.c.b16 %v180, %v180
    %184 = vrot.lane.b32.xlu0 %v181, 17
    %v185 = vpop.permute.xlu0 %184
    %186 = vrot.lane.b32.xlu0 %v182, 17
    %v187 = vpop.permute.xlu0 %186
    %188 = vrot.lane.b32.xlu0 %v183, 17
    %v189 = vpop.permute.xlu0 %188
    %v190 = vrot.slane %v185, 4
    %v191 = vrot.slane %v187, 4
    %v192 = vrot.slane %v189, 4
    %v193 = vsel %vm161, %v190, %v191
    %v194 = vsel %vm163, %v185, %v193
    %v195 = vsel %vm161, %v191, %v192
    %v196 = vsel %vm163, %v187, %v195
    %199 = vst [vmem:[#allocation4] sm:$0x33] %v194
    %200 = vst [vmem:[#allocation4 + $0x8] sm:$0x33] %v196
    %v201 = vld [vmem:[#allocation5] sm:$0xff]
    %v202 = vld [vmem:[#allocation5 + $0x8] sm:$0xff]
    %v203 = vld [vmem:[#allocation5 + $0x10] sm:$0xf]
    %s204 = scalar_lea.vmem [#allocation8], 1
    %v205 = vld [vmem:[%s204] ss:$8 sm:$0xf]
    %v207 = vlaneseq
    %v208 = vshrl.u32 %v207, 7
    %v209 = vsub.s32 0, %v208
    %v210 = vrot.slane %v205, %v209
    %v211 = vlaneseq
    %v212 = vshrl.u32 %v211, 7
    %v213 = vsub.s32 1, %v212
    %v214 = vrot.slane %v205, %v213
    %v215 = vlaneseq
    %v216 = vshrl.u32 %v215, 7
    %v217 = vsub.s32 2, %v216
    %v218 = vrot.slane %v205, %v217
    %v219 = vlaneseq
    %v220 = vshrl.u32 %v219, 7
    %v221 = vsub.s32 3, %v220
    %v222 = vrot.slane %v205, %v221
    %v223 = vcombine.low %v210, %v214
    %v224 = vcombine.low %v218, %v222
    %225 = vrot.lane.b32.xlu0 %v223, 112
    %v226 = vpop.permute.xlu0 %225
    %227 = vrot.lane.b32.xlu0 %v224, 112
    %v228 = vpop.permute.xlu0 %227
    %v229 = vrot.slane %v226, 4
    %v230 = vrot.slane %v228, 4
    %vm231 = vcmask 916480
    %v232 = vsel %vm231, %v229, %v226
    %v233 = vsel %vm92, %v229, %v230
    %v234 = vsel %vm231, %v233, %v228
    %v238 = vmul.f32 %v201, %v232
    %v239 = vmul.f32 %v202, %v234
    %v240 = vmul.f32 %v203, %v230
    %v243 = vcombine.high %v238, %v238
    %v244 = vcombine.high %v239, %v239
    %v247 = vpack.c.bf16 %v238, %v238
    %v248 = vpack.c.bf16 %v243, %v243
    %v249 = vpack.c.bf16 %v239, %v239
    %v250 = vpack.c.bf16 %v244, %v244
    %v251 = vpack.c.bf16 %v240, %v240
    %v252 = vunpack.c.l.bf16 %v247
    %v253 = vunpack.c.l.bf16 %v248
    %v254 = vunpack.c.l.bf16 %v249
    %v255 = vunpack.c.l.bf16 %v250
    %v256 = vunpack.c.l.bf16 %v251
    %v261 = vcombine.low %v252, %v253
    %v262 = vcombine.low %v254, %v255
    %v265 = vsub.f32 %v238, %v261
    %v266 = vsub.f32 %v239, %v262
    %v267 = vsub.f32 %v240, %v256
    %v270 = vcombine.high %v265, %v265
    %v271 = vcombine.high %v266, %v266
    %v274 = vpack.c.bf16 %v265, %v265
    %v275 = vpack.c.bf16 %v270, %v270
    %v276 = vpack.c.bf16 %v266, %v266
    %v277 = vpack.c.bf16 %v271, %v271
    %v278 = vpack.c.bf16 %v267, %v267
    %v284 = vunpack.c.l.b16 %v247
    %v285 = vunpack.c.l.b16 %v248
    %v286 = vunpack.c.l.b16 %v249
    %v287 = vunpack.c.l.b16 %v250
    %v288 = vunpack.c.l.b16 %v251
    %v289 = vpack.c.b16 %v285, %v284
    %v290 = vpack.c.b16 %v287, %v286
    %v291 = vpack.c.b16 %v288, %v288
    %v292 = vrot.slane %v289, 6
    %v293 = vrot.slane %v290, 6
    %v294 = vrot.slane %v291, 6
    %295 = vrot.lane.b32.xlu0 %v292, 16
    %v296 = vpop.permute.xlu0 %295
    %297 = vrot.lane.b32.xlu0 %v293, 16
    %v298 = vpop.permute.xlu0 %297
    %299 = vrot.lane.b32.xlu0 %v294, 16
    %v300 = vpop.permute.xlu0 %299
    %v301 = vrot.slane %v296, 4
    %v302 = vrot.slane %v298, 4
    %v303 = vrot.slane %v300, 4
    %v304 = vsel %vm161, %v301, %v302
    %vm305 = vcmask 130048
    %v306 = vsel %vm305, %v296, %v304
    %v307 = vsel %vm161, %v302, %v303
    %v308 = vsel %vm305, %v298, %v307
    %311 = vst [vmem:[#allocation3] sm:$0xcc] %v306
    %312 = vst [vmem:[#allocation3 + $0x8] sm:$0xcc] %v308
    %v318 = vunpack.c.l.b16 %v274
    %v319 = vunpack.c.l.b16 %v275
    %v320 = vunpack.c.l.b16 %v276
    %v321 = vunpack.c.l.b16 %v277
    %v322 = vunpack.c.l.b16 %v278
    %v323 = vpack.c.b16 %v319, %v318
    %v324 = vpack.c.b16 %v321, %v320
    %v325 = vpack.c.b16 %v322, %v322
    %v326 = vrot.slane %v323, 6
    %v327 = vrot.slane %v324, 6
    %v328 = vrot.slane %v325, 6
    %329 = vrot.lane.b32.xlu0 %v326, 16
    %v330 = vpop.permute.xlu0 %329
    %331 = vrot.lane.b32.xlu0 %v327, 16
    %v332 = vpop.permute.xlu0 %331
    %333 = vrot.lane.b32.xlu0 %v328, 16
    %v334 = vpop.permute.xlu0 %333
    %v335 = vrot.slane %v330, 4
    %v336 = vrot.slane %v332, 4
    %v337 = vrot.slane %v334, 4
    %v338 = vsel %vm161, %v335, %v336
    %v339 = vsel %vm305, %v330, %v338
    %v340 = vsel %vm161, %v336, %v337
    %v341 = vsel %vm305, %v332, %v340
    %344 = vst [vmem:[#allocation4] sm:$0xcc] %v339
    %345 = vst [vmem:[#allocation4 + $0x8] sm:$0xcc] %v341
    %v346 = vld [vmem:[#allocation5] sm:$0xff]
    %v347 = vld [vmem:[#allocation5 + $0x8] sm:$0xff]
    %v348 = vld [vmem:[#allocation5 + $0x10] sm:$0xf]
    %s349 = scalar_lea.vmem [#allocation8], 2
    %v350 = vld [vmem:[%s349] ss:$8 sm:$0xf]
    %v352 = vlaneseq
    %v353 = vshrl.u32 %v352, 7
    %v354 = vsub.s32 0, %v353
    %v355 = vrot.slane %v350, %v354
    %v356 = vlaneseq
    %v357 = vshrl.u32 %v356, 7
    %v358 = vsub.s32 1, %v357
    %v359 = vrot.slane %v350, %v358
    %v360 = vlaneseq
    %v361 = vshrl.u32 %v360, 7
    %v362 = vsub.s32 2, %v361
    %v363 = vrot.slane %v350, %v362
    %v364 = vlaneseq
    %v365 = vshrl.u32 %v364, 7
    %v366 = vsub.s32 3, %v365
    %v367 = vrot.slane %v350, %v366
    %v368 = vcombine.low %v355, %v359
    %v369 = vcombine.low %v363, %v367
    %370 = vrot.lane.b32.xlu0 %v368, 113
    %v371 = vpop.permute.xlu0 %370
    %372 = vrot.lane.b32.xlu0 %v369, 113
    %v373 = vpop.permute.xlu0 %372
    %v374 = vrot.slane %v371, 4
    %v375 = vrot.slane %v373, 4
    %vm376 = vcmask 924672
    %v377 = vsel %vm376, %v374, %v371
    %v378 = vsel %vm92, %v374, %v375
    %v379 = vsel %vm376, %v378, %v373
    %v383 = vmul.f32 %v346, %v377
    %v384 = vmul.f32 %v347, %v379
    %v385 = vmul.f32 %v348, %v375
    %v388 = vcombine.high %v383, %v383
    %v389 = vcombine.high %v384, %v384
    %v392 = vpack.c.bf16 %v383, %v383
    %v393 = vpack.c.bf16 %v388, %v388
    %v394 = vpack.c.bf16 %v384, %v384
    %v395 = vpack.c.bf16 %v389, %v389
    %v396 = vpack.c.bf16 %v385, %v385
    %v397 = vunpack.c.l.bf16 %v392
    %v398 = vunpack.c.l.bf16 %v393
    %v399 = vunpack.c.l.bf16 %v394
    %v400 = vunpack.c.l.bf16 %v395
    %v401 = vunpack.c.l.bf16 %v396
    %v406 = vcombine.low %v397, %v398
    %v407 = vcombine.low %v399, %v400
    %v410 = vsub.f32 %v383, %v406
    %v411 = vsub.f32 %v384, %v407
    %v412 = vsub.f32 %v385, %v401
    %v415 = vcombine.high %v410, %v410
    %v416 = vcombine.high %v411, %v411
    %v419 = vpack.c.bf16 %v410, %v410
    %v420 = vpack.c.bf16 %v415, %v415
    %v421 = vpack.c.bf16 %v411, %v411
    %v422 = vpack.c.bf16 %v416, %v416
    %v423 = vpack.c.bf16 %v412, %v412
    %v429 = vunpack.c.l.b16 %v392
    %v430 = vunpack.c.l.b16 %v393
    %v431 = vunpack.c.l.b16 %v394
    %v432 = vunpack.c.l.b16 %v395
    %v433 = vunpack.c.l.b16 %v396
    %v434 = vpack.c.b16 %v430, %v429
    %v435 = vpack.c.b16 %v432, %v431
    %v436 = vpack.c.b16 %v433, %v433
    %437 = vrot.lane.b32.xlu0 %v434, 15
    %v438 = vpop.permute.xlu0 %437
    %439 = vrot.lane.b32.xlu0 %v435, 15
    %v440 = vpop.permute.xlu0 %439
    %441 = vrot.lane.b32.xlu0 %v436, 15
    %v442 = vpop.permute.xlu0 %441
    %v443 = vrot.slane %v438, 4
    %v444 = vrot.slane %v440, 4
    %v445 = vrot.slane %v442, 4
    %v446 = vsel %vm161, %v443, %v444
    %vm447 = vcmask 121856
    %v448 = vsel %vm447, %v438, %v446
    %v449 = vsel %vm161, %v444, %v445
    %v450 = vsel %vm447, %v440, %v449
    %453 = vst [vmem:[#allocation3 + $0x10] sm:$0x33] %v448
    %454 = vst [vmem:[#allocation3 + $0x18] sm:$0x33] %v450
    %v460 = vunpack.c.l.b16 %v419
    %v461 = vunpack.c.l.b16 %v420
    %v462 = vunpack.c.l.b16 %v421
    %v463 = vunpack.c.l.b16 %v422
    %v464 = vunpack.c.l.b16 %v423
    %v465 = vpack.c.b16 %v461, %v460
    %v466 = vpack.c.b16 %v463, %v462
    %v467 = vpack.c.b16 %v464, %v464
    %468 = vrot.lane.b32.xlu0 %v465, 15
    %v469 = vpop.permute.xlu0 %468
    %470 = vrot.lane.b32.xlu0 %v466, 15
    %v471 = vpop.permute.xlu0 %470
    %472 = vrot.lane.b32.xlu0 %v467, 15
    %v473 = vpop.permute.xlu0 %472
    %v474 = vrot.slane %v469, 4
    %v475 = vrot.slane %v471, 4
    %v476 = vrot.slane %v473, 4
    %v477 = vsel %vm161, %v474, %v475
    %v478 = vsel %vm447, %v469, %v477
    %v479 = vsel %vm161, %v475, %v476
    %v480 = vsel %vm447, %v471, %v479
    %483 = vst [vmem:[#allocation4 + $0x10] sm:$0x33] %v478
    %484 = vst [vmem:[#allocation4 + $0x18] sm:$0x33] %v480
    %v485 = vld [vmem:[#allocation5] sm:$0xff]
    %v486 = vld [vmem:[#allocation5 + $0x8] sm:$0xff]
    %v487 = vld [vmem:[#allocation5 + $0x10] sm:$0xf]
    %s488 = scalar_lea.vmem [#allocation8], 3
    %v489 = vld [vmem:[%s488] ss:$8 sm:$0xf]
    %v491 = vlaneseq
    %v492 = vshrl.u32 %v491, 7
    %v493 = vsub.s32 0, %v492
    %v494 = vrot.slane %v489, %v493
    %v495 = vlaneseq
    %v496 = vshrl.u32 %v495, 7
    %v497 = vsub.s32 1, %v496
    %v498 = vrot.slane %v489, %v497
    %v499 = vlaneseq
    %v500 = vshrl.u32 %v499, 7
    %v501 = vsub.s32 2, %v500
    %v502 = vrot.slane %v489, %v501
    %v503 = vlaneseq
    %v504 = vshrl.u32 %v503, 7
    %v505 = vsub.s32 3, %v504
    %v506 = vrot.slane %v489, %v505
    %v507 = vcombine.low %v494, %v498
    %v508 = vcombine.low %v502, %v506
    %509 = vrot.lane.b32.xlu0 %v507, 127
    %v510 = vpop.permute.xlu0 %509
    %511 = vrot.lane.b32.xlu0 %v508, 127
    %v512 = vpop.permute.xlu0 %511
    %v513 = vrot.slane %v510, 4
    %v514 = vrot.slane %v512, 4
    %vm515 = vcmask 1039360
    %v516 = vsel %vm515, %v513, %v510
    %v517 = vsel %vm92, %v513, %v514
    %v518 = vsel %vm515, %v517, %v512
    %v522 = vmul.f32 %v485, %v516
    %v523 = vmul.f32 %v486, %v518
    %v524 = vmul.f32 %v487, %v514
    %v527 = vcombine.high %v522, %v522
    %v528 = vcombine.high %v523, %v523
    %v531 = vpack.c.bf16 %v522, %v522
    %v532 = vpack.c.bf16 %v527, %v527
    %v533 = vpack.c.bf16 %v523, %v523
    %v534 = vpack.c.bf16 %v528, %v528
    %v535 = vpack.c.bf16 %v524, %v524
    %v536 = vunpack.c.l.bf16 %v531
    %v537 = vunpack.c.l.bf16 %v532
    %v538 = vunpack.c.l.bf16 %v533
    %v539 = vunpack.c.l.bf16 %v534
    %v540 = vunpack.c.l.bf16 %v535
    %v545 = vcombine.low %v536, %v537
    %v546 = vcombine.low %v538, %v539
    %v549 = vsub.f32 %v522, %v545
    %v550 = vsub.f32 %v523, %v546
    %v551 = vsub.f32 %v524, %v540
    %v554 = vcombine.high %v549, %v549
    %v555 = vcombine.high %v550, %v550
    %v558 = vpack.c.bf16 %v549, %v549
    %v559 = vpack.c.bf16 %v554, %v554
    %v560 = vpack.c.bf16 %v550, %v550
    %v561 = vpack.c.bf16 %v555, %v555
    %v562 = vpack.c.bf16 %v551, %v551
    %v568 = vunpack.c.l.b16 %v531
    %v569 = vunpack.c.l.b16 %v532
    %v570 = vunpack.c.l.b16 %v533
    %v571 = vunpack.c.l.b16 %v534
    %v572 = vunpack.c.l.b16 %v535
    %v573 = vpack.c.b16 %v569, %v568
    %v574 = vpack.c.b16 %v571, %v570
    %v575 = vpack.c.b16 %v572, %v572
    %v576 = vrot.slane %v573, 6
    %v577 = vrot.slane %v574, 6
    %v578 = vrot.slane %v575, 6
    %579 = vrot.lane.b32.xlu0 %v576, 1
    %v580 = vpop.permute.xlu0 %579
    %581 = vrot.lane.b32.xlu0 %v577, 1
    %v582 = vpop.permute.xlu0 %581
    %583 = vrot.lane.b32.xlu0 %v578, 1
    %v584 = vpop.permute.xlu0 %583
    %v585 = vrot.slane %v580, 4
    %v586 = vrot.slane %v582, 4
    %v587 = vrot.slane %v584, 4
    %v588 = vsel %vm161, %v585, %v586
    %vm589 = vcmask 7168
    %v590 = vsel %vm589, %v580, %v588
    %v591 = vsel %vm161, %v586, %v587
    %v592 = vsel %vm589, %v582, %v591
    %595 = vst [vmem:[#allocation3 + $0x10] sm:$0xcc] %v590
    %596 = vst [vmem:[#allocation3 + $0x18] sm:$0xcc] %v592
    %v602 = vunpack.c.l.b16 %v558
    %v603 = vunpack.c.l.b16 %v559
    %v604 = vunpack.c.l.b16 %v560
    %v605 = vunpack.c.l.b16 %v561
    %v606 = vunpack.c.l.b16 %v562
    %v607 = vpack.c.b16 %v603, %v602
    %v608 = vpack.c.b16 %v605, %v604
    %v609 = vpack.c.b16 %v606, %v606
    %v610 = vrot.slane %v607, 6
    %v611 = vrot.slane %v608, 6
    %v612 = vrot.slane %v609, 6
    %613 = vrot.lane.b32.xlu0 %v610, 1
    %v614 = vpop.permute.xlu0 %613
    %615 = vrot.lane.b32.xlu0 %v611, 1
    %v616 = vpop.permute.xlu0 %615
    %617 = vrot.lane.b32.xlu0 %v612, 1
    %v618 = vpop.permute.xlu0 %617
    %v619 = vrot.slane %v614, 4
    %v620 = vrot.slane %v616, 4
    %v621 = vrot.slane %v618, 4
    %v622 = vsel %vm161, %v619, %v620
    %v623 = vsel %vm589, %v614, %v622
    %v624 = vsel %vm161, %v620, %v621
    %v625 = vsel %vm589, %v616, %v624
    %628 = vst [vmem:[#allocation4 + $0x10] sm:$0xcc] %v623
    %629 = vst [vmem:[#allocation4 + $0x18] sm:$0xcc] %v625
    %v630 = vld [vmem:[#allocation5 + $0x4] sm:$0xff]
    %v631 = vld [vmem:[#allocation5 + $0xc] sm:$0xff]
    %v634 = vcombine.high %v630, %v630
    %v635 = vcombine.high %v631, %v631
    %v638 = vpack.c.bf16 %v630, %v630
    %v639 = vpack.c.bf16 %v634, %v634
    %v640 = vpack.c.bf16 %v631, %v631
    %v641 = vpack.c.bf16 %v635, %v635
    %v642 = vunpack.c.l.bf16 %v638
    %v643 = vunpack.c.l.bf16 %v639
    %v644 = vunpack.c.l.bf16 %v640
    %v645 = vunpack.c.l.bf16 %v641
    %v650 = vcombine.low %v642, %v643
    %v651 = vcombine.low %v644, %v645
    %v654 = vsub.f32 %v630, %v650
    %v655 = vsub.f32 %v631, %v651
    %v658 = vcombine.high %v654, %v654
    %v659 = vcombine.high %v655, %v655
    %v662 = vpack.c.bf16 %v654, %v654
    %v663 = vpack.c.bf16 %v658, %v658
    %v664 = vpack.c.bf16 %v655, %v655
    %v665 = vpack.c.bf16 %v659, %v659
    %v670 = vunpack.c.l.b16 %v638
    %v671 = vunpack.c.l.b16 %v639
    %v672 = vunpack.c.l.b16 %v640
    %v673 = vunpack.c.l.b16 %v641
    %v674 = vpack.c.b16 %v671, %v670
    %v675 = vpack.c.b16 %v673, %v672
    %678 = vst [vmem:[#allocation3 + $0x20] sm:$0x33] %v674
    %679 = vst [vmem:[#allocation3 + $0x28] sm:$0x33] %v675
    %v684 = vunpack.c.l.b16 %v662
    %v685 = vunpack.c.l.b16 %v663
    %v686 = vunpack.c.l.b16 %v664
    %v687 = vunpack.c.l.b16 %v665
    %v688 = vpack.c.b16 %v685, %v684
    %v689 = vpack.c.b16 %v687, %v686
    %692 = vst [vmem:[#allocation4 + $0x20] sm:$0x33] %v688
    %693 = vst [vmem:[#allocation4 + $0x28] sm:$0x33] %v689
    %v694 = vld [vmem:[#allocation5 + $0x4] sm:$0xff]
    %v695 = vld [vmem:[#allocation5 + $0xc] sm:$0xff]
    %v696 = vld [vmem:[#allocation5 + $0x14] sm:$0xf]
    %s697 = scalar_lea.vmem [#allocation8], 4
    %v698 = vld [vmem:[%s697] ss:$8 sm:$0xf]
    %v700 = vlaneseq
    %v701 = vshrl.u32 %v700, 7
    %v702 = vsub.s32 0, %v701
    %v703 = vrot.slane %v698, %v702
    %v704 = vlaneseq
    %v705 = vshrl.u32 %v704, 7
    %v706 = vsub.s32 1, %v705
    %v707 = vrot.slane %v698, %v706
    %v708 = vlaneseq
    %v709 = vshrl.u32 %v708, 7
    %v710 = vsub.s32 2, %v709
    %v711 = vrot.slane %v698, %v710
    %v712 = vlaneseq
    %v713 = vshrl.u32 %v712, 7
    %v714 = vsub.s32 3, %v713
    %v715 = vrot.slane %v698, %v714
    %v716 = vcombine.low %v703, %v707
    %v717 = vcombine.low %v711, %v715
    %718 = vrot.lane.b32.xlu0 %v716, 1
    %v719 = vpop.permute.xlu0 %718
    %720 = vrot.lane.b32.xlu0 %v717, 1
    %v721 = vpop.permute.xlu0 %720
    %v722 = vrot.slane %v719, 4
    %v723 = vrot.slane %v721, 4
    %vm724 = vcmask 7168
    %v725 = vsel %vm724, %v722, %v719
    %v726 = vsel %vm92, %v722, %v723
    %v727 = vsel %vm724, %v726, %v721
    %v731 = vmul.f32 %v694, %v725
    %v732 = vmul.f32 %v695, %v727
    %v733 = vmul.f32 %v696, %v723
    %v736 = vcombine.high %v731, %v731
    %v737 = vcombine.high %v732, %v732
    %v740 = vpack.c.bf16 %v731, %v731
    %v741 = vpack.c.bf16 %v736, %v736
    %v742 = vpack.c.bf16 %v732, %v732
    %v743 = vpack.c.bf16 %v737, %v737
    %v744 = vpack.c.bf16 %v733, %v733
    %v745 = vunpack.c.l.bf16 %v740
    %v746 = vunpack.c.l.bf16 %v741
    %v747 = vunpack.c.l.bf16 %v742
    %v748 = vunpack.c.l.bf16 %v743
    %v749 = vunpack.c.l.bf16 %v744
    %v754 = vcombine.low %v745, %v746
    %v755 = vcombine.low %v747, %v748
    %v758 = vsub.f32 %v731, %v754
    %v759 = vsub.f32 %v732, %v755
    %v760 = vsub.f32 %v733, %v749
    %v763 = vcombine.high %v758, %v758
    %v764 = vcombine.high %v759, %v759
    %v767 = vpack.c.bf16 %v758, %v758
    %v768 = vpack.c.bf16 %v763, %v763
    %v769 = vpack.c.bf16 %v759, %v759
    %v770 = vpack.c.bf16 %v764, %v764
    %v771 = vpack.c.bf16 %v760, %v760
    %v777 = vunpack.c.l.b16 %v740
    %v778 = vunpack.c.l.b16 %v741
    %v779 = vunpack.c.l.b16 %v742
    %v780 = vunpack.c.l.b16 %v743
    %v781 = vunpack.c.l.b16 %v744
    %v782 = vpack.c.b16 %v778, %v777
    %v783 = vpack.c.b16 %v780, %v779
    %v784 = vpack.c.b16 %v781, %v781
    %v785 = vrot.slane %v782, 6
    %v786 = vrot.slane %v783, 6
    %v787 = vrot.slane %v784, 6
    %788 = vrot.lane.b32.xlu0 %v785, 127
    %v789 = vpop.permute.xlu0 %788
    %790 = vrot.lane.b32.xlu0 %v786, 127
    %v791 = vpop.permute.xlu0 %790
    %792 = vrot.lane.b32.xlu0 %v787, 127
    %v793 = vpop.permute.xlu0 %792
    %v794 = vrot.slane %v789, 4
    %v795 = vrot.slane %v791, 4
    %v796 = vrot.slane %v793, 4
    %v797 = vsel %vm161, %v794, %v795
    %vm798 = vcmask 1039360
    %v799 = vsel %vm798, %v789, %v797
    %v800 = vsel %vm161, %v795, %v796
    %v801 = vsel %vm798, %v791, %v800
    %804 = vst [vmem:[#allocation3 + $0x20] sm:$0xcc] %v799
    %805 = vst [vmem:[#allocation3 + $0x28] sm:$0xcc] %v801
    %v811 = vunpack.c.l.b16 %v767
    %v812 = vunpack.c.l.b16 %v768
    %v813 = vunpack.c.l.b16 %v769
    %v814 = vunpack.c.l.b16 %v770
    %v815 = vunpack.c.l.b16 %v771
    %v816 = vpack.c.b16 %v812, %v811
    %v817 = vpack.c.b16 %v814, %v813
    %v818 = vpack.c.b16 %v815, %v815
    %v819 = vrot.slane %v816, 6
    %v820 = vrot.slane %v817, 6
    %v821 = vrot.slane %v818, 6
    %822 = vrot.lane.b32.xlu0 %v819, 127
    %v823 = vpop.permute.xlu0 %822
    %824 = vrot.lane.b32.xlu0 %v820, 127
    %v825 = vpop.permute.xlu0 %824
    %826 = vrot.lane.b32.xlu0 %v821, 127
    %v827 = vpop.permute.xlu0 %826
    %v828 = vrot.slane %v823, 4
    %v829 = vrot.slane %v825, 4
    %v830 = vrot.slane %v827, 4
    %v831 = vsel %vm161, %v828, %v829
    %v832 = vsel %vm798, %v823, %v831
    %v833 = vsel %vm161, %v829, %v830
    %v834 = vsel %vm798, %v825, %v833
    %837 = vst [vmem:[#allocation4 + $0x20] sm:$0xcc] %v832
    %838 = vst [vmem:[#allocation4 + $0x28] sm:$0xcc] %v834
    %v839 = vld [vmem:[#allocation5 + $0x4] sm:$0xff]
    %v840 = vld [vmem:[#allocation5 + $0xc] sm:$0xff]
    %v841 = vld [vmem:[#allocation5 + $0x14] sm:$0xf]
    %s842 = scalar_lea.vmem [#allocation8], 5
    %v843 = vld [vmem:[%s842] ss:$8 sm:$0xf]
    %v845 = vlaneseq
    %v846 = vshrl.u32 %v845, 7
    %v847 = vsub.s32 0, %v846
    %v848 = vrot.slane %v843, %v847
    %v849 = vlaneseq
    %v850 = vshrl.u32 %v849, 7
    %v851 = vsub.s32 1, %v850
    %v852 = vrot.slane %v843, %v851
    %v853 = vlaneseq
    %v854 = vshrl.u32 %v853, 7
    %v855 = vsub.s32 2, %v854
    %v856 = vrot.slane %v843, %v855
    %v857 = vlaneseq
    %v858 = vshrl.u32 %v857, 7
    %v859 = vsub.s32 3, %v858
    %v860 = vrot.slane %v843, %v859
    %v861 = vcombine.low %v848, %v852
    %v862 = vcombine.low %v856, %v860
    %863 = vrot.lane.b32.xlu0 %v861, 15
    %v864 = vpop.permute.xlu0 %863
    %865 = vrot.lane.b32.xlu0 %v862, 15
    %v866 = vpop.permute.xlu0 %865
    %v867 = vrot.slane %v864, 4
    %v868 = vrot.slane %v866, 4
    %vm869 = vcmask 121856
    %v870 = vsel %vm869, %v867, %v864
    %v871 = vsel %vm92, %v867, %v868
    %v872 = vsel %vm869, %v871, %v866
    %v876 = vmul.f32 %v839, %v870
    %v877 = vmul.f32 %v840, %v872
    %v878 = vmul.f32 %v841, %v868
    %v881 = vcombine.high %v876, %v876
    %v882 = vcombine.high %v877, %v877
    %v885 = vpack.c.bf16 %v876, %v876
    %v886 = vpack.c.bf16 %v881, %v881
    %v887 = vpack.c.bf16 %v877, %v877
    %v888 = vpack.c.bf16 %v882, %v882
    %v889 = vpack.c.bf16 %v878, %v878
    %v890 = vunpack.c.l.bf16 %v885
    %v891 = vunpack.c.l.bf16 %v886
    %v892 = vunpack.c.l.bf16 %v887
    %v893 = vunpack.c.l.bf16 %v888
    %v894 = vunpack.c.l.bf16 %v889
    %v899 = vcombine.low %v890, %v891
    %v900 = vcombine.low %v892, %v893
    %v903 = vsub.f32 %v876, %v899
    %v904 = vsub.f32 %v877, %v900
    %v905 = vsub.f32 %v878, %v894
    %v908 = vcombine.high %v903, %v903
    %v909 = vcombine.high %v904, %v904
    %v912 = vpack.c.bf16 %v903, %v903
    %v913 = vpack.c.bf16 %v908, %v908
    %v914 = vpack.c.bf16 %v904, %v904
    %v915 = vpack.c.bf16 %v909, %v909
    %v916 = vpack.c.bf16 %v905, %v905
    %v922 = vunpack.c.l.b16 %v885
    %v923 = vunpack.c.l.b16 %v886
    %v924 = vunpack.c.l.b16 %v887
    %v925 = vunpack.c.l.b16 %v888
    %v926 = vunpack.c.l.b16 %v889
    %v927 = vpack.c.b16 %v923, %v922
    %v928 = vpack.c.b16 %v925, %v924
    %v929 = vpack.c.b16 %v926, %v926
    %930 = vrot.lane.b32.xlu0 %v927, 113
    %v931 = vpop.permute.xlu0 %930
    %932 = vrot.lane.b32.xlu0 %v928, 113
    %v933 = vpop.permute.xlu0 %932
    %934 = vrot.lane.b32.xlu0 %v929, 113
    %v935 = vpop.permute.xlu0 %934
    %v936 = vrot.slane %v931, 4
    %v937 = vrot.slane %v933, 4
    %v938 = vrot.slane %v935, 4
    %v939 = vsel %vm161, %v936, %v937
    %vm940 = vcmask 924672
    %v941 = vsel %vm940, %v931, %v939
    %v942 = vsel %vm161, %v937, %v938
    %v943 = vsel %vm940, %v933, %v942
    %946 = vst [vmem:[#allocation3 + $0x30] sm:$0x33] %v941
    %947 = vst [vmem:[#allocation3 + $0x38] sm:$0x33] %v943
    %v953 = vunpack.c.l.b16 %v912
    %v954 = vunpack.c.l.b16 %v913
    %v955 = vunpack.c.l.b16 %v914
    %v956 = vunpack.c.l.b16 %v915
    %v957 = vunpack.c.l.b16 %v916
    %v958 = vpack.c.b16 %v954, %v953
    %v959 = vpack.c.b16 %v956, %v955
    %v960 = vpack.c.b16 %v957, %v957
    %961 = vrot.lane.b32.xlu0 %v958, 113
    %v962 = vpop.permute.xlu0 %961
    %963 = vrot.lane.b32.xlu0 %v959, 113
    %v964 = vpop.permute.xlu0 %963
    %965 = vrot.lane.b32.xlu0 %v960, 113
    %v966 = vpop.permute.xlu0 %965
    %v967 = vrot.slane %v962, 4
    %v968 = vrot.slane %v964, 4
    %v969 = vrot.slane %v966, 4
    %v970 = vsel %vm161, %v967, %v968
    %v971 = vsel %vm940, %v962, %v970
    %v972 = vsel %vm161, %v968, %v969
    %v973 = vsel %vm940, %v964, %v972
    %976 = vst [vmem:[#allocation4 + $0x30] sm:$0x33] %v971
    %977 = vst [vmem:[#allocation4 + $0x38] sm:$0x33] %v973
    %v978 = vld [vmem:[#allocation5 + $0x4] sm:$0xff]
    %v979 = vld [vmem:[#allocation5 + $0xc] sm:$0xff]
    %v980 = vld [vmem:[#allocation5 + $0x14] sm:$0xf]
    %s981 = scalar_lea.vmem [#allocation8], 6
    %v982 = vld [vmem:[%s981] ss:$8 sm:$0xf]
    %v984 = vlaneseq
    %v985 = vshrl.u32 %v984, 7
    %v986 = vsub.s32 0, %v985
    %v987 = vrot.slane %v982, %v986
    %v988 = vlaneseq
    %v989 = vshrl.u32 %v988, 7
    %v990 = vsub.s32 1, %v989
    %v991 = vrot.slane %v982, %v990
    %v992 = vlaneseq
    %v993 = vshrl.u32 %v992, 7
    %v994 = vsub.s32 2, %v993
    %v995 = vrot.slane %v982, %v994
    %v996 = vlaneseq
    %v997 = vshrl.u32 %v996, 7
    %v998 = vsub.s32 3, %v997
    %v999 = vrot.slane %v982, %v998
    %v1000 = vcombine.low %v987, %v991
    %v1001 = vcombine.low %v995, %v999
    %1002 = vrot.lane.b32.xlu0 %v1000, 16
    %v1003 = vpop.permute.xlu0 %1002
    %1004 = vrot.lane.b32.xlu0 %v1001, 16
    %v1005 = vpop.permute.xlu0 %1004
    %v1006 = vrot.slane %v1003, 4
    %v1007 = vrot.slane %v1005, 4
    %vm1008 = vcmask 130048
    %v1009 = vsel %vm1008, %v1006, %v1003
    %v1010 = vsel %vm92, %v1006, %v1007
    %v1011 = vsel %vm1008, %v1010, %v1005
    %v1015 = vmul.f32 %v978, %v1009
    %v1016 = vmul.f32 %v979, %v1011
    %v1017 = vmul.f32 %v980, %v1007
    %v1020 = vcombine.high %v1015, %v1015
    %v1021 = vcombine.high %v1016, %v1016
    %v1024 = vpack.c.bf16 %v1015, %v1015
    %v1025 = vpack.c.bf16 %v1020, %v1020
    %v1026 = vpack.c.bf16 %v1016, %v1016
    %v1027 = vpack.c.bf16 %v1021, %v1021
    %v1028 = vpack.c.bf16 %v1017, %v1017
    %v1029 = vunpack.c.l.bf16 %v1024
    %v1030 = vunpack.c.l.bf16 %v1025
    %v1031 = vunpack.c.l.bf16 %v1026
    %v1032 = vunpack.c.l.bf16 %v1027
    %v1033 = vunpack.c.l.bf16 %v1028
    %v1038 = vcombine.low %v1029, %v1030
    %v1039 = vcombine.low %v1031, %v1032
    %v1042 = vsub.f32 %v1015, %v1038
    %v1043 = vsub.f32 %v1016, %v1039
    %v1044 = vsub.f32 %v1017, %v1033
    %v1047 = vcombine.high %v1042, %v1042
    %v1048 = vcombine.high %v1043, %v1043
    %v1051 = vpack.c.bf16 %v1042, %v1042
    %v1052 = vpack.c.bf16 %v1047, %v1047
    %v1053 = vpack.c.bf16 %v1043, %v1043
    %v1054 = vpack.c.bf16 %v1048, %v1048
    %v1055 = vpack.c.bf16 %v1044, %v1044
    %v1061 = vunpack.c.l.b16 %v1024
    %v1062 = vunpack.c.l.b16 %v1025
    %v1063 = vunpack.c.l.b16 %v1026
    %v1064 = vunpack.c.l.b16 %v1027
    %v1065 = vunpack.c.l.b16 %v1028
    %v1066 = vpack.c.b16 %v1062, %v1061
    %v1067 = vpack.c.b16 %v1064, %v1063
    %v1068 = vpack.c.b16 %v1065, %v1065
    %v1069 = vrot.slane %v1066, 6
    %v1070 = vrot.slane %v1067, 6
    %v1071 = vrot.slane %v1068, 6
    %1072 = vrot.lane.b32.xlu0 %v1069, 112
    %v1073 = vpop.permute.xlu0 %1072
    %1074 = vrot.lane.b32.xlu0 %v1070, 112
    %v1075 = vpop.permute.xlu0 %1074
    %1076 = vrot.lane.b32.xlu0 %v1071, 112
    %v1077 = vpop.permute.xlu0 %1076
    %v1078 = vrot.slane %v1073, 4
    %v1079 = vrot.slane %v1075, 4
    %v1080 = vrot.slane %v1077, 4
    %v1081 = vsel %vm161, %v1078, %v1079
    %vm1082 = vcmask 916480
    %v1083 = vsel %vm1082, %v1073, %v1081
    %v1084 = vsel %vm161, %v1079, %v1080
    %v1085 = vsel %vm1082, %v1075, %v1084
    %1088 = vst [vmem:[#allocation3 + $0x30] sm:$0xcc] %v1083
    %1089 = vst [vmem:[#allocation3 + $0x38] sm:$0xcc] %v1085
    %v1095 = vunpack.c.l.b16 %v1051
    %v1096 = vunpack.c.l.b16 %v1052
    %v1097 = vunpack.c.l.b16 %v1053
    %v1098 = vunpack.c.l.b16 %v1054
    %v1099 = vunpack.c.l.b16 %v1055
    %v1100 = vpack.c.b16 %v1096, %v1095
    %v1101 = vpack.c.b16 %v1098, %v1097
    %v1102 = vpack.c.b16 %v1099, %v1099
    %v1103 = vrot.slane %v1100, 6
    %v1104 = vrot.slane %v1101, 6
    %v1105 = vrot.slane %v1102, 6
    %1106 = vrot.lane.b32.xlu0 %v1103, 112
    %v1107 = vpop.permute.xlu0 %1106
    %1108 = vrot.lane.b32.xlu0 %v1104, 112
    %v1109 = vpop.permute.xlu0 %1108
    %1110 = vrot.lane.b32.xlu0 %v1105, 112
    %v1111 = vpop.permute.xlu0 %1110
    %v1112 = vrot.slane %v1107, 4
    %v1113 = vrot.slane %v1109, 4
    %v1114 = vrot.slane %v1111, 4
    %v1115 = vsel %vm161, %v1112, %v1113
    %v1116 = vsel %vm1082, %v1107, %v1115
    %v1117 = vsel %vm161, %v1113, %v1114
    %v1118 = vsel %vm1082, %v1109, %v1117
    %1121 = vst [vmem:[#allocation4 + $0x30] sm:$0xcc] %v1116
    %1122 = vst [vmem:[#allocation4 + $0x38] sm:$0xcc] %v1118
    %v1123 = vld [vmem:[#allocation5 + $0x4] sm:$0xff]
    %v1124 = vld [vmem:[#allocation5 + $0xc] sm:$0xff]
    %v1125 = vld [vmem:[#allocation5 + $0x14] sm:$0xf]
    %s1126 = scalar_lea.vmem [#allocation8], 7
    %v1127 = vld [vmem:[%s1126] ss:$8 sm:$0xf]
    %v1129 = vlaneseq
    %v1130 = vshrl.u32 %v1129, 7
    %v1131 = vsub.s32 0, %v1130
    %v1132 = vrot.slane %v1127, %v1131
    %v1133 = vlaneseq
    %v1134 = vshrl.u32 %v1133, 7
    %v1135 = vsub.s32 1, %v1134
    %v1136 = vrot.slane %v1127, %v1135
    %v1137 = vlaneseq
    %v1138 = vshrl.u32 %v1137, 7
    %v1139 = vsub.s32 2, %v1138
    %v1140 = vrot.slane %v1127, %v1139
    %v1141 = vlaneseq
    %v1142 = vshrl.u32 %v1141, 7
    %v1143 = vsub.s32 3, %v1142
    %v1144 = vrot.slane %v1127, %v1143
    %v1145 = vcombine.low %v1132, %v1136
    %v1146 = vcombine.low %v1140, %v1144
    %1147 = vrot.lane.b32.xlu0 %v1145, 17
    %v1148 = vpop.permute.xlu0 %1147
    %1149 = vrot.lane.b32.xlu0 %v1146, 17
    %v1150 = vpop.permute.xlu0 %1149
    %v1151 = vrot.slane %v1148, 4
    %v1152 = vrot.slane %v1150, 4
    %vm1153 = vcmask 138240
    %v1154 = vsel %vm1153, %v1151, %v1148
    %v1155 = vsel %vm92, %v1151, %v1152
    %v1156 = vsel %vm1153, %v1155, %v1150
    %v1160 = vmul.f32 %v1123, %v1154
    %v1161 = vmul.f32 %v1124, %v1156
    %v1162 = vmul.f32 %v1125, %v1152
    %v1165 = vcombine.high %v1160, %v1160
    %v1166 = vcombine.high %v1161, %v1161
    %v1169 = vpack.c.bf16 %v1160, %v1160
    %v1170 = vpack.c.bf16 %v1165, %v1165
    %v1171 = vpack.c.bf16 %v1161, %v1161
    %v1172 = vpack.c.bf16 %v1166, %v1166
    %v1173 = vpack.c.bf16 %v1162, %v1162
    %v1174 = vunpack.c.l.bf16 %v1169
    %v1175 = vunpack.c.l.bf16 %v1170
    %v1176 = vunpack.c.l.bf16 %v1171
    %v1177 = vunpack.c.l.bf16 %v1172
    %v1178 = vunpack.c.l.bf16 %v1173
    %v1183 = vcombine.low %v1174, %v1175
    %v1184 = vcombine.low %v1176, %v1177
    %v1187 = vsub.f32 %v1160, %v1183
    %v1188 = vsub.f32 %v1161, %v1184
    %v1189 = vsub.f32 %v1162, %v1178
    %v1192 = vcombine.high %v1187, %v1187
    %v1193 = vcombine.high %v1188, %v1188
    %v1196 = vpack.c.bf16 %v1187, %v1187
    %v1197 = vpack.c.bf16 %v1192, %v1192
    %v1198 = vpack.c.bf16 %v1188, %v1188
    %v1199 = vpack.c.bf16 %v1193, %v1193
    %v1200 = vpack.c.bf16 %v1189, %v1189
    %v1206 = vunpack.c.l.b16 %v1169
    %v1207 = vunpack.c.l.b16 %v1170
    %v1208 = vunpack.c.l.b16 %v1171
    %v1209 = vunpack.c.l.b16 %v1172
    %v1210 = vunpack.c.l.b16 %v1173
    %v1211 = vpack.c.b16 %v1207, %v1206
    %v1212 = vpack.c.b16 %v1209, %v1208
    %v1213 = vpack.c.b16 %v1210, %v1210
    %1214 = vrot.lane.b32.xlu0 %v1211, 111
    %v1215 = vpop.permute.xlu0 %1214
    %1216 = vrot.lane.b32.xlu0 %v1212, 111
    %v1217 = vpop.permute.xlu0 %1216
    %1218 = vrot.lane.b32.xlu0 %v1213, 111
    %v1219 = vpop.permute.xlu0 %1218
    %v1220 = vrot.slane %v1215, 4
    %v1221 = vrot.slane %v1217, 4
    %v1222 = vrot.slane %v1219, 4
    %v1223 = vsel %vm161, %v1220, %v1221
    %vm1224 = vcmask 908288
    %v1225 = vsel %vm1224, %v1215, %v1223
    %v1226 = vsel %vm161, %v1221, %v1222
    %v1227 = vsel %vm1224, %v1217, %v1226
    %1230 = vst [vmem:[#allocation3 + $0x40] sm:$0x33] %v1225
    %1231 = vst [vmem:[#allocation3 + $0x48] sm:$0x33] %v1227
    %v1237 = vunpack.c.l.b16 %v1196
    %v1238 = vunpack.c.l.b16 %v1197
    %v1239 = vunpack.c.l.b16 %v1198
    %v1240 = vunpack.c.l.b16 %v1199
    %v1241 = vunpack.c.l.b16 %v1200
    %v1242 = vpack.c.b16 %v1238, %v1237
    %v1243 = vpack.c.b16 %v1240, %v1239
    %v1244 = vpack.c.b16 %v1241, %v1241
    %1245 = vrot.lane.b32.xlu0 %v1242, 111
    %v1246 = vpop.permute.xlu0 %1245
    %1247 = vrot.lane.b32.xlu0 %v1243, 111
    %v1248 = vpop.permute.xlu0 %1247
    %1249 = vrot.lane.b32.xlu0 %v1244, 111
    %v1250 = vpop.permute.xlu0 %1249
    %v1251 = vrot.slane %v1246, 4
    %v1252 = vrot.slane %v1248, 4
    %v1253 = vrot.slane %v1250, 4
    %v1254 = vsel %vm161, %v1251, %v1252
    %v1255 = vsel %vm1224, %v1246, %v1254
    %v1256 = vsel %vm161, %v1252, %v1253
    %v1257 = vsel %vm1224, %v1248, %v1256
    %1260 = vst [vmem:[#allocation4 + $0x40] sm:$0x33] %v1255
    %1261 = vst [vmem:[#allocation4 + $0x48] sm:$0x33] %v1257
    %v1262 = vld [vmem:[%s2] sm:$0xf]
    %v1263 = vld [vmem:[#allocation3] sm:$0xff]
    %v1264 = vld [vmem:[#allocation3 + $0x8] sm:$0xff]
    %v1265 = vld [vmem:[#allocation3 + $0x10] sm:$0xff]
    %v1266 = vld [vmem:[#allocation3 + $0x18] sm:$0xff]
    %v1267 = vld [vmem:[#allocation3 + $0x20] sm:$0xff]
    %v1268 = vld [vmem:[#allocation3 + $0x28] sm:$0xff]
    %v1269 = vld [vmem:[#allocation3 + $0x30] sm:$0xff]
    %v1270 = vld [vmem:[#allocation3 + $0x38] sm:$0xff]
    %v1271 = vld [vmem:[#allocation3 + $0x40] sm:$0x33]
    %v1272 = vld [vmem:[#allocation3 + $0x48] sm:$0x33]
    %v1283 = vunpack.c.l.b16 %v1263
    %v1284 = vunpack.c.h.b16 %v1263
    %v1285 = vunpack.c.l.b16 %v1264
    %v1286 = vunpack.c.h.b16 %v1264
    %v1287 = vunpack.c.l.b16 %v1265
    %v1288 = vunpack.c.h.b16 %v1265
    %v1289 = vunpack.c.l.b16 %v1266
    %v1290 = vunpack.c.h.b16 %v1266
    %v1291 = vunpack.c.l.b16 %v1267
    %v1292 = vunpack.c.h.b16 %v1267
    %v1293 = vunpack.c.l.b16 %v1268
    %v1294 = vunpack.c.h.b16 %v1268
    %v1295 = vunpack.c.l.b16 %v1269
    %v1296 = vunpack.c.h.b16 %v1269
    %v1297 = vunpack.c.l.b16 %v1270
    %v1298 = vunpack.c.h.b16 %v1270
    %v1299 = vunpack.c.l.b16 %v1271
    %v1300 = vunpack.c.h.b16 %v1271
    %v1301 = vunpack.c.l.b16 %v1272
    %v1302 = vunpack.c.h.b16 %v1272
    %v1303 = vpack.c.b16 %v1287, %v1283
    %v1304 = vpack.c.b16 %v1288, %v1284
    %v1305 = vpack.c.b16 %v1289, %v1285
    %v1306 = vpack.c.b16 %v1290, %v1286
    %v1307 = vpack.c.b16 %v1295, %v1291
    %v1308 = vpack.c.b16 %v1296, %v1292
    %v1309 = vpack.c.b16 %v1297, %v1293
    %v1310 = vpack.c.b16 %v1298, %v1294
    %v1311 = vpack.c.b16 %v1299, %v1299
    %v1312 = vpack.c.b16 %v1300, %v1300
    %v1313 = vpack.c.b16 %v1301, %v1301
    %v1314 = vpack.c.b16 %v1302, %v1302
    %vm1323 = vcmask 293888
    %v1325 = vsel %vm1323, %v1262, 0
    %vm1327 = vcmask 1041408
    %v1329 = vsel %vm1327, %v1311, 0
    %v1332 = vsel %vm1327, %v1312, 0
    %v1335 = vsel %vm1327, %v1313, 0
    %v1338 = vsel %vm1327, %v1314, 0
    %1340 = vmatprep.subr.bf16.mxu0 %v1304
    %1341 = vmatpush1.bf16.msra.mxu0 %v1303
    %1342 = vmatprep.subr.bf16.mxu0 %v1308
    %1343 = vmatpush1.bf16.msra.mxu0 %v1307
    %1344 = vmatprep.subr.bf16.mxu0 %v1332
    %1345 = vmatpush1.bf16.msra.mxu0 %v1329
    %1346 = vmatprep.subr.bf16.mxu0 0
    %1347 = vmatpush1.bf16.msra.mxu0 0
    %1348 = vmatprep.subr.bf16.mxu0 0
    %1349 = vmatpush1.bf16.msra.mxu0 0
    %1350 = vmatprep.subr.bf16.mxu0 0
    %1351 = vmatpush1.bf16.msra.mxu0 0
    %1352 = vmatprep.subr.bf16.mxu0 0
    %1353 = vmatpush1.bf16.msra.mxu0 0
    %1354 = vmatprep.subr.bf16.mxu0 0
    %1355 = vmatpush1.bf16.msra.mxu0 0
    %1356 = vmatprep.subr.bf16.mxu0 0
    %1357 = vmatpush1.bf16.msra.mxu0 0
    %1358 = vmatprep.subr.bf16.mxu0 0
    %1359 = vmatpush1.bf16.msra.mxu0 0
    %1360 = vmatprep.subr.bf16.mxu0 0
    %1361 = vmatpush1.bf16.msra.mxu0 0
    %1362 = vmatprep.subr.bf16.mxu0 0
    %1363 = vmatpush1.bf16.msra.mxu0 0
    %1364 = vmatprep.subr.bf16.mxu0 0
    %1365 = vmatpush1.bf16.msra.mxu0 0
    %1366 = vmatprep.subr.bf16.mxu0 0
    %1367 = vmatpush1.bf16.msra.mxu0 0
    %1368 = vmatprep.subr.bf16.mxu0 0
    %1369 = vmatpush1.bf16.msra.mxu0 0
    %1370 = vmatprep.subr.bf16.mxu0 0
    %1371 = vmatpush1.bf16.msra.mxu0 0
    %1372 = vmatprep.mubr.bf16.mxu0 0
    %1373 = vmatmul.mubr.bf16.gmra.mrb[0].mxu0 %v1325
    %v1374 = vpop.f32.mrb[0].mxu0
    %v1375 = vadd.f32 0.0, %v1374
    %v1376 = vpop.f32.mrb[0].mxu0
    %v1377 = vadd.f32 0.0, %v1376
    %v1378 = vpop.f32.mrb[0].mxu0
    %v1379 = vpop.f32.mrb[0].mxu0
    %1380 = vdwg.mxu0
    %1381 = vmatprep.subr.bf16.mxu0 %v1306
    %1382 = vmatpush1.bf16.msra.mxu0 %v1305
    %1383 = vmatprep.subr.bf16.mxu0 %v1310
    %1384 = vmatpush1.bf16.msra.mxu0 %v1309
    %1385 = vmatprep.subr.bf16.mxu0 %v1338
    %1386 = vmatpush1.bf16.msra.mxu0 %v1335
    %1387 = vmatprep.subr.bf16.mxu0 0
    %1388 = vmatpush1.bf16.msra.mxu0 0
    %1389 = vmatprep.subr.bf16.mxu0 0
    %1390 = vmatpush1.bf16.msra.mxu0 0
    %1391 = vmatprep.subr.bf16.mxu0 0
    %1392 = vmatpush1.bf16.msra.mxu0 0
    %1393 = vmatprep.subr.bf16.mxu0 0
    %1394 = vmatpush1.bf16.msra.mxu0 0
    %1395 = vmatprep.subr.bf16.mxu0 0
    %1396 = vmatpush1.bf16.msra.mxu0 0
    %1397 = vmatprep.subr.bf16.mxu0 0
    %1398 = vmatpush1.bf16.msra.mxu0 0
    %1399 = vmatprep.subr.bf16.mxu0 0
    %1400 = vmatpush1.bf16.msra.mxu0 0
    %1401 = vmatprep.subr.bf16.mxu0 0
    %1402 = vmatpush1.bf16.msra.mxu0 0
    %1403 = vmatprep.subr.bf16.mxu0 0
    %1404 = vmatpush1.bf16.msra.mxu0 0
    %1405 = vmatprep.subr.bf16.mxu0 0
    %1406 = vmatpush1.bf16.msra.mxu0 0
    %1407 = vmatprep.subr.bf16.mxu0 0
    %1408 = vmatpush1.bf16.msra.mxu0 0
    %1409 = vmatprep.subr.bf16.mxu0 0
    %1410 = vmatpush1.bf16.msra.mxu0 0
    %1411 = vmatprep.subr.bf16.mxu0 0
    %1412 = vmatpush1.bf16.msra.mxu0 0
    %1413 = vmatprep.mubr.bf16.mxu0 0
    %1414 = vmatmul.mubr.bf16.gmra.mrb[0].mxu0 %v1325
    %v1415 = vpop.f32.mrb[0].mxu0
    %v1416 = vadd.f32 0.0, %v1415
    %v1417 = vpop.f32.mrb[0].mxu0
    %v1418 = vadd.f32 0.0, %v1417
    %v1419 = vpop.f32.mrb[0].mxu0
    %v1420 = vpop.f32.mrb[0].mxu0
    %1421 = vdwg.mxu0
    %v1422 = vld [vmem:[%s3] sm:$0x3]
    %v1423 = vld [vmem:[#allocation4] sm:$0xff]
    %v1424 = vld [vmem:[#allocation4 + $0x8] sm:$0xff]
    %v1425 = vld [vmem:[#allocation4 + $0x10] sm:$0xff]
    %v1426 = vld [vmem:[#allocation4 + $0x18] sm:$0xff]
    %v1427 = vld [vmem:[#allocation4 + $0x20] sm:$0xff]
    %v1428 = vld [vmem:[#allocation4 + $0x28] sm:$0xff]
    %v1429 = vld [vmem:[#allocation4 + $0x30] sm:$0xff]
    %v1430 = vld [vmem:[#allocation4 + $0x38] sm:$0xff]
    %v1431 = vld [vmem:[#allocation4 + $0x40] sm:$0x33]
    %v1432 = vld [vmem:[#allocation4 + $0x48] sm:$0x33]
    %v1443 = vunpack.c.l.b16 %v1423
    %v1444 = vunpack.c.h.b16 %v1423
    %v1445 = vunpack.c.l.b16 %v1424
    %v1446 = vunpack.c.h.b16 %v1424
    %v1447 = vunpack.c.l.b16 %v1425
    %v1448 = vunpack.c.h.b16 %v1425
    %v1449 = vunpack.c.l.b16 %v1426
    %v1450 = vunpack.c.h.b16 %v1426
    %v1451 = vunpack.c.l.b16 %v1427
    %v1452 = vunpack.c.h.b16 %v1427
    %v1453 = vunpack.c.l.b16 %v1428
    %v1454 = vunpack.c.h.b16 %v1428
    %v1455 = vunpack.c.l.b16 %v1429
    %v1456 = vunpack.c.h.b16 %v1429
    %v1457 = vunpack.c.l.b16 %v1430
    %v1458 = vunpack.c.h.b16 %v1430
    %v1459 = vunpack.c.l.b16 %v1431
    %v1460 = vunpack.c.h.b16 %v1431
    %v1461 = vunpack.c.l.b16 %v1432
    %v1462 = vunpack.c.h.b16 %v1432
    %v1463 = vpack.c.b16 %v1447, %v1443
    %v1464 = vpack.c.b16 %v1448, %v1444
    %v1465 = vpack.c.b16 %v1449, %v1445
    %v1466 = vpack.c.b16 %v1450, %v1446
    %v1467 = vpack.c.b16 %v1455, %v1451
    %v1468 = vpack.c.b16 %v1456, %v1452
    %v1469 = vpack.c.b16 %v1457, %v1453
    %v1470 = vpack.c.b16 %v1458, %v1454
    %v1471 = vpack.c.b16 %v1459, %v1459
    %v1472 = vpack.c.b16 %v1460, %v1460
    %v1473 = vpack.c.b16 %v1461, %v1461
    %v1474 = vpack.c.b16 %v1462, %v1462
    %v1484 = vsel %vm1323, %v1422, 0
    %v1487 = vsel %vm1327, %v1471, 0
    %v1490 = vsel %vm1327, %v1472, 0
    %v1493 = vsel %vm1327, %v1473, 0
    %v1496 = vsel %vm1327, %v1474, 0
    %1498 = vmatprep.subr.bf16.mxu0 %v1464
    %1499 = vmatpush1.bf16.msra.mxu0 %v1463
    %1500 = vmatprep.subr.bf16.mxu0 %v1468
    %1501 = vmatpush1.bf16.msra.mxu0 %v1467
    %1502 = vmatprep.subr.bf16.mxu0 %v1490
    %1503 = vmatpush1.bf16.msra.mxu0 %v1487
    %1504 = vmatprep.subr.bf16.mxu0 0
    %1505 = vmatpush1.bf16.msra.mxu0 0
    %1506 = vmatprep.subr.bf16.mxu0 0
    %1507 = vmatpush1.bf16.msra.mxu0 0
    %1508 = vmatprep.subr.bf16.mxu0 0
    %1509 = vmatpush1.bf16.msra.mxu0 0
    %1510 = vmatprep.subr.bf16.mxu0 0
    %1511 = vmatpush1.bf16.msra.mxu0 0
    %1512 = vmatprep.subr.bf16.mxu0 0
    %1513 = vmatpush1.bf16.msra.mxu0 0
    %1514 = vmatprep.subr.bf16.mxu0 0
    %1515 = vmatpush1.bf16.msra.mxu0 0
    %1516 = vmatprep.subr.bf16.mxu0 0
    %1517 = vmatpush1.bf16.msra.mxu0 0
    %1518 = vmatprep.subr.bf16.mxu0 0
    %1519 = vmatpush1.bf16.msra.mxu0 0
    %1520 = vmatprep.subr.bf16.mxu0 0
    %1521 = vmatpush1.bf16.msra.mxu0 0
    %1522 = vmatprep.subr.bf16.mxu0 0
    %1523 = vmatpush1.bf16.msra.mxu0 0
    %1524 = vmatprep.subr.bf16.mxu0 0
    %1525 = vmatpush1.bf16.msra.mxu0 0
    %1526 = vmatprep.subr.bf16.mxu0 0
    %1527 = vmatpush1.bf16.msra.mxu0 0
    %1528 = vmatprep.subr.bf16.mxu0 0
    %1529 = vmatpush1.bf16.msra.mxu0 0
    %1530 = vmatprep.mubr.bf16.mxu0 0
    %1531 = vmatmul.mubr.bf16.gmra.mrb[0].mxu0 %v1484
    %v1532 = vpop.f32.mrb[0].mxu0
    %v1533 = vadd.f32 0.0, %v1532
    %v1534 = vpop.f32.mrb[0].mxu0
    %v1535 = vadd.f32 0.0, %v1534
    %v1536 = vpop.f32.mrb[0].mxu0
    %v1537 = vpop.f32.mrb[0].mxu0
    %1538 = vdwg.mxu0
    %1539 = vmatprep.subr.bf16.mxu0 %v1466
    %1540 = vmatpush1.bf16.msra.mxu0 %v1465
    %1541 = vmatprep.subr.bf16.mxu0 %v1470
    %1542 = vmatpush1.bf16.msra.mxu0 %v1469
    %1543 = vmatprep.subr.bf16.mxu0 %v1496
    %1544 = vmatpush1.bf16.msra.mxu0 %v1493
    %1545 = vmatprep.subr.bf16.mxu0 0
    %1546 = vmatpush1.bf16.msra.mxu0 0
    %1547 = vmatprep.subr.bf16.mxu0 0
    %1548 = vmatpush1.bf16.msra.mxu0 0
    %1549 = vmatprep.subr.bf16.mxu0 0
    %1550 = vmatpush1.bf16.msra.mxu0 0
    %1551 = vmatprep.subr.bf16.mxu0 0
    %1552 = vmatpush1.bf16.msra.mxu0 0
    %1553 = vmatprep.subr.bf16.mxu0 0
    %1554 = vmatpush1.bf16.msra.mxu0 0
    %1555 = vmatprep.subr.bf16.mxu0 0
    %1556 = vmatpush1.bf16.msra.mxu0 0
    %1557 = vmatprep.subr.bf16.mxu0 0
    %1558 = vmatpush1.bf16.msra.mxu0 0
    %1559 = vmatprep.subr.bf16.mxu0 0
    %1560 = vmatpush1.bf16.msra.mxu0 0
    %1561 = vmatprep.subr.bf16.mxu0 0
    %1562 = vmatpush1.bf16.msra.mxu0 0
    %1563 = vmatprep.subr.bf16.mxu0 0
    %1564 = vmatpush1.bf16.msra.mxu0 0
    %1565 = vmatprep.subr.bf16.mxu0 0
    %1566 = vmatpush1.bf16.msra.mxu0 0
    %1567 = vmatprep.subr.bf16.mxu0 0
    %1568 = vmatpush1.bf16.msra.mxu0 0
    %1569 = vmatprep.subr.bf16.mxu0 0
    %1570 = vmatpush1.bf16.msra.mxu0 0
    %1571 = vmatprep.mubr.bf16.mxu0 0
    %1572 = vmatmul.mubr.bf16.gmra.mrb[0].mxu0 %v1484
    %v1573 = vpop.f32.mrb[0].mxu0
    %v1574 = vadd.f32 0.0, %v1573
    %v1575 = vpop.f32.mrb[0].mxu0
    %v1576 = vadd.f32 0.0, %v1575
    %v1577 = vpop.f32.mrb[0].mxu0
    %v1578 = vpop.f32.mrb[0].mxu0
    %1579 = vdwg.mxu0
    %v1584 = vrot.slane %v1375, 4
    %v1585 = vrot.slane %v1377, 4
    %v1586 = vrot.slane %v1416, 4
    %v1587 = vrot.slane %v1418, 4
    %v1592 = vadd.f32 %v1375, %v1584
    %v1593 = vadd.f32 %v1377, %v1585
    %v1594 = vadd.f32 %v1416, %v1586
    %v1595 = vadd.f32 %v1418, %v1587
    %v1596 = vadd.f32 %v1592, %v1533
    %v1597 = vadd.f32 %v1593, %v1535
    %v1598 = vadd.f32 %v1594, %v1574
    %v1599 = vadd.f32 %v1595, %v1576
    %v1600 = vsel %vm92, %v1596, 0.0
    %v1601 = vsel %vm92, %v1597, 0.0
    %v1602 = vadd.f32 %v1600, %v1601
    %v1603 = vsel %vm92, %v1598, 0.0
    %v1604 = vadd.f32 %v1602, %v1603
    %v1605 = vsel %vm92, %v1599, 0.0
    %v1606 = vadd.f32 %v1604, %v1605
    %1607 = vadd.xlane.f32.xlu0 %v1606
    %v1608 = vpop.xlane.xlu0 %1607
    %v1609 = vmul.f32 %v1608, 0.001953125
    %v1610 = vsub.f32 %v1596, %v1609
    %v1611 = vsub.f32 %v1597, %v1609
    %v1612 = vsub.f32 %v1598, %v1609
    %v1613 = vsub.f32 %v1599, %v1609
    %v1614 = vmul.f32 %v1610, %v1610
    %v1615 = vmul.f32 %v1611, %v1611
    %v1616 = vmul.f32 %v1612, %v1612
    %v1617 = vmul.f32 %v1613, %v1613
    %v1618 = vsel %vm92, %v1614, 0.0
    %v1619 = vsel %vm92, %v1615, 0.0
    %v1620 = vadd.f32 %v1618, %v1619
    %v1621 = vsel %vm92, %v1616, 0.0
    %v1622 = vadd.f32 %v1620, %v1621
    %v1623 = vsel %vm92, %v1617, 0.0
    %v1624 = vadd.f32 %v1622, %v1623
    %1625 = vadd.xlane.f32.xlu0 %v1624
    %v1626 = vpop.xlane.xlu0 %1625
    %v1627 = vmul.f32 %v1626, 0.001953125
    %v1628 = vadd.f32 %v1627, 1e-05
    %v1629 = vrsqrt.pop %v1628
    %v1630 = vld [vmem:[%s4] sm:$0xf]
    %v1631 = vmul.f32 %v1629, %v1630
    %1633 = vset.pattern.permute.xlu0 0
    %1634 = vperm.xlu0 %1633, %v1631
    %v1635 = vpop.permute.xlu0 %1634
    %v1637 = vmul.f32 %v1610, %v1635
    %v1638 = vmul.f32 %v1611, %v1635
    %v1639 = vmul.f32 %v1612, %v1635
    %v1640 = vmul.f32 %v1613, %v1635
    %v1641 = vld [vmem:[%s5] sm:$0xf]
    %1643 = vset.pattern.permute.xlu0 0
    %1644 = vperm.xlu0 %1643, %v1641
    %v1645 = vpop.permute.xlu0 %1644
    %v1647 = vadd.f32 %v1637, %v1645
    %v1648 = vadd.f32 %v1638, %v1645
    %v1649 = vadd.f32 %v1639, %v1645
    %v1650 = vadd.f32 %v1640, %v1645
    %v1651 = vmax.f32 %v1647, 0.0
    %v1652 = vmax.f32 %v1648, 0.0
    %v1653 = vmax.f32 %v1649, 0.0
    %v1654 = vmax.f32 %v1650, 0.0
    %1655 = vst [vmem:[#allocation2] sm:$0xf] 0.0
    %1656 = vst [vmem:[#allocation2 + $0x14] sm:$0xf] 0.0
    %v1661 = vcombine.low %v1651, %v1652
    %v1662 = vcombine.low %v1653, %v1654
    %1665 = vst [vmem:[#allocation2 + $0x4] sm:$0xff] %v1661
    %1666 = vst [vmem:[#allocation2 + $0xc] sm:$0xff] %v1662
    %v1667 = vld [vmem:[#allocation2] sm:$0xff]
    %v1668 = vld [vmem:[#allocation2 + $0x8] sm:$0xff]
    %v1669 = vld [vmem:[#allocation2 + $0x10] sm:$0xf]
    %v1670 = vld [vmem:[#allocation8] ss:$8 sm:$0xf]
    %v1672 = vlaneseq
    %v1673 = vshrl.u32 %v1672, 7
    %v1674 = vsub.s32 0, %v1673
    %v1675 = vrot.slane %v1670, %v1674
    %v1676 = vlaneseq
    %v1677 = vshrl.u32 %v1676, 7
    %v1678 = vsub.s32 1, %v1677
    %v1679 = vrot.slane %v1670, %v1678
    %v1680 = vlaneseq
    %v1681 = vshrl.u32 %v1680, 7
    %v1682 = vsub.s32 2, %v1681
    %v1683 = vrot.slane %v1670, %v1682
    %v1684 = vlaneseq
    %v1685 = vshrl.u32 %v1684, 7
    %v1686 = vsub.s32 3, %v1685
    %v1687 = vrot.slane %v1670, %v1686
    %v1688 = vcombine.low %v1675, %v1679
    %v1689 = vcombine.low %v1683, %v1687
    %1690 = vrot.lane.b32.xlu0 %v1688, 111
    %v1691 = vpop.permute.xlu0 %1690
    %1692 = vrot.lane.b32.xlu0 %v1689, 111
    %v1693 = vpop.permute.xlu0 %1692
    %v1694 = vrot.slane %v1691, 4
    %v1695 = vrot.slane %v1693, 4
    %v1696 = vsel %vm90, %v1694, %v1691
    %v1697 = vsel %vm92, %v1694, %v1695
    %v1698 = vsel %vm90, %v1697, %v1693
    %v1702 = vmul.f32 %v1667, %v1696
    %v1703 = vmul.f32 %v1668, %v1698
    %v1704 = vmul.f32 %v1669, %v1695
    %v1707 = vcombine.high %v1702, %v1702
    %v1708 = vcombine.high %v1703, %v1703
    %v1711 = vpack.c.bf16 %v1702, %v1702
    %v1712 = vpack.c.bf16 %v1707, %v1707
    %v1713 = vpack.c.bf16 %v1703, %v1703
    %v1714 = vpack.c.bf16 %v1708, %v1708
    %v1715 = vpack.c.bf16 %v1704, %v1704
    %v1716 = vunpack.c.l.bf16 %v1711
    %v1717 = vunpack.c.l.bf16 %v1712
    %v1718 = vunpack.c.l.bf16 %v1713
    %v1719 = vunpack.c.l.bf16 %v1714
    %v1720 = vunpack.c.l.bf16 %v1715
    %v1725 = vcombine.low %v1716, %v1717
    %v1726 = vcombine.low %v1718, %v1719
    %v1729 = vsub.f32 %v1702, %v1725
    %v1730 = vsub.f32 %v1703, %v1726
    %v1731 = vsub.f32 %v1704, %v1720
    %v1734 = vcombine.high %v1729, %v1729
    %v1735 = vcombine.high %v1730, %v1730
    %v1738 = vpack.c.bf16 %v1729, %v1729
    %v1739 = vpack.c.bf16 %v1734, %v1734
    %v1740 = vpack.c.bf16 %v1730, %v1730
    %v1741 = vpack.c.bf16 %v1735, %v1735
    %v1742 = vpack.c.bf16 %v1731, %v1731
    %v1748 = vunpack.c.l.b16 %v1711
    %v1749 = vunpack.c.l.b16 %v1712
    %v1750 = vunpack.c.l.b16 %v1713
    %v1751 = vunpack.c.l.b16 %v1714
    %v1752 = vunpack.c.l.b16 %v1715
    %v1753 = vpack.c.b16 %v1749, %v1748
    %v1754 = vpack.c.b16 %v1751, %v1750
    %v1755 = vpack.c.b16 %v1752, %v1752
    %1756 = vrot.lane.b32.xlu0 %v1753, 17
    %v1757 = vpop.permute.xlu0 %1756
    %1758 = vrot.lane.b32.xlu0 %v1754, 17
    %v1759 = vpop.permute.xlu0 %1758
    %1760 = vrot.lane.b32.xlu0 %v1755, 17
    %v1761 = vpop.permute.xlu0 %1760
    %v1762 = vrot.slane %v1757, 4
    %v1763 = vrot.slane %v1759, 4
    %v1764 = vrot.slane %v1761, 4
    %v1765 = vsel %vm161, %v1762, %v1763
    %v1766 = vsel %vm163, %v1757, %v1765
    %v1767 = vsel %vm161, %v1763, %v1764
    %v1768 = vsel %vm163, %v1759, %v1767
    %1771 = vst [vmem:[#allocation3] sm:$0x33] %v1766
    %1772 = vst [vmem:[#allocation3 + $0x8] sm:$0x33] %v1768
    %v1778 = vunpack.c.l.b16 %v1738
    %v1779 = vunpack.c.l.b16 %v1739
    %v1780 = vunpack.c.l.b16 %v1740
    %v1781 = vunpack.c.l.b16 %v1741
    %v1782 = vunpack.c.l.b16 %v1742
    %v1783 = vpack.c.b16 %v1779, %v1778
    %v1784 = vpack.c.b16 %v1781, %v1780
    %v1785 = vpack.c.b16 %v1782, %v1782
    %1786 = vrot.lane.b32.xlu0 %v1783, 17
    %v1787 = vpop.permute.xlu0 %1786
    %1788 = vrot.lane.b32.xlu0 %v1784, 17
    %v1789 = vpop.permute.xlu0 %1788
    %1790 = vrot.lane.b32.xlu0 %v1785, 17
    %v1791 = vpop.permute.xlu0 %1790
    %v1792 = vrot.slane %v1787, 4
    %v1793 = vrot.slane %v1789, 4
    %v1794 = vrot.slane %v1791, 4
    %v1795 = vsel %vm161, %v1792, %v1793
    %v1796 = vsel %vm163, %v1787, %v1795
    %v1797 = vsel %vm161, %v1793, %v1794
    %v1798 = vsel %vm163, %v1789, %v1797
    %1801 = vst [vmem:[#allocation4] sm:$0x33] %v1796
    %1802 = vst [vmem:[#allocation4 + $0x8] sm:$0x33] %v1798
    %v1803 = vld [vmem:[#allocation2] sm:$0xff]
    %v1804 = vld [vmem:[#allocation2 + $0x8] sm:$0xff]
    %v1805 = vld [vmem:[#allocation2 + $0x10] sm:$0xf]
    %v1806 = vld [vmem:[%s204] ss:$8 sm:$0xf]
    %v1808 = vlaneseq
    %v1809 = vshrl.u32 %v1808, 7
    %v1810 = vsub.s32 0, %v1809
    %v1811 = vrot.slane %v1806, %v1810
    %v1812 = vlaneseq
    %v1813 = vshrl.u32 %v1812, 7
    %v1814 = vsub.s32 1, %v1813
    %v1815 = vrot.slane %v1806, %v1814
    %v1816 = vlaneseq
    %v1817 = vshrl.u32 %v1816, 7
    %v1818 = vsub.s32 2, %v1817
    %v1819 = vrot.slane %v1806, %v1818
    %v1820 = vlaneseq
    %v1821 = vshrl.u32 %v1820, 7
    %v1822 = vsub.s32 3, %v1821
    %v1823 = vrot.slane %v1806, %v1822
    %v1824 = vcombine.low %v1811, %v1815
    %v1825 = vcombine.low %v1819, %v1823
    %1826 = vrot.lane.b32.xlu0 %v1824, 112
    %v1827 = vpop.permute.xlu0 %1826
    %1828 = vrot.lane.b32.xlu0 %v1825, 112
    %v1829 = vpop.permute.xlu0 %1828
    %v1830 = vrot.slane %v1827, 4
    %v1831 = vrot.slane %v1829, 4
    %v1832 = vsel %vm231, %v1830, %v1827
    %v1833 = vsel %vm92, %v1830, %v1831
    %v1834 = vsel %vm231, %v1833, %v1829
    %v1838 = vmul.f32 %v1803, %v1832
    %v1839 = vmul.f32 %v1804, %v1834
    %v1840 = vmul.f32 %v1805, %v1831
    %v1843 = vcombine.high %v1838, %v1838
    %v1844 = vcombine.high %v1839, %v1839
    %v1847 = vpack.c.bf16 %v1838, %v1838
    %v1848 = vpack.c.bf16 %v1843, %v1843
    %v1849 = vpack.c.bf16 %v1839, %v1839
    %v1850 = vpack.c.bf16 %v1844, %v1844
    %v1851 = vpack.c.bf16 %v1840, %v1840
    %v1852 = vunpack.c.l.bf16 %v1847
    %v1853 = vunpack.c.l.bf16 %v1848
    %v1854 = vunpack.c.l.bf16 %v1849
    %v1855 = vunpack.c.l.bf16 %v1850
    %v1856 = vunpack.c.l.bf16 %v1851
    %v1861 = vcombine.low %v1852, %v1853
    %v1862 = vcombine.low %v1854, %v1855
    %v1865 = vsub.f32 %v1838, %v1861
    %v1866 = vsub.f32 %v1839, %v1862
    %v1867 = vsub.f32 %v1840, %v1856
    %v1870 = vcombine.high %v1865, %v1865
    %v1871 = vcombine.high %v1866, %v1866
    %v1874 = vpack.c.bf16 %v1865, %v1865
    %v1875 = vpack.c.bf16 %v1870, %v1870
    %v1876 = vpack.c.bf16 %v1866, %v1866
    %v1877 = vpack.c.bf16 %v1871, %v1871
    %v1878 = vpack.c.bf16 %v1867, %v1867
    %v1884 = vunpack.c.l.b16 %v1847
    %v1885 = vunpack.c.l.b16 %v1848
    %v1886 = vunpack.c.l.b16 %v1849
    %v1887 = vunpack.c.l.b16 %v1850
    %v1888 = vunpack.c.l.b16 %v1851
    %v1889 = vpack.c.b16 %v1885, %v1884
    %v1890 = vpack.c.b16 %v1887, %v1886
    %v1891 = vpack.c.b16 %v1888, %v1888
    %v1892 = vrot.slane %v1889, 6
    %v1893 = vrot.slane %v1890, 6
    %v1894 = vrot.slane %v1891, 6
    %1895 = vrot.lane.b32.xlu0 %v1892, 16
    %v1896 = vpop.permute.xlu0 %1895
    %1897 = vrot.lane.b32.xlu0 %v1893, 16
    %v1898 = vpop.permute.xlu0 %1897
    %1899 = vrot.lane.b32.xlu0 %v1894, 16
    %v1900 = vpop.permute.xlu0 %1899
    %v1901 = vrot.slane %v1896, 4
    %v1902 = vrot.slane %v1898, 4
    %v1903 = vrot.slane %v1900, 4
    %v1904 = vsel %vm161, %v1901, %v1902
    %v1905 = vsel %vm305, %v1896, %v1904
    %v1906 = vsel %vm161, %v1902, %v1903
    %v1907 = vsel %vm305, %v1898, %v1906
    %1910 = vst [vmem:[#allocation3] sm:$0xcc] %v1905
    %1911 = vst [vmem:[#allocation3 + $0x8] sm:$0xcc] %v1907
    %v1917 = vunpack.c.l.b16 %v1874
    %v1918 = vunpack.c.l.b16 %v1875
    %v1919 = vunpack.c.l.b16 %v1876
    %v1920 = vunpack.c.l.b16 %v1877
    %v1921 = vunpack.c.l.b16 %v1878
    %v1922 = vpack.c.b16 %v1918, %v1917
    %v1923 = vpack.c.b16 %v1920, %v1919
    %v1924 = vpack.c.b16 %v1921, %v1921
    %v1925 = vrot.slane %v1922, 6
    %v1926 = vrot.slane %v1923, 6
    %v1927 = vrot.slane %v1924, 6
    %1928 = vrot.lane.b32.xlu0 %v1925, 16
    %v1929 = vpop.permute.xlu0 %1928
    %1930 = vrot.lane.b32.xlu0 %v1926, 16
    %v1931 = vpop.permute.xlu0 %1930
    %1932 = vrot.lane.b32.xlu0 %v1927, 16
    %v1933 = vpop.permute.xlu0 %1932
    %v1934 = vrot.slane %v1929, 4
    %v1935 = vrot.slane %v1931, 4
    %v1936 = vrot.slane %v1933, 4
    %v1937 = vsel %vm161, %v1934, %v1935
    %v1938 = vsel %vm305, %v1929, %v1937
    %v1939 = vsel %vm161, %v1935, %v1936
    %v1940 = vsel %vm305, %v1931, %v1939
    %1943 = vst [vmem:[#allocation4] sm:$0xcc] %v1938
    %1944 = vst [vmem:[#allocation4 + $0x8] sm:$0xcc] %v1940
    %v1945 = vld [vmem:[#allocation2] sm:$0xff]
    %v1946 = vld [vmem:[#allocation2 + $0x8] sm:$0xff]
    %v1947 = vld [vmem:[#allocation2 + $0x10] sm:$0xf]
    %v1948 = vld [vmem:[%s349] ss:$8 sm:$0xf]
    %v1950 = vlaneseq
    %v1951 = vshrl.u32 %v1950, 7
    %v1952 = vsub.s32 0, %v1951
    %v1953 = vrot.slane %v1948, %v1952
    %v1954 = vlaneseq
    %v1955 = vshrl.u32 %v1954, 7
    %v1956 = vsub.s32 1, %v1955
    %v1957 = vrot.slane %v1948, %v1956
    %v1958 = vlaneseq
    %v1959 = vshrl.u32 %v1958, 7
    %v1960 = vsub.s32 2, %v1959
    %v1961 = vrot.slane %v1948, %v1960
    %v1962 = vlaneseq
    %v1963 = vshrl.u32 %v1962, 7
    %v1964 = vsub.s32 3, %v1963
    %v1965 = vrot.slane %v1948, %v1964
    %v1966 = vcombine.low %v1953, %v1957
    %v1967 = vcombine.low %v1961, %v1965
    %1968 = vrot.lane.b32.xlu0 %v1966, 113
    %v1969 = vpop.permute.xlu0 %1968
    %1970 = vrot.lane.b32.xlu0 %v1967, 113
    %v1971 = vpop.permute.xlu0 %1970
    %v1972 = vrot.slane %v1969, 4
    %v1973 = vrot.slane %v1971, 4
    %v1974 = vsel %vm376, %v1972, %v1969
    %v1975 = vsel %vm92, %v1972, %v1973
    %v1976 = vsel %vm376, %v1975, %v1971
    %v1980 = vmul.f32 %v1945, %v1974
    %v1981 = vmul.f32 %v1946, %v1976
    %v1982 = vmul.f32 %v1947, %v1973
    %v1985 = vcombine.high %v1980, %v1980
    %v1986 = vcombine.high %v1981, %v1981
    %v1989 = vpack.c.bf16 %v1980, %v1980
    %v1990 = vpack.c.bf16 %v1985, %v1985
    %v1991 = vpack.c.bf16 %v1981, %v1981
    %v1992 = vpack.c.bf16 %v1986, %v1986
    %v1993 = vpack.c.bf16 %v1982, %v1982
    %v1994 = vunpack.c.l.bf16 %v1989
    %v1995 = vunpack.c.l.bf16 %v1990
    %v1996 = vunpack.c.l.bf16 %v1991
    %v1997 = vunpack.c.l.bf16 %v1992
    %v1998 = vunpack.c.l.bf16 %v1993
    %v2003 = vcombine.low %v1994, %v1995
    %v2004 = vcombine.low %v1996, %v1997
    %v2007 = vsub.f32 %v1980, %v2003
    %v2008 = vsub.f32 %v1981, %v2004
    %v2009 = vsub.f32 %v1982, %v1998
    %v2012 = vcombine.high %v2007, %v2007
    %v2013 = vcombine.high %v2008, %v2008
    %v2016 = vpack.c.bf16 %v2007, %v2007
    %v2017 = vpack.c.bf16 %v2012, %v2012
    %v2018 = vpack.c.bf16 %v2008, %v2008
    %v2019 = vpack.c.bf16 %v2013, %v2013
    %v2020 = vpack.c.bf16 %v2009, %v2009
    %v2026 = vunpack.c.l.b16 %v1989
    %v2027 = vunpack.c.l.b16 %v1990
    %v2028 = vunpack.c.l.b16 %v1991
    %v2029 = vunpack.c.l.b16 %v1992
    %v2030 = vunpack.c.l.b16 %v1993
    %v2031 = vpack.c.b16 %v2027, %v2026
    %v2032 = vpack.c.b16 %v2029, %v2028
    %v2033 = vpack.c.b16 %v2030, %v2030
    %2034 = vrot.lane.b32.xlu0 %v2031, 15
    %v2035 = vpop.permute.xlu0 %2034
    %2036 = vrot.lane.b32.xlu0 %v2032, 15
    %v2037 = vpop.permute.xlu0 %2036
    %2038 = vrot.lane.b32.xlu0 %v2033, 15
    %v2039 = vpop.permute.xlu0 %2038
    %v2040 = vrot.slane %v2035, 4
    %v2041 = vrot.slane %v2037, 4
    %v2042 = vrot.slane %v2039, 4
    %v2043 = vsel %vm161, %v2040, %v2041
    %v2044 = vsel %vm447, %v2035, %v2043
    %v2045 = vsel %vm161, %v2041, %v2042
    %v2046 = vsel %vm447, %v2037, %v2045
    %2049 = vst [vmem:[#allocation3 + $0x10] sm:$0x33] %v2044
    %2050 = vst [vmem:[#allocation3 + $0x18] sm:$0x33] %v2046
    %v2056 = vunpack.c.l.b16 %v2016
    %v2057 = vunpack.c.l.b16 %v2017
    %v2058 = vunpack.c.l.b16 %v2018
    %v2059 = vunpack.c.l.b16 %v2019
    %v2060 = vunpack.c.l.b16 %v2020
    %v2061 = vpack.c.b16 %v2057, %v2056
    %v2062 = vpack.c.b16 %v2059, %v2058
    %v2063 = vpack.c.b16 %v2060, %v2060
    %2064 = vrot.lane.b32.xlu0 %v2061, 15
    %v2065 = vpop.permute.xlu0 %2064
    %2066 = vrot.lane.b32.xlu0 %v2062, 15
    %v2067 = vpop.permute.xlu0 %2066
    %2068 = vrot.lane.b32.xlu0 %v2063, 15
    %v2069 = vpop.permute.xlu0 %2068
    %v2070 = vrot.slane %v2065, 4
    %v2071 = vrot.slane %v2067, 4
    %v2072 = vrot.slane %v2069, 4
    %v2073 = vsel %vm161, %v2070, %v2071
    %v2074 = vsel %vm447, %v2065, %v2073
    %v2075 = vsel %vm161, %v2071, %v2072
    %v2076 = vsel %vm447, %v2067, %v2075
    %2079 = vst [vmem:[#allocation4 + $0x10] sm:$0x33] %v2074
    %2080 = vst [vmem:[#allocation4 + $0x18] sm:$0x33] %v2076
    %v2081 = vld [vmem:[#allocation2] sm:$0xff]
    %v2082 = vld [vmem:[#allocation2 + $0x8] sm:$0xff]
    %v2083 = vld [vmem:[#allocation2 + $0x10] sm:$0xf]
    %v2084 = vld [vmem:[%s488] ss:$8 sm:$0xf]
    %v2086 = vlaneseq
    %v2087 = vshrl.u32 %v2086, 7
    %v2088 = vsub.s32 0, %v2087
    %v2089 = vrot.slane %v2084, %v2088
    %v2090 = vlaneseq
    %v2091 = vshrl.u32 %v2090, 7
    %v2092 = vsub.s32 1, %v2091
    %v2093 = vrot.slane %v2084, %v2092
    %v2094 = vlaneseq
    %v2095 = vshrl.u32 %v2094, 7
    %v2096 = vsub.s32 2, %v2095
    %v2097 = vrot.slane %v2084, %v2096
    %v2098 = vlaneseq
    %v2099 = vshrl.u32 %v2098, 7
    %v2100 = vsub.s32 3, %v2099
    %v2101 = vrot.slane %v2084, %v2100
    %v2102 = vcombine.low %v2089, %v2093
    %v2103 = vcombine.low %v2097, %v2101
    %2104 = vrot.lane.b32.xlu0 %v2102, 127
    %v2105 = vpop.permute.xlu0 %2104
    %2106 = vrot.lane.b32.xlu0 %v2103, 127
    %v2107 = vpop.permute.xlu0 %2106
    %v2108 = vrot.slane %v2105, 4
    %v2109 = vrot.slane %v2107, 4
    %v2110 = vsel %vm515, %v2108, %v2105
    %v2111 = vsel %vm92, %v2108, %v2109
    %v2112 = vsel %vm515, %v2111, %v2107
    %v2116 = vmul.f32 %v2081, %v2110
    %v2117 = vmul.f32 %v2082, %v2112
    %v2118 = vmul.f32 %v2083, %v2109
    %v2121 = vcombine.high %v2116, %v2116
    %v2122 = vcombine.high %v2117, %v2117
    %v2125 = vpack.c.bf16 %v2116, %v2116
    %v2126 = vpack.c.bf16 %v2121, %v2121
    %v2127 = vpack.c.bf16 %v2117, %v2117
    %v2128 = vpack.c.bf16 %v2122, %v2122
    %v2129 = vpack.c.bf16 %v2118, %v2118
    %v2130 = vunpack.c.l.bf16 %v2125
    %v2131 = vunpack.c.l.bf16 %v2126
    %v2132 = vunpack.c.l.bf16 %v2127
    %v2133 = vunpack.c.l.bf16 %v2128
    %v2134 = vunpack.c.l.bf16 %v2129
    %v2139 = vcombine.low %v2130, %v2131
    %v2140 = vcombine.low %v2132, %v2133
    %v2143 = vsub.f32 %v2116, %v2139
    %v2144 = vsub.f32 %v2117, %v2140
    %v2145 = vsub.f32 %v2118, %v2134
    %v2148 = vcombine.high %v2143, %v2143
    %v2149 = vcombine.high %v2144, %v2144
    %v2152 = vpack.c.bf16 %v2143, %v2143
    %v2153 = vpack.c.bf16 %v2148, %v2148
    %v2154 = vpack.c.bf16 %v2144, %v2144
    %v2155 = vpack.c.bf16 %v2149, %v2149
    %v2156 = vpack.c.bf16 %v2145, %v2145
    %v2162 = vunpack.c.l.b16 %v2125
    %v2163 = vunpack.c.l.b16 %v2126
    %v2164 = vunpack.c.l.b16 %v2127
    %v2165 = vunpack.c.l.b16 %v2128
    %v2166 = vunpack.c.l.b16 %v2129
    %v2167 = vpack.c.b16 %v2163, %v2162
    %v2168 = vpack.c.b16 %v2165, %v2164
    %v2169 = vpack.c.b16 %v2166, %v2166
    %v2170 = vrot.slane %v2167, 6
    %v2171 = vrot.slane %v2168, 6
    %v2172 = vrot.slane %v2169, 6
    %2173 = vrot.lane.b32.xlu0 %v2170, 1
    %v2174 = vpop.permute.xlu0 %2173
    %2175 = vrot.lane.b32.xlu0 %v2171, 1
    %v2176 = vpop.permute.xlu0 %2175
    %2177 = vrot.lane.b32.xlu0 %v2172, 1
    %v2178 = vpop.permute.xlu0 %2177
    %v2179 = vrot.slane %v2174, 4
    %v2180 = vrot.slane %v2176, 4
    %v2181 = vrot.slane %v2178, 4
    %v2182 = vsel %vm161, %v2179, %v2180
    %v2183 = vsel %vm589, %v2174, %v2182
    %v2184 = vsel %vm161, %v2180, %v2181
    %v2185 = vsel %vm589, %v2176, %v2184
    %2188 = vst [vmem:[#allocation3 + $0x10] sm:$0xcc] %v2183
    %2189 = vst [vmem:[#allocation3 + $0x18] sm:$0xcc] %v2185
    %v2195 = vunpack.c.l.b16 %v2152
    %v2196 = vunpack.c.l.b16 %v2153
    %v2197 = vunpack.c.l.b16 %v2154
    %v2198 = vunpack.c.l.b16 %v2155
    %v2199 = vunpack.c.l.b16 %v2156
    %v2200 = vpack.c.b16 %v2196, %v2195
    %v2201 = vpack.c.b16 %v2198, %v2197
    %v2202 = vpack.c.b16 %v2199, %v2199
    %v2203 = vrot.slane %v2200, 6
    %v2204 = vrot.slane %v2201, 6
    %v2205 = vrot.slane %v2202, 6
    %2206 = vrot.lane.b32.xlu0 %v2203, 1
    %v2207 = vpop.permute.xlu0 %2206
    %2208 = vrot.lane.b32.xlu0 %v2204, 1
    %v2209 = vpop.permute.xlu0 %2208
    %2210 = vrot.lane.b32.xlu0 %v2205, 1
    %v2211 = vpop.permute.xlu0 %2210
    %v2212 = vrot.slane %v2207, 4
    %v2213 = vrot.slane %v2209, 4
    %v2214 = vrot.slane %v2211, 4
    %v2215 = vsel %vm161, %v2212, %v2213
    %v2216 = vsel %vm589, %v2207, %v2215
    %v2217 = vsel %vm161, %v2213, %v2214
    %v2218 = vsel %vm589, %v2209, %v2217
    %2221 = vst [vmem:[#allocation4 + $0x10] sm:$0xcc] %v2216
    %2222 = vst [vmem:[#allocation4 + $0x18] sm:$0xcc] %v2218
    %v2223 = vld [vmem:[#allocation2 + $0x4] sm:$0xff]
    %v2224 = vld [vmem:[#allocation2 + $0xc] sm:$0xff]
    %v2227 = vcombine.high %v2223, %v2223
    %v2228 = vcombine.high %v2224, %v2224
    %v2231 = vpack.c.bf16 %v2223, %v2223
    %v2232 = vpack.c.bf16 %v2227, %v2227
    %v2233 = vpack.c.bf16 %v2224, %v2224
    %v2234 = vpack.c.bf16 %v2228, %v2228
    %v2235 = vunpack.c.l.bf16 %v2231
    %v2236 = vunpack.c.l.bf16 %v2232
    %v2237 = vunpack.c.l.bf16 %v2233
    %v2238 = vunpack.c.l.bf16 %v2234
    %v2243 = vcombine.low %v2235, %v2236
    %v2244 = vcombine.low %v2237, %v2238
    %v2247 = vsub.f32 %v2223, %v2243
    %v2248 = vsub.f32 %v2224, %v2244
    %v2251 = vcombine.high %v2247, %v2247
    %v2252 = vcombine.high %v2248, %v2248
    %v2255 = vpack.c.bf16 %v2247, %v2247
    %v2256 = vpack.c.bf16 %v2251, %v2251
    %v2257 = vpack.c.bf16 %v2248, %v2248
    %v2258 = vpack.c.bf16 %v2252, %v2252
    %v2263 = vunpack.c.l.b16 %v2231
    %v2264 = vunpack.c.l.b16 %v2232
    %v2265 = vunpack.c.l.b16 %v2233
    %v2266 = vunpack.c.l.b16 %v2234
    %v2267 = vpack.c.b16 %v2264, %v2263
    %v2268 = vpack.c.b16 %v2266, %v2265
    %2271 = vst [vmem:[#allocation3 + $0x20] sm:$0x33] %v2267
    %2272 = vst [vmem:[#allocation3 + $0x28] sm:$0x33] %v2268
    %v2277 = vunpack.c.l.b16 %v2255
    %v2278 = vunpack.c.l.b16 %v2256
    %v2279 = vunpack.c.l.b16 %v2257
    %v2280 = vunpack.c.l.b16 %v2258
    %v2281 = vpack.c.b16 %v2278, %v2277
    %v2282 = vpack.c.b16 %v2280, %v2279
    %2285 = vst [vmem:[#allocation4 + $0x20] sm:$0x33] %v2281
    %2286 = vst [vmem:[#allocation4 + $0x28] sm:$0x33] %v2282
    %v2287 = vld [vmem:[#allocation2 + $0x4] sm:$0xff]
    %v2288 = vld [vmem:[#allocation2 + $0xc] sm:$0xff]
    %v2289 = vld [vmem:[#allocation2 + $0x14] sm:$0xf]
    %v2290 = vld [vmem:[%s697] ss:$8 sm:$0xf]
    %v2292 = vlaneseq
    %v2293 = vshrl.u32 %v2292, 7
    %v2294 = vsub.s32 0, %v2293
    %v2295 = vrot.slane %v2290, %v2294
    %v2296 = vlaneseq
    %v2297 = vshrl.u32 %v2296, 7
    %v2298 = vsub.s32 1, %v2297
    %v2299 = vrot.slane %v2290, %v2298
    %v2300 = vlaneseq
    %v2301 = vshrl.u32 %v2300, 7
    %v2302 = vsub.s32 2, %v2301
    %v2303 = vrot.slane %v2290, %v2302
    %v2304 = vlaneseq
    %v2305 = vshrl.u32 %v2304, 7
    %v2306 = vsub.s32 3, %v2305
    %v2307 = vrot.slane %v2290, %v2306
    %v2308 = vcombine.low %v2295, %v2299
    %v2309 = vcombine.low %v2303, %v2307
    %2310 = vrot.lane.b32.xlu0 %v2308, 1
    %v2311 = vpop.permute.xlu0 %2310
    %2312 = vrot.lane.b32.xlu0 %v2309, 1
    %v2313 = vpop.permute.xlu0 %2312
    %v2314 = vrot.slane %v2311, 4
    %v2315 = vrot.slane %v2313, 4
    %v2316 = vsel %vm724, %v2314, %v2311
    %v2317 = vsel %vm92, %v2314, %v2315
    %v2318 = vsel %vm724, %v2317, %v2313
    %v2322 = vmul.f32 %v2287, %v2316
    %v2323 = vmul.f32 %v2288, %v2318
    %v2324 = vmul.f32 %v2289, %v2315
    %v2327 = vcombine.high %v2322, %v2322
    %v2328 = vcombine.high %v2323, %v2323
    %v2331 = vpack.c.bf16 %v2322, %v2322
    %v2332 = vpack.c.bf16 %v2327, %v2327
    %v2333 = vpack.c.bf16 %v2323, %v2323
    %v2334 = vpack.c.bf16 %v2328, %v2328
    %v2335 = vpack.c.bf16 %v2324, %v2324
    %v2336 = vunpack.c.l.bf16 %v2331
    %v2337 = vunpack.c.l.bf16 %v2332
    %v2338 = vunpack.c.l.bf16 %v2333
    %v2339 = vunpack.c.l.bf16 %v2334
    %v2340 = vunpack.c.l.bf16 %v2335
    %v2345 = vcombine.low %v2336, %v2337
    %v2346 = vcombine.low %v2338, %v2339
    %v2349 = vsub.f32 %v2322, %v2345
    %v2350 = vsub.f32 %v2323, %v2346
    %v2351 = vsub.f32 %v2324, %v2340
    %v2354 = vcombine.high %v2349, %v2349
    %v2355 = vcombine.high %v2350, %v2350
    %v2358 = vpack.c.bf16 %v2349, %v2349
    %v2359 = vpack.c.bf16 %v2354, %v2354
    %v2360 = vpack.c.bf16 %v2350, %v2350
    %v2361 = vpack.c.bf16 %v2355, %v2355
    %v2362 = vpack.c.bf16 %v2351, %v2351
    %v2368 = vunpack.c.l.b16 %v2331
    %v2369 = vunpack.c.l.b16 %v2332
    %v2370 = vunpack.c.l.b16 %v2333
    %v2371 = vunpack.c.l.b16 %v2334
    %v2372 = vunpack.c.l.b16 %v2335
    %v2373 = vpack.c.b16 %v2369, %v2368
    %v2374 = vpack.c.b16 %v2371, %v2370
    %v2375 = vpack.c.b16 %v2372, %v2372
    %v2376 = vrot.slane %v2373, 6
    %v2377 = vrot.slane %v2374, 6
    %v2378 = vrot.slane %v2375, 6
    %2379 = vrot.lane.b32.xlu0 %v2376, 127
    %v2380 = vpop.permute.xlu0 %2379
    %2381 = vrot.lane.b32.xlu0 %v2377, 127
    %v2382 = vpop.permute.xlu0 %2381
    %2383 = vrot.lane.b32.xlu0 %v2378, 127
    %v2384 = vpop.permute.xlu0 %2383
    %v2385 = vrot.slane %v2380, 4
    %v2386 = vrot.slane %v2382, 4
    %v2387 = vrot.slane %v2384, 4
    %v2388 = vsel %vm161, %v2385, %v2386
    %v2389 = vsel %vm798, %v2380, %v2388
    %v2390 = vsel %vm161, %v2386, %v2387
    %v2391 = vsel %vm798, %v2382, %v2390
    %2394 = vst [vmem:[#allocation3 + $0x20] sm:$0xcc] %v2389
    %2395 = vst [vmem:[#allocation3 + $0x28] sm:$0xcc] %v2391
    %v2401 = vunpack.c.l.b16 %v2358
    %v2402 = vunpack.c.l.b16 %v2359
    %v2403 = vunpack.c.l.b16 %v2360
    %v2404 = vunpack.c.l.b16 %v2361
    %v2405 = vunpack.c.l.b16 %v2362
    %v2406 = vpack.c.b16 %v2402, %v2401
    %v2407 = vpack.c.b16 %v2404, %v2403
    %v2408 = vpack.c.b16 %v2405, %v2405
    %v2409 = vrot.slane %v2406, 6
    %v2410 = vrot.slane %v2407, 6
    %v2411 = vrot.slane %v2408, 6
    %2412 = vrot.lane.b32.xlu0 %v2409, 127
    %v2413 = vpop.permute.xlu0 %2412
    %2414 = vrot.lane.b32.xlu0 %v2410, 127
    %v2415 = vpop.permute.xlu0 %2414
    %2416 = vrot.lane.b32.xlu0 %v2411, 127
    %v2417 = vpop.permute.xlu0 %2416
    %v2418 = vrot.slane %v2413, 4
    %v2419 = vrot.slane %v2415, 4
    %v2420 = vrot.slane %v2417, 4
    %v2421 = vsel %vm161, %v2418, %v2419
    %v2422 = vsel %vm798, %v2413, %v2421
    %v2423 = vsel %vm161, %v2419, %v2420
    %v2424 = vsel %vm798, %v2415, %v2423
    %2427 = vst [vmem:[#allocation4 + $0x20] sm:$0xcc] %v2422
    %2428 = vst [vmem:[#allocation4 + $0x28] sm:$0xcc] %v2424
    %v2429 = vld [vmem:[#allocation2 + $0x4] sm:$0xff]
    %v2430 = vld [vmem:[#allocation2 + $0xc] sm:$0xff]
    %v2431 = vld [vmem:[#allocation2 + $0x14] sm:$0xf]
    %v2432 = vld [vmem:[%s842] ss:$8 sm:$0xf]
    %v2434 = vlaneseq
    %v2435 = vshrl.u32 %v2434, 7
    %v2436 = vsub.s32 0, %v2435
    %v2437 = vrot.slane %v2432, %v2436
    %v2438 = vlaneseq
    %v2439 = vshrl.u32 %v2438, 7
    %v2440 = vsub.s32 1, %v2439
    %v2441 = vrot.slane %v2432, %v2440
    %v2442 = vlaneseq
    %v2443 = vshrl.u32 %v2442, 7
    %v2444 = vsub.s32 2, %v2443
    %v2445 = vrot.slane %v2432, %v2444
    %v2446 = vlaneseq
    %v2447 = vshrl.u32 %v2446, 7
    %v2448 = vsub.s32 3, %v2447
    %v2449 = vrot.slane %v2432, %v2448
    %v2450 = vcombine.low %v2437, %v2441
    %v2451 = vcombine.low %v2445, %v2449
    %2452 = vrot.lane.b32.xlu0 %v2450, 15
    %v2453 = vpop.permute.xlu0 %2452
    %2454 = vrot.lane.b32.xlu0 %v2451, 15
    %v2455 = vpop.permute.xlu0 %2454
    %v2456 = vrot.slane %v2453, 4
    %v2457 = vrot.slane %v2455, 4
    %v2458 = vsel %vm869, %v2456, %v2453
    %v2459 = vsel %vm92, %v2456, %v2457
    %v2460 = vsel %vm869, %v2459, %v2455
    %v2464 = vmul.f32 %v2429, %v2458
    %v2465 = vmul.f32 %v2430, %v2460
    %v2466 = vmul.f32 %v2431, %v2457
    %v2469 = vcombine.high %v2464, %v2464
    %v2470 = vcombine.high %v2465, %v2465
    %v2473 = vpack.c.bf16 %v2464, %v2464
    %v2474 = vpack.c.bf16 %v2469, %v2469
    %v2475 = vpack.c.bf16 %v2465, %v2465
    %v2476 = vpack.c.bf16 %v2470, %v2470
    %v2477 = vpack.c.bf16 %v2466, %v2466
    %v2478 = vunpack.c.l.bf16 %v2473
    %v2479 = vunpack.c.l.bf16 %v2474
    %v2480 = vunpack.c.l.bf16 %v2475
    %v2481 = vunpack.c.l.bf16 %v2476
    %v2482 = vunpack.c.l.bf16 %v2477
    %v2487 = vcombine.low %v2478, %v2479
    %v2488 = vcombine.low %v2480, %v2481
    %v2491 = vsub.f32 %v2464, %v2487
    %v2492 = vsub.f32 %v2465, %v2488
    %v2493 = vsub.f32 %v2466, %v2482
    %v2496 = vcombine.high %v2491, %v2491
    %v2497 = vcombine.high %v2492, %v2492
    %v2500 = vpack.c.bf16 %v2491, %v2491
    %v2501 = vpack.c.bf16 %v2496, %v2496
    %v2502 = vpack.c.bf16 %v2492, %v2492
    %v2503 = vpack.c.bf16 %v2497, %v2497
    %v2504 = vpack.c.bf16 %v2493, %v2493
    %v2510 = vunpack.c.l.b16 %v2473
    %v2511 = vunpack.c.l.b16 %v2474
    %v2512 = vunpack.c.l.b16 %v2475
    %v2513 = vunpack.c.l.b16 %v2476
    %v2514 = vunpack.c.l.b16 %v2477
    %v2515 = vpack.c.b16 %v2511, %v2510
    %v2516 = vpack.c.b16 %v2513, %v2512
    %v2517 = vpack.c.b16 %v2514, %v2514
    %2518 = vrot.lane.b32.xlu0 %v2515, 113
    %v2519 = vpop.permute.xlu0 %2518
    %2520 = vrot.lane.b32.xlu0 %v2516, 113
    %v2521 = vpop.permute.xlu0 %2520
    %2522 = vrot.lane.b32.xlu0 %v2517, 113
    %v2523 = vpop.permute.xlu0 %2522
    %v2524 = vrot.slane %v2519, 4
    %v2525 = vrot.slane %v2521, 4
    %v2526 = vrot.slane %v2523, 4
    %v2527 = vsel %vm161, %v2524, %v2525
    %v2528 = vsel %vm940, %v2519, %v2527
    %v2529 = vsel %vm161, %v2525, %v2526
    %v2530 = vsel %vm940, %v2521, %v2529
    %2533 = vst [vmem:[#allocation3 + $0x30] sm:$0x33] %v2528
    %2534 = vst [vmem:[#allocation3 + $0x38] sm:$0x33] %v2530
    %v2540 = vunpack.c.l.b16 %v2500
    %v2541 = vunpack.c.l.b16 %v2501
    %v2542 = vunpack.c.l.b16 %v2502
    %v2543 = vunpack.c.l.b16 %v2503
    %v2544 = vunpack.c.l.b16 %v2504
    %v2545 = vpack.c.b16 %v2541, %v2540
    %v2546 = vpack.c.b16 %v2543, %v2542
    %v2547 = vpack.c.b16 %v2544, %v2544
    %2548 = vrot.lane.b32.xlu0 %v2545, 113
    %v2549 = vpop.permute.xlu0 %2548
    %2550 = vrot.lane.b32.xlu0 %v2546, 113
    %v2551 = vpop.permute.xlu0 %2550
    %2552 = vrot.lane.b32.xlu0 %v2547, 113
    %v2553 = vpop.permute.xlu0 %2552
    %v2554 = vrot.slane %v2549, 4
    %v2555 = vrot.slane %v2551, 4
    %v2556 = vrot.slane %v2553, 4
    %v2557 = vsel %vm161, %v2554, %v2555
    %v2558 = vsel %vm940, %v2549, %v2557
    %v2559 = vsel %vm161, %v2555, %v2556
    %v2560 = vsel %vm940, %v2551, %v2559
    %2563 = vst [vmem:[#allocation4 + $0x30] sm:$0x33] %v2558
    %2564 = vst [vmem:[#allocation4 + $0x38] sm:$0x33] %v2560
    %v2565 = vld [vmem:[#allocation2 + $0x4] sm:$0xff]
    %v2566 = vld [vmem:[#allocation2 + $0xc] sm:$0xff]
    %v2567 = vld [vmem:[#allocation2 + $0x14] sm:$0xf]
    %v2568 = vld [vmem:[%s981] ss:$8 sm:$0xf]
    %v2570 = vlaneseq
    %v2571 = vshrl.u32 %v2570, 7
    %v2572 = vsub.s32 0, %v2571
    %v2573 = vrot.slane %v2568, %v2572
    %v2574 = vlaneseq
    %v2575 = vshrl.u32 %v2574, 7
    %v2576 = vsub.s32 1, %v2575
    %v2577 = vrot.slane %v2568, %v2576
    %v2578 = vlaneseq
    %v2579 = vshrl.u32 %v2578, 7
    %v2580 = vsub.s32 2, %v2579
    %v2581 = vrot.slane %v2568, %v2580
    %v2582 = vlaneseq
    %v2583 = vshrl.u32 %v2582, 7
    %v2584 = vsub.s32 3, %v2583
    %v2585 = vrot.slane %v2568, %v2584
    %v2586 = vcombine.low %v2573, %v2577
    %v2587 = vcombine.low %v2581, %v2585
    %2588 = vrot.lane.b32.xlu0 %v2586, 16
    %v2589 = vpop.permute.xlu0 %2588
    %2590 = vrot.lane.b32.xlu0 %v2587, 16
    %v2591 = vpop.permute.xlu0 %2590
    %v2592 = vrot.slane %v2589, 4
    %v2593 = vrot.slane %v2591, 4
    %v2594 = vsel %vm1008, %v2592, %v2589
    %v2595 = vsel %vm92, %v2592, %v2593
    %v2596 = vsel %vm1008, %v2595, %v2591
    %v2600 = vmul.f32 %v2565, %v2594
    %v2601 = vmul.f32 %v2566, %v2596
    %v2602 = vmul.f32 %v2567, %v2593
    %v2605 = vcombine.high %v2600, %v2600
    %v2606 = vcombine.high %v2601, %v2601
    %v2609 = vpack.c.bf16 %v2600, %v2600
    %v2610 = vpack.c.bf16 %v2605, %v2605
    %v2611 = vpack.c.bf16 %v2601, %v2601
    %v2612 = vpack.c.bf16 %v2606, %v2606
    %v2613 = vpack.c.bf16 %v2602, %v2602
    %v2614 = vunpack.c.l.bf16 %v2609
    %v2615 = vunpack.c.l.bf16 %v2610
    %v2616 = vunpack.c.l.bf16 %v2611
    %v2617 = vunpack.c.l.bf16 %v2612
    %v2618 = vunpack.c.l.bf16 %v2613
    %v2623 = vcombine.low %v2614, %v2615
    %v2624 = vcombine.low %v2616, %v2617
    %v2627 = vsub.f32 %v2600, %v2623
    %v2628 = vsub.f32 %v2601, %v2624
    %v2629 = vsub.f32 %v2602, %v2618
    %v2632 = vcombine.high %v2627, %v2627
    %v2633 = vcombine.high %v2628, %v2628
    %v2636 = vpack.c.bf16 %v2627, %v2627
    %v2637 = vpack.c.bf16 %v2632, %v2632
    %v2638 = vpack.c.bf16 %v2628, %v2628
    %v2639 = vpack.c.bf16 %v2633, %v2633
    %v2640 = vpack.c.bf16 %v2629, %v2629
    %v2646 = vunpack.c.l.b16 %v2609
    %v2647 = vunpack.c.l.b16 %v2610
    %v2648 = vunpack.c.l.b16 %v2611
    %v2649 = vunpack.c.l.b16 %v2612
    %v2650 = vunpack.c.l.b16 %v2613
    %v2651 = vpack.c.b16 %v2647, %v2646
    %v2652 = vpack.c.b16 %v2649, %v2648
    %v2653 = vpack.c.b16 %v2650, %v2650
    %v2654 = vrot.slane %v2651, 6
    %v2655 = vrot.slane %v2652, 6
    %v2656 = vrot.slane %v2653, 6
    %2657 = vrot.lane.b32.xlu0 %v2654, 112
    %v2658 = vpop.permute.xlu0 %2657
    %2659 = vrot.lane.b32.xlu0 %v2655, 112
    %v2660 = vpop.permute.xlu0 %2659
    %2661 = vrot.lane.b32.xlu0 %v2656, 112
    %v2662 = vpop.permute.xlu0 %2661
    %v2663 = vrot.slane %v2658, 4
    %v2664 = vrot.slane %v2660, 4
    %v2665 = vrot.slane %v2662, 4
    %v2666 = vsel %vm161, %v2663, %v2664
    %v2667 = vsel %vm1082, %v2658, %v2666
    %v2668 = vsel %vm161, %v2664, %v2665
    %v2669 = vsel %vm1082, %v2660, %v2668
    %2672 = vst [vmem:[#allocation3 + $0x30] sm:$0xcc] %v2667
    %2673 = vst [vmem:[#allocation3 + $0x38] sm:$0xcc] %v2669
    %v2679 = vunpack.c.l.b16 %v2636
    %v2680 = vunpack.c.l.b16 %v2637
    %v2681 = vunpack.c.l.b16 %v2638
    %v2682 = vunpack.c.l.b16 %v2639
    %v2683 = vunpack.c.l.b16 %v2640
    %v2684 = vpack.c.b16 %v2680, %v2679
    %v2685 = vpack.c.b16 %v2682, %v2681
    %v2686 = vpack.c.b16 %v2683, %v2683
    %v2687 = vrot.slane %v2684, 6
    %v2688 = vrot.slane %v2685, 6
    %v2689 = vrot.slane %v2686, 6
    %2690 = vrot.lane.b32.xlu0 %v2687, 112
    %v2691 = vpop.permute.xlu0 %2690
    %2692 = vrot.lane.b32.xlu0 %v2688, 112
    %v2693 = vpop.permute.xlu0 %2692
    %2694 = vrot.lane.b32.xlu0 %v2689, 112
    %v2695 = vpop.permute.xlu0 %2694
    %v2696 = vrot.slane %v2691, 4
    %v2697 = vrot.slane %v2693, 4
    %v2698 = vrot.slane %v2695, 4
    %v2699 = vsel %vm161, %v2696, %v2697
    %v2700 = vsel %vm1082, %v2691, %v2699
    %v2701 = vsel %vm161, %v2697, %v2698
    %v2702 = vsel %vm1082, %v2693, %v2701
    %2705 = vst [vmem:[#allocation4 + $0x30] sm:$0xcc] %v2700
    %2706 = vst [vmem:[#allocation4 + $0x38] sm:$0xcc] %v2702
    %v2707 = vld [vmem:[#allocation2 + $0x4] sm:$0xff]
    %v2708 = vld [vmem:[#allocation2 + $0xc] sm:$0xff]
    %v2709 = vld [vmem:[#allocation2 + $0x14] sm:$0xf]
    %v2710 = vld [vmem:[%s1126] ss:$8 sm:$0xf]
    %v2712 = vlaneseq
    %v2713 = vshrl.u32 %v2712, 7
    %v2714 = vsub.s32 0, %v2713
    %v2715 = vrot.slane %v2710, %v2714
    %v2716 = vlaneseq
    %v2717 = vshrl.u32 %v2716, 7
    %v2718 = vsub.s32 1, %v2717
    %v2719 = vrot.slane %v2710, %v2718
    %v2720 = vlaneseq
    %v2721 = vshrl.u32 %v2720, 7
    %v2722 = vsub.s32 2, %v2721
    %v2723 = vrot.slane %v2710, %v2722
    %v2724 = vlaneseq
    %v2725 = vshrl.u32 %v2724, 7
    %v2726 = vsub.s32 3, %v2725
    %v2727 = vrot.slane %v2710, %v2726
    %v2728 = vcombine.low %v2715, %v2719
    %v2729 = vcombine.low %v2723, %v2727
    %2730 = vrot.lane.b32.xlu0 %v2728, 17
    %v2731 = vpop.permute.xlu0 %2730
    %2732 = vrot.lane.b32.xlu0 %v2729, 17
    %v2733 = vpop.permute.xlu0 %2732
    %v2734 = vrot.slane %v2731, 4
    %v2735 = vrot.slane %v2733, 4
    %v2736 = vsel %vm1153, %v2734, %v2731
    %v2737 = vsel %vm92, %v2734, %v2735
    %v2738 = vsel %vm1153, %v2737, %v2733
    %v2742 = vmul.f32 %v2707, %v2736
    %v2743 = vmul.f32 %v2708, %v2738
    %v2744 = vmul.f32 %v2709, %v2735
    %v2747 = vcombine.high %v2742, %v2742
    %v2748 = vcombine.high %v2743, %v2743
    %v2751 = vpack.c.bf16 %v2742, %v2742
    %v2752 = vpack.c.bf16 %v2747, %v2747
    %v2753 = vpack.c.bf16 %v2743, %v2743
    %v2754 = vpack.c.bf16 %v2748, %v2748
    %v2755 = vpack.c.bf16 %v2744, %v2744
    %v2756 = vunpack.c.l.bf16 %v2751
    %v2757 = vunpack.c.l.bf16 %v2752
    %v2758 = vunpack.c.l.bf16 %v2753
    %v2759 = vunpack.c.l.bf16 %v2754
    %v2760 = vunpack.c.l.bf16 %v2755
    %v2765 = vcombine.low %v2756, %v2757
    %v2766 = vcombine.low %v2758, %v2759
    %v2769 = vsub.f32 %v2742, %v2765
    %v2770 = vsub.f32 %v2743, %v2766
    %v2771 = vsub.f32 %v2744, %v2760
    %v2774 = vcombine.high %v2769, %v2769
    %v2775 = vcombine.high %v2770, %v2770
    %v2778 = vpack.c.bf16 %v2769, %v2769
    %v2779 = vpack.c.bf16 %v2774, %v2774
    %v2780 = vpack.c.bf16 %v2770, %v2770
    %v2781 = vpack.c.bf16 %v2775, %v2775
    %v2782 = vpack.c.bf16 %v2771, %v2771
    %v2788 = vunpack.c.l.b16 %v2751
    %v2789 = vunpack.c.l.b16 %v2752
    %v2790 = vunpack.c.l.b16 %v2753
    %v2791 = vunpack.c.l.b16 %v2754
    %v2792 = vunpack.c.l.b16 %v2755
    %v2793 = vpack.c.b16 %v2789, %v2788
    %v2794 = vpack.c.b16 %v2791, %v2790
    %v2795 = vpack.c.b16 %v2792, %v2792
    %2796 = vrot.lane.b32.xlu0 %v2793, 111
    %v2797 = vpop.permute.xlu0 %2796
    %2798 = vrot.lane.b32.xlu0 %v2794, 111
    %v2799 = vpop.permute.xlu0 %2798
    %2800 = vrot.lane.b32.xlu0 %v2795, 111
    %v2801 = vpop.permute.xlu0 %2800
    %v2802 = vrot.slane %v2797, 4
    %v2803 = vrot.slane %v2799, 4
    %v2804 = vrot.slane %v2801, 4
    %v2805 = vsel %vm161, %v2802, %v2803
    %v2806 = vsel %vm1224, %v2797, %v2805
    %v2807 = vsel %vm161, %v2803, %v2804
    %v2808 = vsel %vm1224, %v2799, %v2807
    %2811 = vst [vmem:[#allocation3 + $0x40] sm:$0x33] %v2806
    %2812 = vst [vmem:[#allocation3 + $0x48] sm:$0x33] %v2808
    %v2818 = vunpack.c.l.b16 %v2778
    %v2819 = vunpack.c.l.b16 %v2779
    %v2820 = vunpack.c.l.b16 %v2780
    %v2821 = vunpack.c.l.b16 %v2781
    %v2822 = vunpack.c.l.b16 %v2782
    %v2823 = vpack.c.b16 %v2819, %v2818
    %v2824 = vpack.c.b16 %v2821, %v2820
    %v2825 = vpack.c.b16 %v2822, %v2822
    %2826 = vrot.lane.b32.xlu0 %v2823, 111
    %v2827 = vpop.permute.xlu0 %2826
    %2828 = vrot.lane.b32.xlu0 %v2824, 111
    %v2829 = vpop.permute.xlu0 %2828
    %2830 = vrot.lane.b32.xlu0 %v2825, 111
    %v2831 = vpop.permute.xlu0 %2830
    %v2832 = vrot.slane %v2827, 4
    %v2833 = vrot.slane %v2829, 4
    %v2834 = vrot.slane %v2831, 4
    %v2835 = vsel %vm161, %v2832, %v2833
    %v2836 = vsel %vm1224, %v2827, %v2835
    %v2837 = vsel %vm161, %v2833, %v2834
    %v2838 = vsel %vm1224, %v2829, %v2837
    %2841 = vst [vmem:[#allocation4 + $0x40] sm:$0x33] %v2836
    %2842 = vst [vmem:[#allocation4 + $0x48] sm:$0x33] %v2838
    %v2843 = vld [vmem:[%s6] sm:$0xf]
    %v2844 = vld [vmem:[#allocation3] sm:$0xff]
    %v2845 = vld [vmem:[#allocation3 + $0x8] sm:$0xff]
    %v2846 = vld [vmem:[#allocation3 + $0x10] sm:$0xff]
    %v2847 = vld [vmem:[#allocation3 + $0x18] sm:$0xff]
    %v2848 = vld [vmem:[#allocation3 + $0x20] sm:$0xff]
    %v2849 = vld [vmem:[#allocation3 + $0x28] sm:$0xff]
    %v2850 = vld [vmem:[#allocation3 + $0x30] sm:$0xff]
    %v2851 = vld [vmem:[#allocation3 + $0x38] sm:$0xff]
    %v2852 = vld [vmem:[#allocation3 + $0x40] sm:$0x33]
    %v2853 = vld [vmem:[#allocation3 + $0x48] sm:$0x33]
    %v2864 = vunpack.c.l.b16 %v2844
    %v2865 = vunpack.c.h.b16 %v2844
    %v2866 = vunpack.c.l.b16 %v2845
    %v2867 = vunpack.c.h.b16 %v2845
    %v2868 = vunpack.c.l.b16 %v2846
    %v2869 = vunpack.c.h.b16 %v2846
    %v2870 = vunpack.c.l.b16 %v2847
    %v2871 = vunpack.c.h.b16 %v2847
    %v2872 = vunpack.c.l.b16 %v2848
    %v2873 = vunpack.c.h.b16 %v2848
    %v2874 = vunpack.c.l.b16 %v2849
    %v2875 = vunpack.c.h.b16 %v2849
    %v2876 = vunpack.c.l.b16 %v2850
    %v2877 = vunpack.c.h.b16 %v2850
    %v2878 = vunpack.c.l.b16 %v2851
    %v2879 = vunpack.c.h.b16 %v2851
    %v2880 = vunpack.c.l.b16 %v2852
    %v2881 = vunpack.c.h.b16 %v2852
    %v2882 = vunpack.c.l.b16 %v2853
    %v2883 = vunpack.c.h.b16 %v2853
    %v2884 = vpack.c.b16 %v2868, %v2864
    %v2885 = vpack.c.b16 %v2869, %v2865
    %v2886 = vpack.c.b16 %v2870, %v2866
    %v2887 = vpack.c.b16 %v2871, %v2867
    %v2888 = vpack.c.b16 %v2876, %v2872
    %v2889 = vpack.c.b16 %v2877, %v2873
    %v2890 = vpack.c.b16 %v2878, %v2874
    %v2891 = vpack.c.b16 %v2879, %v2875
    %v2892 = vpack.c.b16 %v2880, %v2880
    %v2893 = vpack.c.b16 %v2881, %v2881
    %v2894 = vpack.c.b16 %v2882, %v2882
    %v2895 = vpack.c.b16 %v2883, %v2883
    %v2905 = vsel %vm1323, %v2843, 0
    %v2908 = vsel %vm1327, %v2892, 0
    %v2911 = vsel %vm1327, %v2893, 0
    %v2914 = vsel %vm1327, %v2894, 0
    %v2917 = vsel %vm1327, %v2895, 0
    %2919 = vmatprep.subr.bf16.mxu0 %v2885
    %2920 = vmatpush1.bf16.msra.mxu0 %v2884
    %2921 = vmatprep.subr.bf16.mxu0 %v2889
    %2922 = vmatpush1.bf16.msra.mxu0 %v2888
    %2923 = vmatprep.subr.bf16.mxu0 %v2911
    %2924 = vmatpush1.bf16.msra.mxu0 %v2908
    %2925 = vmatprep.subr.bf16.mxu0 0
    %2926 = vmatpush1.bf16.msra.mxu0 0
    %2927 = vmatprep.subr.bf16.mxu0 0
    %2928 = vmatpush1.bf16.msra.mxu0 0
    %2929 = vmatprep.subr.bf16.mxu0 0
    %2930 = vmatpush1.bf16.msra.mxu0 0
    %2931 = vmatprep.subr.bf16.mxu0 0
    %2932 = vmatpush1.bf16.msra.mxu0 0
    %2933 = vmatprep.subr.bf16.mxu0 0
    %2934 = vmatpush1.bf16.msra.mxu0 0
    %2935 = vmatprep.subr.bf16.mxu0 0
    %2936 = vmatpush1.bf16.msra.mxu0 0
    %2937 = vmatprep.subr.bf16.mxu0 0
    %2938 = vmatpush1.bf16.msra.mxu0 0
    %2939 = vmatprep.subr.bf16.mxu0 0
    %2940 = vmatpush1.bf16.msra.mxu0 0
    %2941 = vmatprep.subr.bf16.mxu0 0
    %2942 = vmatpush1.bf16.msra.mxu0 0
    %2943 = vmatprep.subr.bf16.mxu0 0
    %2944 = vmatpush1.bf16.msra.mxu0 0
    %2945 = vmatprep.subr.bf16.mxu0 0
    %2946 = vmatpush1.bf16.msra.mxu0 0
    %2947 = vmatprep.subr.bf16.mxu0 0
    %2948 = vmatpush1.bf16.msra.mxu0 0
    %2949 = vmatprep.subr.bf16.mxu0 0
    %2950 = vmatpush1.bf16.msra.mxu0 0
    %2951 = vmatprep.mubr.bf16.mxu0 0
    %2952 = vmatmul.mubr.bf16.gmra.mrb[0].mxu0 %v2905
    %v2953 = vpop.f32.mrb[0].mxu0
    %v2954 = vadd.f32 0.0, %v2953
    %v2955 = vpop.f32.mrb[0].mxu0
    %v2956 = vadd.f32 0.0, %v2955
    %v2957 = vpop.f32.mrb[0].mxu0
    %v2958 = vpop.f32.mrb[0].mxu0
    %2959 = vdwg.mxu0
    %2960 = vmatprep.subr.bf16.mxu0 %v2887
    %2961 = vmatpush1.bf16.msra.mxu0 %v2886
    %2962 = vmatprep.subr.bf16.mxu0 %v2891
    %2963 = vmatpush1.bf16.msra.mxu0 %v2890
    %2964 = vmatprep.subr.bf16.mxu0 %v2917
    %2965 = vmatpush1.bf16.msra.mxu0 %v2914
    %2966 = vmatprep.subr.bf16.mxu0 0
    %2967 = vmatpush1.bf16.msra.mxu0 0
    %2968 = vmatprep.subr.bf16.mxu0 0
    %2969 = vmatpush1.bf16.msra.mxu0 0
    %2970 = vmatprep.subr.bf16.mxu0 0
    %2971 = vmatpush1.bf16.msra.mxu0 0
    %2972 = vmatprep.subr.bf16.mxu0 0
    %2973 = vmatpush1.bf16.msra.mxu0 0
    %2974 = vmatprep.subr.bf16.mxu0 0
    %2975 = vmatpush1.bf16.msra.mxu0 0
    %2976 = vmatprep.subr.bf16.mxu0 0
    %2977 = vmatpush1.bf16.msra.mxu0 0
    %2978 = vmatprep.subr.bf16.mxu0 0
    %2979 = vmatpush1.bf16.msra.mxu0 0
    %2980 = vmatprep.subr.bf16.mxu0 0
    %2981 = vmatpush1.bf16.msra.mxu0 0
    %2982 = vmatprep.subr.bf16.mxu0 0
    %2983 = vmatpush1.bf16.msra.mxu0 0
    %2984 = vmatprep.subr.bf16.mxu0 0
    %2985 = vmatpush1.bf16.msra.mxu0 0
    %2986 = vmatprep.subr.bf16.mxu0 0
    %2987 = vmatpush1.bf16.msra.mxu0 0
    %2988 = vmatprep.subr.bf16.mxu0 0
    %2989 = vmatpush1.bf16.msra.mxu0 0
    %2990 = vmatprep.subr.bf16.mxu0 0
    %2991 = vmatpush1.bf16.msra.mxu0 0
    %2992 = vmatprep.mubr.bf16.mxu0 0
    %2993 = vmatmul.mubr.bf16.gmra.mrb[0].mxu0 %v2905
    %v2994 = vpop.f32.mrb[0].mxu0
    %v2995 = vadd.f32 0.0, %v2994
    %v2996 = vpop.f32.mrb[0].mxu0
    %v2997 = vadd.f32 0.0, %v2996
    %v2998 = vpop.f32.mrb[0].mxu0
    %v2999 = vpop.f32.mrb[0].mxu0
    %3000 = vdwg.mxu0
    %v3001 = vld [vmem:[%s7] sm:$0x3]
    %v3002 = vld [vmem:[#allocation4] sm:$0xff]
    %v3003 = vld [vmem:[#allocation4 + $0x8] sm:$0xff]
    %v3004 = vld [vmem:[#allocation4 + $0x10] sm:$0xff]
    %v3005 = vld [vmem:[#allocation4 + $0x18] sm:$0xff]
    %v3006 = vld [vmem:[#allocation4 + $0x20] sm:$0xff]
    %v3007 = vld [vmem:[#allocation4 + $0x28] sm:$0xff]
    %v3008 = vld [vmem:[#allocation4 + $0x30] sm:$0xff]
    %v3009 = vld [vmem:[#allocation4 + $0x38] sm:$0xff]
    %v3010 = vld [vmem:[#allocation4 + $0x40] sm:$0x33]
    %v3011 = vld [vmem:[#allocation4 + $0x48] sm:$0x33]
    %v3022 = vunpack.c.l.b16 %v3002
    %v3023 = vunpack.c.h.b16 %v3002
    %v3024 = vunpack.c.l.b16 %v3003
    %v3025 = vunpack.c.h.b16 %v3003
    %v3026 = vunpack.c.l.b16 %v3004
    %v3027 = vunpack.c.h.b16 %v3004
    %v3028 = vunpack.c.l.b16 %v3005
    %v3029 = vunpack.c.h.b16 %v3005
    %v3030 = vunpack.c.l.b16 %v3006
    %v3031 = vunpack.c.h.b16 %v3006
    %v3032 = vunpack.c.l.b16 %v3007
    %v3033 = vunpack.c.h.b16 %v3007
    %v3034 = vunpack.c.l.b16 %v3008
    %v3035 = vunpack.c.h.b16 %v3008
    %v3036 = vunpack.c.l.b16 %v3009
    %v3037 = vunpack.c.h.b16 %v3009
    %v3038 = vunpack.c.l.b16 %v3010
    %v3039 = vunpack.c.h.b16 %v3010
    %v3040 = vunpack.c.l.b16 %v3011
    %v3041 = vunpack.c.h.b16 %v3011
    %v3042 = vpack.c.b16 %v3026, %v3022
    %v3043 = vpack.c.b16 %v3027, %v3023
    %v3044 = vpack.c.b16 %v3028, %v3024
    %v3045 = vpack.c.b16 %v3029, %v3025
    %v3046 = vpack.c.b16 %v3034, %v3030
    %v3047 = vpack.c.b16 %v3035, %v3031
    %v3048 = vpack.c.b16 %v3036, %v3032
    %v3049 = vpack.c.b16 %v3037, %v3033
    %v3050 = vpack.c.b16 %v3038, %v3038
    %v3051 = vpack.c.b16 %v3039, %v3039
    %v3052 = vpack.c.b16 %v3040, %v3040
    %v3053 = vpack.c.b16 %v3041, %v3041
    %v3063 = vsel %vm1323, %v3001, 0
    %v3066 = vsel %vm1327, %v3050, 0
    %v3069 = vsel %vm1327, %v3051, 0
    %v3072 = vsel %vm1327, %v3052, 0
    %v3075 = vsel %vm1327, %v3053, 0
    %3077 = vmatprep.subr.bf16.mxu0 %v3043
    %3078 = vmatpush1.bf16.msra.mxu0 %v3042
    %3079 = vmatprep.subr.bf16.mxu0 %v3047
    %3080 = vmatpush1.bf16.msra.mxu0 %v3046
    %3081 = vmatprep.subr.bf16.mxu0 %v3069
    %3082 = vmatpush1.bf16.msra.mxu0 %v3066
    %3083 = vmatprep.subr.bf16.mxu0 0
    %3084 = vmatpush1.bf16.msra.mxu0 0
    %3085 = vmatprep.subr.bf16.mxu0 0
    %3086 = vmatpush1.bf16.msra.mxu0 0
    %3087 = vmatprep.subr.bf16.mxu0 0
    %3088 = vmatpush1.bf16.msra.mxu0 0
    %3089 = vmatprep.subr.bf16.mxu0 0
    %3090 = vmatpush1.bf16.msra.mxu0 0
    %3091 = vmatprep.subr.bf16.mxu0 0
    %3092 = vmatpush1.bf16.msra.mxu0 0
    %3093 = vmatprep.subr.bf16.mxu0 0
    %3094 = vmatpush1.bf16.msra.mxu0 0
    %3095 = vmatprep.subr.bf16.mxu0 0
    %3096 = vmatpush1.bf16.msra.mxu0 0
    %3097 = vmatprep.subr.bf16.mxu0 0
    %3098 = vmatpush1.bf16.msra.mxu0 0
    %3099 = vmatprep.subr.bf16.mxu0 0
    %3100 = vmatpush1.bf16.msra.mxu0 0
    %3101 = vmatprep.subr.bf16.mxu0 0
    %3102 = vmatpush1.bf16.msra.mxu0 0
    %3103 = vmatprep.subr.bf16.mxu0 0
    %3104 = vmatpush1.bf16.msra.mxu0 0
    %3105 = vmatprep.subr.bf16.mxu0 0
    %3106 = vmatpush1.bf16.msra.mxu0 0
    %3107 = vmatprep.subr.bf16.mxu0 0
    %3108 = vmatpush1.bf16.msra.mxu0 0
    %3109 = vmatprep.mubr.bf16.mxu0 0
    %3110 = vmatmul.mubr.bf16.gmra.mrb[0].mxu0 %v3063
    %v3111 = vpop.f32.mrb[0].mxu0
    %v3112 = vadd.f32 0.0, %v3111
    %v3113 = vpop.f32.mrb[0].mxu0
    %v3114 = vadd.f32 0.0, %v3113
    %v3115 = vpop.f32.mrb[0].mxu0
    %v3116 = vpop.f32.mrb[0].mxu0
    %3117 = vdwg.mxu0
    %3118 = vmatprep.subr.bf16.mxu0 %v3045
    %3119 = vmatpush1.bf16.msra.mxu0 %v3044
    %3120 = vmatprep.subr.bf16.mxu0 %v3049
    %3121 = vmatpush1.bf16.msra.mxu0 %v3048
    %3122 = vmatprep.subr.bf16.mxu0 %v3075
    %3123 = vmatpush1.bf16.msra.mxu0 %v3072
    %3124 = vmatprep.subr.bf16.mxu0 0
    %3125 = vmatpush1.bf16.msra.mxu0 0
    %3126 = vmatprep.subr.bf16.mxu0 0
    %3127 = vmatpush1.bf16.msra.mxu0 0
    %3128 = vmatprep.subr.bf16.mxu0 0
    %3129 = vmatpush1.bf16.msra.mxu0 0
    %3130 = vmatprep.subr.bf16.mxu0 0
    %3131 = vmatpush1.bf16.msra.mxu0 0
    %3132 = vmatprep.subr.bf16.mxu0 0
    %3133 = vmatpush1.bf16.msra.mxu0 0
    %3134 = vmatprep.subr.bf16.mxu0 0
    %3135 = vmatpush1.bf16.msra.mxu0 0
    %3136 = vmatprep.subr.bf16.mxu0 0
    %3137 = vmatpush1.bf16.msra.mxu0 0
    %3138 = vmatprep.subr.bf16.mxu0 0
    %3139 = vmatpush1.bf16.msra.mxu0 0
    %3140 = vmatprep.subr.bf16.mxu0 0
    %3141 = vmatpush1.bf16.msra.mxu0 0
    %3142 = vmatprep.subr.bf16.mxu0 0
    %3143 = vmatpush1.bf16.msra.mxu0 0
    %3144 = vmatprep.subr.bf16.mxu0 0
    %3145 = vmatpush1.bf16.msra.mxu0 0
    %3146 = vmatprep.subr.bf16.mxu0 0
    %3147 = vmatpush1.bf16.msra.mxu0 0
    %3148 = vmatprep.subr.bf16.mxu0 0
    %3149 = vmatpush1.bf16.msra.mxu0 0
    %3150 = vmatprep.mubr.bf16.mxu0 0
    %3151 = vmatmul.mubr.bf16.gmra.mrb[0].mxu0 %v3063
    %v3152 = vpop.f32.mrb[0].mxu0
    %v3153 = vadd.f32 0.0, %v3152
    %v3154 = vpop.f32.mrb[0].mxu0
    %v3155 = vadd.f32 0.0, %v3154
    %v3156 = vpop.f32.mrb[0].mxu0
    %v3157 = vpop.f32.mrb[0].mxu0
    %3158 = vdwg.mxu0
    %v3163 = vrot.slane %v2954, 4
    %v3164 = vrot.slane %v2956, 4
    %v3165 = vrot.slane %v2995, 4
    %v3166 = vrot.slane %v2997, 4
    %v3171 = vadd.f32 %v2954, %v3163
    %v3172 = vadd.f32 %v2956, %v3164
    %v3173 = vadd.f32 %v2995, %v3165
    %v3174 = vadd.f32 %v2997, %v3166
    %v3175 = vadd.f32 %v3171, %v3112
    %v3176 = vadd.f32 %v3172, %v3114
    %v3177 = vadd.f32 %v3173, %v3153
    %v3178 = vadd.f32 %v3174, %v3155
    %v3179 = vsel %vm92, %v3175, 0.0
    %v3180 = vsel %vm92, %v3176, 0.0
    %v3181 = vadd.f32 %v3179, %v3180
    %v3182 = vsel %vm92, %v3177, 0.0
    %v3183 = vadd.f32 %v3181, %v3182
    %v3184 = vsel %vm92, %v3178, 0.0
    %v3185 = vadd.f32 %v3183, %v3184
    %3186 = vadd.xlane.f32.xlu0 %v3185
    %v3187 = vpop.xlane.xlu0 %3186
    %v3188 = vmul.f32 %v3187, 0.001953125
    %v3189 = vsub.f32 %v3175, %v3188
    %v3190 = vsub.f32 %v3176, %v3188
    %v3191 = vsub.f32 %v3177, %v3188
    %v3192 = vsub.f32 %v3178, %v3188
    %v3193 = vmul.f32 %v3189, %v3189
    %v3194 = vmul.f32 %v3190, %v3190
    %v3195 = vmul.f32 %v3191, %v3191
    %v3196 = vmul.f32 %v3192, %v3192
    %v3197 = vsel %vm92, %v3193, 0.0
    %v3198 = vsel %vm92, %v3194, 0.0
    %v3199 = vadd.f32 %v3197, %v3198
    %v3200 = vsel %vm92, %v3195, 0.0
    %v3201 = vadd.f32 %v3199, %v3200
    %v3202 = vsel %vm92, %v3196, 0.0
    %v3203 = vadd.f32 %v3201, %v3202
    %3204 = vadd.xlane.f32.xlu0 %v3203
    %v3205 = vpop.xlane.xlu0 %3204
    %v3206 = vmul.f32 %v3205, 0.001953125
    %v3207 = vadd.f32 %v3206, 1e-05
    %v3208 = vrsqrt.pop %v3207
    %v3209 = vld [vmem:[%s8] sm:$0xf]
    %v3210 = vmul.f32 %v3208, %v3209
    %3212 = vset.pattern.permute.xlu0 0
    %3213 = vperm.xlu0 %3212, %v3210
    %v3214 = vpop.permute.xlu0 %3213
    %v3216 = vmul.f32 %v3189, %v3214
    %v3217 = vmul.f32 %v3190, %v3214
    %v3218 = vmul.f32 %v3191, %v3214
    %v3219 = vmul.f32 %v3192, %v3214
    %v3220 = vld [vmem:[%s9] sm:$0xf]
    %3222 = vset.pattern.permute.xlu0 0
    %3223 = vperm.xlu0 %3222, %v3220
    %v3224 = vpop.permute.xlu0 %3223
    %v3226 = vadd.f32 %v3216, %v3224
    %v3227 = vadd.f32 %v3217, %v3224
    %v3228 = vadd.f32 %v3218, %v3224
    %v3229 = vadd.f32 %v3219, %v3224
    %v3230 = vld [vmem:[#allocation5 + $0x4] sm:$0xff]
    %v3231 = vld [vmem:[#allocation5 + $0xc] sm:$0xff]
    %v3236 = vcombine.low %v3226, %v3227
    %v3237 = vcombine.low %v3228, %v3229
    %v3240 = vadd.f32 %v3230, %v3236
    %v3241 = vadd.f32 %v3231, %v3237
    %3242 = vst [vmem:[#allocation10] sm:$0xff] %v3240
    %3243 = vst [vmem:[#allocation10 + $0x8] sm:$0xff] %v3241
    // Predicated region
    $region50: #{tpu_custom_call.1} parent=1 // pred_check
      _
    $region51: #{tpu_custom_call.1} parent=1 // pred_check_branch
      %3245 = sbr.rel (0) target = $region53
    $region52: #{tpu_custom_call.1} parent=1 // pred_region
      %s3247 = ssub.s32 256, 256
      %3248 = vsyncadd [#allocation7], %s3247
      %s3250 = sshll.u32 [#allocation10], 4
      %s3251 = int_to_ptr.vmem [resolvable:$true] %s3250
      %3253 = dma.vmem_to_hbm [thread:$0]  %s3251, 256, %s10, [#allocation7]
    $region53: #{tpu_custom_call.1} parent=1 // pred_fallthru
      _
    // Predicated region
    $region54: #{tpu_custom_call.1} parent=1 // pred_check
      _
    $region55: #{tpu_custom_call.1} parent=1 // pred_check_branch
      %3255 = sbr.rel (0) target = $region57
    $region56: #{tpu_custom_call.1} parent=1 // pred_region
      %3256 = dma.done [#allocation7], 256
    $region57: #{tpu_custom_call.1} parent=1 // pred_fallthru
      _
    %3257 = vsyncpa [#allocation6], 1
    %3258 = vsyncpa [#allocation9], 1
    %3259 = vsyncpa [#allocation7], 1

</llo_original>
